<compile_context>
chip_gen: v7x
topology: tpu7x:2x2x1
jax: 0.10.0
libtpu: 0.0.40
codegen_flags: <defaults>
</compile_context>

<pallas_src>
import functools

import jax
import jax.numpy as jnp
from jax.experimental import pallas as pl
from jax.experimental.pallas import tpu as pltpu


def _round_up(x, m):
    return (x + m - 1) // m * m


_VMEM_LIMIT = 32 * 1024 * 1024  # safe on v5e/v6e/v7x; live blocks are << this


# ---------------------------------------------------------------------------
# Kernel 1: conv (+bias+ReLU) as kh*kw shifted MXU dots over a flat row layout.
#
# The wrapper folds the stride into the channel dim (space-to-depth), so the
# conv becomes a stride-1 conv with kernel (kh, kw) over an (OHg, OWg, D) grid,
# flattened per sample into L rows (L >= OHg*OWg + max tap shift, mult. of 8).
# For output row m, tap (p, q) reads input row m + p*OWg + q, so inside the
# kernel each tap is a static sublane shift of the x tile followed by a
# (TM, D) @ (D, Cout) dot accumulated in f32.  Rows shifted past the tile end
# only feed per-sample padding rows (dropped by the wrapper), so zero-fill is
# safe.  Tiles always cover whole samples (TM = k * L), hence x is read once.
# ---------------------------------------------------------------------------
def _conv_tap_kernel(x_ref, w_ref, b_ref, o_ref, *, offsets):
    x = x_ref[...]                                     # (TM, D) bf16
    acc = None
    for t, off in enumerate(offsets):
        if off == 0:
            xs = x
        else:
            xs = jnp.concatenate(
                [x[off:, :], jnp.zeros((off, x.shape[1]), x.dtype)], axis=0)
        d = jnp.dot(xs, w_ref[t], preferred_element_type=jnp.float32)
        acc = d if acc is None else acc + d
    o_ref[...] = jnp.maximum(acc + b_ref[...], 0.0).astype(o_ref.dtype)


def conv2d_relu(x_nhwc, w_taps, b, stride, *, out_dtype=jnp.bfloat16,
                target_rows=2048):
    """Valid (no-pad) strided conv + ReLU, identical semantics to nn.Conv2d.

    `w_taps`/`b` come from _prep_conv_weights (space-to-depth tap layout, bf16).
    """
    n, h, w, cin = x_nhwc.shape
    num_taps, d, cout = w_taps.shape
    s = stride
    kh = int(round(num_taps ** 0.5))
    kw = kh                                   # square kernels in this module
    assert kh * kw == num_taps and d == s * s * cin
    oh = (h - kh * s) // s + 1
    ow = (w - kw * s) // s + 1
    ohg, owg = oh + kh - 1, ow + kw - 1
    hc, wc = ohg * s, owg * s                 # input extent reachable by taps

    # Space-to-depth: fold the stride into the lane dim, flatten (OHg, OWg)
    # per sample into `lrows` rows (>= used rows + max tap shift, mult of 8).
    # TODO(synk): emit the previous conv's output directly in this layout to
    # remove the XLA repack copy between layers.
    x = x_nhwc[:, :hc, :wc, :].astype(jnp.bfloat16)
    xg = x.reshape(n, ohg, s, owg, s, cin)
    xg = jnp.transpose(xg, (0, 1, 3, 2, 4, 5)).reshape(n, ohg * owg, d)
    used = ohg * owg
    max_off = (kh - 1) * owg + (kw - 1)
    lrows = _round_up(used + max_off, 8)
    xf = jnp.pad(xg, ((0, 0), (0, lrows - used), (0, 0))).reshape(n * lrows, d)

    # Whole samples per grid step so tap shifts never cross a tile boundary;
    # ~target_rows rows/step amortizes the per-grid-step overhead.
    k = max(1, min(n, target_rows // lrows))
    while n % k:
        k -= 1
    tm = k * lrows
    grid = (n // k,)
    offsets = tuple(p * owg + q for p in range(kh) for q in range(kw))

    flops = 2 * n * lrows * d * cout * num_taps
    bytes_accessed = (n * lrows * d + num_taps * d * cout) * 2 + \
        n * lrows * cout * jnp.dtype(out_dtype).itemsize

    out_flat = pl.pallas_call(
        functools.partial(_conv_tap_kernel, offsets=offsets),
        out_shape=jax.ShapeDtypeStruct((n * lrows, cout), out_dtype),
        grid_spec=pltpu.PrefetchScalarGridSpec(
            num_scalar_prefetch=0,
            grid=grid,
            in_specs=[
                pl.BlockSpec((tm, d), lambda i: (i, 0)),
                pl.BlockSpec((num_taps, d, cout), lambda i: (0, 0, 0)),  # resident
                pl.BlockSpec((1, cout), lambda i: (0, 0)),               # resident
            ],
            out_specs=pl.BlockSpec((tm, cout), lambda i: (i, 0)),
        ),
        compiler_params=pltpu.CompilerParams(
            dimension_semantics=("parallel",),
            vmem_limit_bytes=_VMEM_LIMIT),
        cost_estimate=pl.CostEstimate(flops=flops, transcendentals=0,
                                      bytes_accessed=bytes_accessed),
    )(xf, w_taps, b)

    out = out_flat.reshape(n, lrows, cout)[:, :oh * owg, :]
    return out.reshape(n, oh, owg, cout)[:, :, :ow, :]


# ---------------------------------------------------------------------------
# Kernel 2: fused dueling head
#   h = ReLU(x @ W1 + b1)   (W1 = [adv1 | val1], 512 wide, K-tiled accumulator)
#   q = h @ W2 + b2         (dueling mean/val combine folded into W2/b2 offline)
# grid = (B_tiles, F_tiles); TK always divides F (no K padding).
# ---------------------------------------------------------------------------
def _dueling_head_kernel(x_ref, w1_ref, b1_ref, w2_ref, b2_ref, q_ref, h_acc):
    k = pl.program_id(1)

    @pl.when(k == 0)
    def _():
        h_acc[...] = jnp.zeros_like(h_acc)

    h_acc[...] += jnp.dot(x_ref[...], w1_ref[...],
                          preferred_element_type=jnp.float32)

    @pl.when(k == pl.num_programs(1) - 1)
    def _():
        h = jnp.maximum(h_acc[...] + b1_ref[...], 0.0)
        q_ref[...] = (jnp.dot(h.astype(w2_ref.dtype), w2_ref[...],
                              preferred_element_type=jnp.float32)
                      + b2_ref[...]).astype(q_ref.dtype)


def _pick_tk(k_dim, max_tk):
    """Largest reduction tile dividing k_dim (multiple of 128), <= max_tk."""
    if k_dim <= max_tk:
        return k_dim
    best = 128
    for cand in range(128, max_tk + 1, 128):
        if k_dim % cand == 0:
            best = cand
    return best


def dueling_head(conv_out, prep, n_actions, *, tm=512, max_tk=4096):
    w1, b1, w2, b2 = prep["fc_w1"], prep["fc_b1"], prep["fc_w2"], prep["fc_b2"]
    bsz, f = conv_out.shape
    h1 = w1.shape[1]
    np_lanes = w2.shape[1]

    x = conv_out.astype(jnp.bfloat16)
    # At small batch the head is a single M tile on purpose (v7x: splitting a
    # mem-bound head across cores would duplicate the dominant w1 HBM stream).
    tm_eff = min(tm, _round_up(bsz, 8))
    bp = _round_up(bsz, tm_eff)
    if bp != bsz:
        x = jnp.pad(x, ((0, bp - bsz), (0, 0)))
    tk = _pick_tk(f, max_tk)          # e.g. 896 for F=6272 (84x84 input)

    grid = (bp // tm_eff, f // tk)
    flops = 2 * bp * f * h1 + 2 * bp * h1 * np_lanes
    bytes_accessed = (bp * f + f * h1 + h1 * np_lanes) * 2 + bp * np_lanes * 4

    q_pad = pl.pallas_call(
        _dueling_head_kernel,
        out_shape=jax.ShapeDtypeStruct((bp, np_lanes), jnp.float32),
        grid_spec=pltpu.PrefetchScalarGridSpec(
            num_scalar_prefetch=0,
            grid=grid,
            in_specs=[
                pl.BlockSpec((tm_eff, tk), lambda i, k: (i, k)),
                pl.BlockSpec((tk, h1), lambda i, k: (k, 0)),
                pl.BlockSpec((1, h1), lambda i, k: (0, 0)),
                pl.BlockSpec((h1, np_lanes), lambda i, k: (0, 0)),
                pl.BlockSpec((1, np_lanes), lambda i, k: (0, 0)),
            ],
            out_specs=pl.BlockSpec((tm_eff, np_lanes), lambda i, k: (i, 0)),
            scratch_shapes=[pltpu.VMEM((tm_eff, h1), jnp.float32)],
        ),
        compiler_params=pltpu.CompilerParams(
            dimension_semantics=("parallel", "arbitrary"),
            vmem_limit_bytes=_VMEM_LIMIT),
        cost_estimate=pl.CostEstimate(flops=flops, transcendentals=0,
                                      bytes_accessed=bytes_accessed),
    )(x, w1, b1, w2, b2)
    return q_pad[:bsz, :n_actions]


# ---------------------------------------------------------------------------
# Offline parameter preparation (call ONCE at load time, outside jit).
# ---------------------------------------------------------------------------
def _conv_out_hw(h, w):
    for k, s in ((8, 4), (4, 2), (3, 1)):
        h = (h - k) // s + 1
        w = (w - k) // s + 1
    return h, w


def _prep_conv_weights(w_oihw, b, stride):
    cout, cin, kh_full, kw_full = w_oihw.shape
    s = stride
    assert kh_full % s == 0 and kw_full % s == 0, "kernel must be multiple of stride"
    kh, kw = kh_full // s, kw_full // s
    w6 = w_oihw.reshape(cout, cin, kh, s, kw, s)
    # tap t = p*kw + q, row index (t_r*s + t_c)*cin + ci -- matches the
    # space-to-depth packing used in conv2d_relu.
    wt = jnp.transpose(w6, (2, 4, 3, 5, 1, 0)).reshape(kh * kw, s * s * cin, cout)
    return wt.astype(jnp.bfloat16), b.reshape(1, cout).astype(jnp.float32)


def prepare_params(params, input_shape):
    """Repack PyTorch-layout params into kernel layouts (bf16), once, un-jitted."""
    c, h, w = input_shape
    h3, w3 = _conv_out_hw(h, w)
    c3 = 128
    n_actions = params["adv2_w"].shape[0]
    np_lanes = max(128, _round_up(n_actions, 128))   # lane-dense output width

    prep = {}
    prep["conv1_wt"], prep["conv1_b"] = _prep_conv_weights(
        params["conv1_w"], params["conv1_b"], 4)
    prep["conv2_wt"], prep["conv2_b"] = _prep_conv_weights(
        params["conv2_w"], params["conv2_b"], 2)
    prep["conv3_wt"], prep["conv3_b"] = _prep_conv_weights(
        params["conv3_w"], params["conv3_b"], 1)

    f = c3 * h3 * w3

    def permute_rows(w_t):    # fc1 rows: torch CHW flatten order -> our HWC order
        return jnp.transpose(w_t.reshape(c3, h3, w3, -1), (1, 2, 0, 3)).reshape(f, -1)

    w1 = jnp.concatenate([permute_rows(params["adv1_w"].T),
                          permute_rows(params["val1_w"].T)], axis=1)      # (F, 512)
    b1 = jnp.concatenate([params["adv1_b"], params["val1_b"]]).reshape(1, -1)

    # Fold q = val + adv - mean(adv) into the (linear) second layer:
    # adv columns centered, val column broadcast into every action column.
    wa = params["adv2_w"].T                       # (256, A)
    wv = params["val2_w"].T                       # (256, 1)
    ba = params["adv2_b"]
    bv = params["val2_b"]
    w2 = jnp.zeros((w1.shape[1], np_lanes), jnp.float32)
    w2 = w2.at[:256, :n_actions].set(wa - jnp.mean(wa, axis=1, keepdims=True))
    w2 = w2.at[256:, :n_actions].set(jnp.tile(wv, (1, n_actions)))
    b2 = jnp.zeros((1, np_lanes), jnp.float32)
    b2 = b2.at[0, :n_actions].set(ba - jnp.mean(ba) + bv[0])

    prep["fc_w1"] = w1.astype(jnp.bfloat16)
    prep["fc_b1"] = b1.astype(jnp.float32)
    prep["fc_w2"] = w2.astype(jnp.bfloat16)
    prep["fc_b2"] = b2.astype(jnp.float32)
    return prep


# ---------------------------------------------------------------------------
# Full forward (jit this; n_actions bound statically via functools.partial)
# ---------------------------------------------------------------------------
def dueling_dqn_forward(x_nchw, prep, *, n_actions):
    x = jnp.transpose(x_nchw, (0, 2, 3, 1))       # NCHW -> NHWC (channels -> lanes)
    x = conv2d_relu(x, prep["conv1_wt"], prep["conv1_b"], stride=4)
    x = conv2d_relu(x, prep["conv2_wt"], prep["conv2_b"], stride=2)
    x = conv2d_relu(x, prep["conv3_wt"], prep["conv3_b"], stride=1)
    n, oh, ow, c = x.shape
    conv_out = x.reshape(n, oh * ow * c)          # NHWC flatten (fc1 rows permuted)
    # TODO(synk): conv3 could be fused into the head kernel to skip this HBM
    # round trip of the conv3 activations (low priority, per review).
    return dueling_head(conv_out, prep, n_actions)


# ---------------------------------------------------------------------------
# Deterministic parameter init (PyTorch-style shapes, uniform fan-in scaling)
# ---------------------------------------------------------------------------
def init_params(key, input_shape, n_actions):
    c, h, w = input_shape
    h3, w3 = _conv_out_hw(h, w)
    conv_out_size = 128 * h3 * w3
    ks = jax.random.split(key, 14)

    def u(k, shape, fan_in):
        bound = 1.0 / float(fan_in) ** 0.5
        return jax.random.uniform(k, shape, jnp.float32, -bound, bound)

    return {
        "conv1_w": u(ks[0], (64, c, 8, 8), c * 8 * 8),
        "conv1_b": u(ks[1], (64,), c * 8 * 8),
        "conv2_w": u(ks[2], (128, 64, 4, 4), 64 * 4 * 4),
        "conv2_b": u(ks[3], (128,), 64 * 4 * 4),
        "conv3_w": u(ks[4], (128, 128, 3, 3), 128 * 3 * 3),
        "conv3_b": u(ks[5], (128,), 128 * 3 * 3),
        "adv1_w": u(ks[6], (256, conv_out_size), conv_out_size),
        "adv1_b": u(ks[7], (256,), conv_out_size),
        "adv2_w": u(ks[8], (n_actions, 256), 256),
        "adv2_b": u(ks[9], (n_actions,), 256),
        "val1_w": u(ks[10], (256, conv_out_size), conv_out_size),
        "val1_b": u(ks[11], (256,), conv_out_size),
        "val2_w": u(ks[12], (1, 256), 256),
        "val2_b": u(ks[13], (1,), 256),
    }


def _reference_forward(x, params):
    """Pure-JAX f32 mirror of the PyTorch module (for a loose numeric check)."""
    def conv(y, wt, b, s):
        y = jax.lax.conv_general_dilated(
            y, wt, (s, s), "VALID",
            dimension_numbers=("NCHW", "OIHW", "NCHW"))
        return jax.nn.relu(y + b.reshape(1, -1, 1, 1))

    y = conv(x, params["conv1_w"], params["conv1_b"], 4)
    y = conv(y, params["conv2_w"], params["conv2_b"], 2)
    y = conv(y, params["conv3_w"], params["conv3_b"], 1)
    f = y.reshape(y.shape[0], -1)                     # NCHW flatten, like torch .view
    adv = jax.nn.relu(f @ params["adv1_w"].T + params["adv1_b"]) \
        @ params["adv2_w"].T + params["adv2_b"]
    val = jax.nn.relu(f @ params["val1_w"].T + params["val1_b"]) \
        @ params["val2_w"].T + params["val2_b"]
    return val + adv - adv.mean(axis=1, keepdims=True)


if __name__ == "__main__":
    input_shape = (4, 44, 44)   # small: conv stack yields 2x2x128 -> conv_out = 512
    n_actions = 6
    batch = 2

    key = jax.random.PRNGKey(0)
    pkey, xkey = jax.random.split(key)
    params = init_params(pkey, input_shape, n_actions)
    x = jax.random.normal(xkey, (batch,) + input_shape, jnp.float32)

    prep = prepare_params(params, input_shape)     # one-time repack, outside jit
    fwd = jax.jit(functools.partial(dueling_dqn_forward, n_actions=n_actions))
    q = jax.block_until_ready(fwd(x, prep))

    assert q.shape == (batch, n_actions)
    assert bool(jnp.all(jnp.isfinite(q)))
    q_ref = _reference_forward(x, params)
    err = float(jnp.max(jnp.abs(q - q_ref)))
    assert err < 3e-2, f"mismatch vs reference: max abs err {err}"
    print("KERNEL_OK")
</pallas_src>

<mosaic_0001>
module attributes {stable_mosaic.version = 11 : i64} {
  func.func @_conv_tap_kernel(%arg0: i32, %arg1: memref<272x64xbf16, #tpu.memory_space<vmem>>, %arg2: memref<4x64x64xbf16, #tpu.memory_space<vmem>>, %arg3: memref<1x64xf32, #tpu.memory_space<vmem>>, %arg4: memref<272x64xbf16, #tpu.memory_space<vmem>>) attributes {dimension_semantics = [#tpu.dimension_semantics<parallel>], iteration_bounds = array<i64: 1>, scalar_prefetch = 0 : i64, scratch_operands = 0 : i64, tpu.core_type = #tpu.core_type<tc>, window_params = [{transform_indices = @transform_0, window_bounds = array<i64: 272, 64>}, {pipeline_mode = #tpu.pipeline_mode<synchronous>, transform_indices = @transform_1, window_bounds = array<i64: 4, 64, 64>}, {pipeline_mode = #tpu.pipeline_mode<synchronous>, transform_indices = @transform_2, window_bounds = array<i64: 1, 64>}, {transform_indices = @transform_3, window_bounds = array<i64: 272, 64>}]} {
    %c0 = arith.constant 0 : index
    %c0_0 = arith.constant 0 : index
    %0 = vector.load %arg1[%c0, %c0_0] : memref<272x64xbf16, #tpu.memory_space<vmem>>, vector<272x64xbf16>
    %c0_1 = arith.constant 0 : index
    %c0_2 = arith.constant 0 : index
    %c0_3 = arith.constant 0 : index
    %1 = vector.load %arg2[%c0_1, %c0_2, %c0_3] : memref<4x64x64xbf16, #tpu.memory_space<vmem>>, vector<1x64x64xbf16>
    %2 = vector.shape_cast %1 : vector<1x64x64xbf16> to vector<64x64xbf16>
    %cst = arith.constant dense<0.000000e+00> : vector<272x64xf32>
    %3 = tpu.matmul %0, %2, %cst {dimension_numbers = #tpu.dot_dimension_numbers<[1], [0], [0], [1], [0, 0, 1, 1], [], []>} : vector<272x64xbf16>, vector<64x64xbf16>, vector<272x64xf32> -> vector<272x64xf32>
    %4 = vector.extract_strided_slice %0 {offsets = [1, 0], sizes = [271, 64], strides = [1, 1]} : vector<272x64xbf16> to vector<271x64xbf16>
    %cst_4 = arith.constant 0.000000e+00 : bf16
    %5 = vector.broadcast %cst_4 : bf16 to vector<1x64xbf16>
    %6 = tpu.concatenate %4, %5 in 0 : vector<271x64xbf16>, vector<1x64xbf16> -> vector<272x64xbf16>
    %c1 = arith.constant 1 : index
    %c0_5 = arith.constant 0 : index
    %c0_6 = arith.constant 0 : index
    %7 = vector.load %arg2[%c1, %c0_5, %c0_6] : memref<4x64x64xbf16, #tpu.memory_space<vmem>>, vector<1x64x64xbf16>
    %8 = vector.shape_cast %7 : vector<1x64x64xbf16> to vector<64x64xbf16>
    %cst_7 = arith.constant dense<0.000000e+00> : vector<272x64xf32>
    %9 = tpu.matmul %6, %8, %cst_7 {dimension_numbers = #tpu.dot_dimension_numbers<[1], [0], [0], [1], [0, 0, 1, 1], [], []>} : vector<272x64xbf16>, vector<64x64xbf16>, vector<272x64xf32> -> vector<272x64xf32>
    %10 = arith.addf %3, %9 : vector<272x64xf32>
    %11 = vector.extract_strided_slice %0 {offsets = [11, 0], sizes = [261, 64], strides = [1, 1]} : vector<272x64xbf16> to vector<261x64xbf16>
    %cst_8 = arith.constant 0.000000e+00 : bf16
    %12 = vector.broadcast %cst_8 : bf16 to vector<11x64xbf16>
    %13 = tpu.concatenate %11, %12 in 0 : vector<261x64xbf16>, vector<11x64xbf16> -> vector<272x64xbf16>
    %c2 = arith.constant 2 : index
    %c0_9 = arith.constant 0 : index
    %c0_10 = arith.constant 0 : index
    %14 = vector.load %arg2[%c2, %c0_9, %c0_10] : memref<4x64x64xbf16, #tpu.memory_space<vmem>>, vector<1x64x64xbf16>
    %15 = vector.shape_cast %14 : vector<1x64x64xbf16> to vector<64x64xbf16>
    %cst_11 = arith.constant dense<0.000000e+00> : vector<272x64xf32>
    %16 = tpu.matmul %13, %15, %cst_11 {dimension_numbers = #tpu.dot_dimension_numbers<[1], [0], [0], [1], [0, 0, 1, 1], [], []>} : vector<272x64xbf16>, vector<64x64xbf16>, vector<272x64xf32> -> vector<272x64xf32>
    %17 = arith.addf %10, %16 : vector<272x64xf32>
    %18 = vector.extract_strided_slice %0 {offsets = [12, 0], sizes = [260, 64], strides = [1, 1]} : vector<272x64xbf16> to vector<260x64xbf16>
    %cst_12 = arith.constant 0.000000e+00 : bf16
    %19 = vector.broadcast %cst_12 : bf16 to vector<12x64xbf16>
    %20 = tpu.concatenate %18, %19 in 0 : vector<260x64xbf16>, vector<12x64xbf16> -> vector<272x64xbf16>
    %c3 = arith.constant 3 : index
    %c0_13 = arith.constant 0 : index
    %c0_14 = arith.constant 0 : index
    %21 = vector.load %arg2[%c3, %c0_13, %c0_14] : memref<4x64x64xbf16, #tpu.memory_space<vmem>>, vector<1x64x64xbf16>
    %22 = vector.shape_cast %21 : vector<1x64x64xbf16> to vector<64x64xbf16>
    %cst_15 = arith.constant dense<0.000000e+00> : vector<272x64xf32>
    %23 = tpu.matmul %20, %22, %cst_15 {dimension_numbers = #tpu.dot_dimension_numbers<[1], [0], [0], [1], [0, 0, 1, 1], [], []>} : vector<272x64xbf16>, vector<64x64xbf16>, vector<272x64xf32> -> vector<272x64xf32>
    %24 = arith.addf %17, %23 : vector<272x64xf32>
    %c0_16 = arith.constant 0 : index
    %c0_17 = arith.constant 0 : index
    %25 = vector.load %arg3[%c0_16, %c0_17] : memref<1x64xf32, #tpu.memory_space<vmem>>, vector<1x64xf32>
    %26 = vector.broadcast %25 : vector<1x64xf32> to vector<272x64xf32>
    %27 = arith.addf %24, %26 : vector<272x64xf32>
    %cst_18 = arith.constant 0.000000e+00 : f32
    %28 = vector.broadcast %cst_18 : f32 to vector<272x64xf32>
    %29 = arith.maximumf %27, %28 : vector<272x64xf32>
    %30 = arith.truncf %29 : vector<272x64xf32> to vector<272x64xbf16>
    %c0_19 = arith.constant 0 : index
    %c0_20 = arith.constant 0 : index
    %31 = vector.load %arg4[%c0_19, %c0_20] : memref<272x64xbf16, #tpu.memory_space<vmem>>, vector<272x64xbf16>
    tpu.vector_store %arg4[%c0_19, %c0_20], %30 {strides = array<i32>} : memref<272x64xbf16, #tpu.memory_space<vmem>>, vector<272x64xbf16>,
    return
  }
  func.func @transform_0(%arg0: i32) -> (i32, i32) {
    %c0_i32 = arith.constant 0 : i32
    %c0_i32_0 = arith.constant 0 : i32
    return %arg0, %c0_i32 : i32, i32
  }
  func.func @transform_1(%arg0: i32) -> (i32, i32, i32) {
    %c0_i32 = arith.constant 0 : i32
    %c0_i32_0 = arith.constant 0 : i32
    %c0_i32_1 = arith.constant 0 : i32
    %c0_i32_2 = arith.constant 0 : i32
    return %c0_i32, %c0_i32_0, %c0_i32_1 : i32, i32, i32
  }
  func.func @transform_2(%arg0: i32) -> (i32, i32) {
    %c0_i32 = arith.constant 0 : i32
    %c0_i32_0 = arith.constant 0 : i32
    %c0_i32_1 = arith.constant 0 : i32
    return %c0_i32, %c0_i32_0 : i32, i32
  }
  func.func @transform_3(%arg0: i32) -> (i32, i32) {
    %c0_i32 = arith.constant 0 : i32
    %c0_i32_0 = arith.constant 0 : i32
    return %arg0, %c0_i32 : i32, i32
  }
}

module attributes {stable_mosaic.version = 11 : i64} {
  func.func @_conv_tap_kernel(%arg0: i32, %arg1: memref<64x256xbf16, #tpu.memory_space<vmem>>, %arg2: memref<4x256x128xbf16, #tpu.memory_space<vmem>>, %arg3: memref<1x128xf32, #tpu.memory_space<vmem>>, %arg4: memref<64x128xbf16, #tpu.memory_space<vmem>>) attributes {dimension_semantics = [#tpu.dimension_semantics<parallel>], iteration_bounds = array<i64: 1>, scalar_prefetch = 0 : i64, scratch_operands = 0 : i64, tpu.core_type = #tpu.core_type<tc>, window_params = [{transform_indices = @transform_0, window_bounds = array<i64: 64, 256>}, {pipeline_mode = #tpu.pipeline_mode<synchronous>, transform_indices = @transform_1, window_bounds = array<i64: 4, 256, 128>}, {pipeline_mode = #tpu.pipeline_mode<synchronous>, transform_indices = @transform_2, window_bounds = array<i64: 1, 128>}, {transform_indices = @transform_3, window_bounds = array<i64: 64, 128>}]} {
    %c0 = arith.constant 0 : index
    %c0_0 = arith.constant 0 : index
    %0 = vector.load %arg1[%c0, %c0_0] : memref<64x256xbf16, #tpu.memory_space<vmem>>, vector<64x256xbf16>
    %c0_1 = arith.constant 0 : index
    %c0_2 = arith.constant 0 : index
    %c0_3 = arith.constant 0 : index
    %1 = vector.load %arg2[%c0_1, %c0_2, %c0_3] : memref<4x256x128xbf16, #tpu.memory_space<vmem>>, vector<1x256x128xbf16>
    %2 = vector.shape_cast %1 : vector<1x256x128xbf16> to vector<256x128xbf16>
    %cst = arith.constant dense<0.000000e+00> : vector<64x128xf32>
    %3 = tpu.matmul %0, %2, %cst {dimension_numbers = #tpu.dot_dimension_numbers<[1], [0], [0], [1], [0, 0, 1, 1], [], []>} : vector<64x256xbf16>, vector<256x128xbf16>, vector<64x128xf32> -> vector<64x128xf32>
    %4 = vector.extract_strided_slice %0 {offsets = [1, 0], sizes = [63, 256], strides = [1, 1]} : vector<64x256xbf16> to vector<63x256xbf16>
    %cst_4 = arith.constant 0.000000e+00 : bf16
    %5 = vector.broadcast %cst_4 : bf16 to vector<1x256xbf16>
    %6 = tpu.concatenate %4, %5 in 0 : vector<63x256xbf16>, vector<1x256xbf16> -> vector<64x256xbf16>
    %c1 = arith.constant 1 : index
    %c0_5 = arith.constant 0 : index
    %c0_6 = arith.constant 0 : index
    %7 = vector.load %arg2[%c1, %c0_5, %c0_6] : memref<4x256x128xbf16, #tpu.memory_space<vmem>>, vector<1x256x128xbf16>
    %8 = vector.shape_cast %7 : vector<1x256x128xbf16> to vector<256x128xbf16>
    %cst_7 = arith.constant dense<0.000000e+00> : vector<64x128xf32>
    %9 = tpu.matmul %6, %8, %cst_7 {dimension_numbers = #tpu.dot_dimension_numbers<[1], [0], [0], [1], [0, 0, 1, 1], [], []>} : vector<64x256xbf16>, vector<256x128xbf16>, vector<64x128xf32> -> vector<64x128xf32>
    %10 = arith.addf %3, %9 : vector<64x128xf32>
    %11 = vector.extract_strided_slice %0 {offsets = [5, 0], sizes = [59, 256], strides = [1, 1]} : vector<64x256xbf16> to vector<59x256xbf16>
    %cst_8 = arith.constant 0.000000e+00 : bf16
    %12 = vector.broadcast %cst_8 : bf16 to vector<5x256xbf16>
    %13 = tpu.concatenate %11, %12 in 0 : vector<59x256xbf16>, vector<5x256xbf16> -> vector<64x256xbf16>
    %c2 = arith.constant 2 : index
    %c0_9 = arith.constant 0 : index
    %c0_10 = arith.constant 0 : index
    %14 = vector.load %arg2[%c2, %c0_9, %c0_10] : memref<4x256x128xbf16, #tpu.memory_space<vmem>>, vector<1x256x128xbf16>
    %15 = vector.shape_cast %14 : vector<1x256x128xbf16> to vector<256x128xbf16>
    %cst_11 = arith.constant dense<0.000000e+00> : vector<64x128xf32>
    %16 = tpu.matmul %13, %15, %cst_11 {dimension_numbers = #tpu.dot_dimension_numbers<[1], [0], [0], [1], [0, 0, 1, 1], [], []>} : vector<64x256xbf16>, vector<256x128xbf16>, vector<64x128xf32> -> vector<64x128xf32>
    %17 = arith.addf %10, %16 : vector<64x128xf32>
    %18 = vector.extract_strided_slice %0 {offsets = [6, 0], sizes = [58, 256], strides = [1, 1]} : vector<64x256xbf16> to vector<58x256xbf16>
    %cst_12 = arith.constant 0.000000e+00 : bf16
    %19 = vector.broadcast %cst_12 : bf16 to vector<6x256xbf16>
    %20 = tpu.concatenate %18, %19 in 0 : vector<58x256xbf16>, vector<6x256xbf16> -> vector<64x256xbf16>
    %c3 = arith.constant 3 : index
    %c0_13 = arith.constant 0 : index
    %c0_14 = arith.constant 0 : index
    %21 = vector.load %arg2[%c3, %c0_13, %c0_14] : memref<4x256x128xbf16, #tpu.memory_space<vmem>>, vector<1x256x128xbf16>
    %22 = vector.shape_cast %21 : vector<1x256x128xbf16> to vector<256x128xbf16>
    %cst_15 = arith.constant dense<0.000000e+00> : vector<64x128xf32>
    %23 = tpu.matmul %20, %22, %cst_15 {dimension_numbers = #tpu.dot_dimension_numbers<[1], [0], [0], [1], [0, 0, 1, 1], [], []>} : vector<64x256xbf16>, vector<256x128xbf16>, vector<64x128xf32> -> vector<64x128xf32>
    %24 = arith.addf %17, %23 : vector<64x128xf32>
    %c0_16 = arith.constant 0 : index
    %c0_17 = arith.constant 0 : index
    %25 = vector.load %arg3[%c0_16, %c0_17] : memref<1x128xf32, #tpu.memory_space<vmem>>, vector<1x128xf32>
    %26 = vector.broadcast %25 : vector<1x128xf32> to vector<64x128xf32>
    %27 = arith.addf %24, %26 : vector<64x128xf32>
    %cst_18 = arith.constant 0.000000e+00 : f32
    %28 = vector.broadcast %cst_18 : f32 to vector<64x128xf32>
    %29 = arith.maximumf %27, %28 : vector<64x128xf32>
    %30 = arith.truncf %29 : vector<64x128xf32> to vector<64x128xbf16>
    %c0_19 = arith.constant 0 : index
    %c0_20 = arith.constant 0 : index
    %31 = vector.load %arg4[%c0_19, %c0_20] : memref<64x128xbf16, #tpu.memory_space<vmem>>, vector<64x128xbf16>
    tpu.vector_store %arg4[%c0_19, %c0_20], %30 {strides = array<i32>} : memref<64x128xbf16, #tpu.memory_space<vmem>>, vector<64x128xbf16>,
    return
  }
  func.func @transform_0(%arg0: i32) -> (i32, i32) {
    %c0_i32 = arith.constant 0 : i32
    %c0_i32_0 = arith.constant 0 : i32
    return %arg0, %c0_i32 : i32, i32
  }
  func.func @transform_1(%arg0: i32) -> (i32, i32, i32) {
    %c0_i32 = arith.constant 0 : i32
    %c0_i32_0 = arith.constant 0 : i32
    %c0_i32_1 = arith.constant 0 : i32
    %c0_i32_2 = arith.constant 0 : i32
    return %c0_i32, %c0_i32_0, %c0_i32_1 : i32, i32, i32
  }
  func.func @transform_2(%arg0: i32) -> (i32, i32) {
    %c0_i32 = arith.constant 0 : i32
    %c0_i32_0 = arith.constant 0 : i32
    %c0_i32_1 = arith.constant 0 : i32
    return %c0_i32, %c0_i32_0 : i32, i32
  }
  func.func @transform_3(%arg0: i32) -> (i32, i32) {
    %c0_i32 = arith.constant 0 : i32
    %c0_i32_0 = arith.constant 0 : i32
    return %arg0, %c0_i32 : i32, i32
  }
}

module attributes {stable_mosaic.version = 11 : i64} {
  func.func @_conv_tap_kernel(%arg0: i32, %arg1: memref<64x128xbf16, #tpu.memory_space<vmem>>, %arg2: memref<9x128x128xbf16, #tpu.memory_space<vmem>>, %arg3: memref<1x128xf32, #tpu.memory_space<vmem>>, %arg4: memref<64x128xbf16, #tpu.memory_space<vmem>>) attributes {dimension_semantics = [#tpu.dimension_semantics<parallel>], iteration_bounds = array<i64: 1>, scalar_prefetch = 0 : i64, scratch_operands = 0 : i64, tpu.core_type = #tpu.core_type<tc>, window_params = [{transform_indices = @transform_0, window_bounds = array<i64: 64, 128>}, {pipeline_mode = #tpu.pipeline_mode<synchronous>, transform_indices = @transform_1, window_bounds = array<i64: 9, 128, 128>}, {pipeline_mode = #tpu.pipeline_mode<synchronous>, transform_indices = @transform_2, window_bounds = array<i64: 1, 128>}, {transform_indices = @transform_3, window_bounds = array<i64: 64, 128>}]} {
    %c0 = arith.constant 0 : index
    %c0_0 = arith.constant 0 : index
    %0 = vector.load %arg1[%c0, %c0_0] : memref<64x128xbf16, #tpu.memory_space<vmem>>, vector<64x128xbf16>
    %c0_1 = arith.constant 0 : index
    %c0_2 = arith.constant 0 : index
    %c0_3 = arith.constant 0 : index
    %1 = vector.load %arg2[%c0_1, %c0_2, %c0_3] : memref<9x128x128xbf16, #tpu.memory_space<vmem>>, vector<1x128x128xbf16>
    %2 = vector.shape_cast %1 : vector<1x128x128xbf16> to vector<128x128xbf16>
    %cst = arith.constant dense<0.000000e+00> : vector<64x128xf32>
    %3 = tpu.matmul %0, %2, %cst {dimension_numbers = #tpu.dot_dimension_numbers<[1], [0], [0], [1], [0, 0, 1, 1], [], []>} : vector<64x128xbf16>, vector<128x128xbf16>, vector<64x128xf32> -> vector<64x128xf32>
    %4 = vector.extract_strided_slice %0 {offsets = [1, 0], sizes = [63, 128], strides = [1, 1]} : vector<64x128xbf16> to vector<63x128xbf16>
    %cst_4 = arith.constant 0.000000e+00 : bf16
    %5 = vector.broadcast %cst_4 : bf16 to vector<1x128xbf16>
    %6 = tpu.concatenate %4, %5 in 0 : vector<63x128xbf16>, vector<1x128xbf16> -> vector<64x128xbf16>
    %c1 = arith.constant 1 : index
    %c0_5 = arith.constant 0 : index
    %c0_6 = arith.constant 0 : index
    %7 = vector.load %arg2[%c1, %c0_5, %c0_6] : memref<9x128x128xbf16, #tpu.memory_space<vmem>>, vector<1x128x128xbf16>
    %8 = vector.shape_cast %7 : vector<1x128x128xbf16> to vector<128x128xbf16>
    %cst_7 = arith.constant dense<0.000000e+00> : vector<64x128xf32>
    %9 = tpu.matmul %6, %8, %cst_7 {dimension_numbers = #tpu.dot_dimension_numbers<[1], [0], [0], [1], [0, 0, 1, 1], [], []>} : vector<64x128xbf16>, vector<128x128xbf16>, vector<64x128xf32> -> vector<64x128xf32>
    %10 = arith.addf %3, %9 : vector<64x128xf32>
    %11 = vector.extract_strided_slice %0 {offsets = [2, 0], sizes = [62, 128], strides = [1, 1]} : vector<64x128xbf16> to vector<62x128xbf16>
    %cst_8 = arith.constant 0.000000e+00 : bf16
    %12 = vector.broadcast %cst_8 : bf16 to vector<2x128xbf16>
    %13 = tpu.concatenate %11, %12 in 0 : vector<62x128xbf16>, vector<2x128xbf16> -> vector<64x128xbf16>
    %c2 = arith.constant 2 : index
    %c0_9 = arith.constant 0 : index
    %c0_10 = arith.constant 0 : index
    %14 = vector.load %arg2[%c2, %c0_9, %c0_10] : memref<9x128x128xbf16, #tpu.memory_space<vmem>>, vector<1x128x128xbf16>
    %15 = vector.shape_cast %14 : vector<1x128x128xbf16> to vector<128x128xbf16>
    %cst_11 = arith.constant dense<0.000000e+00> : vector<64x128xf32>
    %16 = tpu.matmul %13, %15, %cst_11 {dimension_numbers = #tpu.dot_dimension_numbers<[1], [0], [0], [1], [0, 0, 1, 1], [], []>} : vector<64x128xbf16>, vector<128x128xbf16>, vector<64x128xf32> -> vector<64x128xf32>
    %17 = arith.addf %10, %16 : vector<64x128xf32>
    %18 = vector.extract_strided_slice %0 {offsets = [4, 0], sizes = [60, 128], strides = [1, 1]} : vector<64x128xbf16> to vector<60x128xbf16>
    %cst_12 = arith.constant 0.000000e+00 : bf16
    %19 = vector.broadcast %cst_12 : bf16 to vector<4x128xbf16>
    %20 = tpu.concatenate %18, %19 in 0 : vector<60x128xbf16>, vector<4x128xbf16> -> vector<64x128xbf16>
    %c3 = arith.constant 3 : index
    %c0_13 = arith.constant 0 : index
    %c0_14 = arith.constant 0 : index
    %21 = vector.load %arg2[%c3, %c0_13, %c0_14] : memref<9x128x128xbf16, #tpu.memory_space<vmem>>, vector<1x128x128xbf16>
    %22 = vector.shape_cast %21 : vector<1x128x128xbf16> to vector<128x128xbf16>
    %cst_15 = arith.constant dense<0.000000e+00> : vector<64x128xf32>
    %23 = tpu.matmul %20, %22, %cst_15 {dimension_numbers = #tpu.dot_dimension_numbers<[1], [0], [0], [1], [0, 0, 1, 1], [], []>} : vector<64x128xbf16>, vector<128x128xbf16>, vector<64x128xf32> -> vector<64x128xf32>
    %24 = arith.addf %17, %23 : vector<64x128xf32>
    %25 = vector.extract_strided_slice %0 {offsets = [5, 0], sizes = [59, 128], strides = [1, 1]} : vector<64x128xbf16> to vector<59x128xbf16>
    %cst_16 = arith.constant 0.000000e+00 : bf16
    %26 = vector.broadcast %cst_16 : bf16 to vector<5x128xbf16>
    %27 = tpu.concatenate %25, %26 in 0 : vector<59x128xbf16>, vector<5x128xbf16> -> vector<64x128xbf16>
    %c4 = arith.constant 4 : index
    %c0_17 = arith.constant 0 : index
    %c0_18 = arith.constant 0 : index
    %28 = vector.load %arg2[%c4, %c0_17, %c0_18] : memref<9x128x128xbf16, #tpu.memory_space<vmem>>, vector<1x128x128xbf16>
    %29 = vector.shape_cast %28 : vector<1x128x128xbf16> to vector<128x128xbf16>
    %cst_19 = arith.constant dense<0.000000e+00> : vector<64x128xf32>
    %30 = tpu.matmul %27, %29, %cst_19 {dimension_numbers = #tpu.dot_dimension_numbers<[1], [0], [0], [1], [0, 0, 1, 1], [], []>} : vector<64x128xbf16>, vector<128x128xbf16>, vector<64x128xf32> -> vector<64x128xf32>
    %31 = arith.addf %24, %30 : vector<64x128xf32>
    %32 = vector.extract_strided_slice %0 {offsets = [6, 0], sizes = [58, 128], strides = [1, 1]} : vector<64x128xbf16> to vector<58x128xbf16>
    %cst_20 = arith.constant 0.000000e+00 : bf16
    %33 = vector.broadcast %cst_20 : bf16 to vector<6x128xbf16>
    %34 = tpu.concatenate %32, %33 in 0 : vector<58x128xbf16>, vector<6x128xbf16> -> vector<64x128xbf16>
    %c5 = arith.constant 5 : index
    %c0_21 = arith.constant 0 : index
    %c0_22 = arith.constant 0 : index
    %35 = vector.load %arg2[%c5, %c0_21, %c0_22] : memref<9x128x128xbf16, #tpu.memory_space<vmem>>, vector<1x128x128xbf16>
    %36 = vector.shape_cast %35 : vector<1x128x128xbf16> to vector<128x128xbf16>
    %cst_23 = arith.constant dense<0.000000e+00> : vector<64x128xf32>
    %37 = tpu.matmul %34, %36, %cst_23 {dimension_numbers = #tpu.dot_dimension_numbers<[1], [0], [0], [1], [0, 0, 1, 1], [], []>} : vector<64x128xbf16>, vector<128x128xbf16>, vector<64x128xf32> -> vector<64x128xf32>
    %38 = arith.addf %31, %37 : vector<64x128xf32>
    %39 = vector.extract_strided_slice %0 {offsets = [8, 0], sizes = [56, 128], strides = [1, 1]} : vector<64x128xbf16> to vector<56x128xbf16>
    %cst_24 = arith.constant 0.000000e+00 : bf16
    %40 = vector.broadcast %cst_24 : bf16 to vector<8x128xbf16>
    %41 = tpu.concatenate %39, %40 in 0 : vector<56x128xbf16>, vector<8x128xbf16> -> vector<64x128xbf16>
    %c6 = arith.constant 6 : index
    %c0_25 = arith.constant 0 : index
    %c0_26 = arith.constant 0 : index
    %42 = vector.load %arg2[%c6, %c0_25, %c0_26] : memref<9x128x128xbf16, #tpu.memory_space<vmem>>, vector<1x128x128xbf16>
    %43 = vector.shape_cast %42 : vector<1x128x128xbf16> to vector<128x128xbf16>
    %cst_27 = arith.constant dense<0.000000e+00> : vector<64x128xf32>
    %44 = tpu.matmul %41, %43, %cst_27 {dimension_numbers = #tpu.dot_dimension_numbers<[1], [0], [0], [1], [0, 0, 1, 1], [], []>} : vector<64x128xbf16>, vector<128x128xbf16>, vector<64x128xf32> -> vector<64x128xf32>
    %45 = arith.addf %38, %44 : vector<64x128xf32>
    %46 = vector.extract_strided_slice %0 {offsets = [9, 0], sizes = [55, 128], strides = [1, 1]} : vector<64x128xbf16> to vector<55x128xbf16>
    %cst_28 = arith.constant 0.000000e+00 : bf16
    %47 = vector.broadcast %cst_28 : bf16 to vector<9x128xbf16>
    %48 = tpu.concatenate %46, %47 in 0 : vector<55x128xbf16>, vector<9x128xbf16> -> vector<64x128xbf16>
    %c7 = arith.constant 7 : index
    %c0_29 = arith.constant 0 : index
    %c0_30 = arith.constant 0 : index
    %49 = vector.load %arg2[%c7, %c0_29, %c0_30] : memref<9x128x128xbf16, #tpu.memory_space<vmem>>, vector<1x128x128xbf16>
    %50 = vector.shape_cast %49 : vector<1x128x128xbf16> to vector<128x128xbf16>
    %cst_31 = arith.constant dense<0.000000e+00> : vector<64x128xf32>
    %51 = tpu.matmul %48, %50, %cst_31 {dimension_numbers = #tpu.dot_dimension_numbers<[1], [0], [0], [1], [0, 0, 1, 1], [], []>} : vector<64x128xbf16>, vector<128x128xbf16>, vector<64x128xf32> -> vector<64x128xf32>
    %52 = arith.addf %45, %51 : vector<64x128xf32>
    %53 = vector.extract_strided_slice %0 {offsets = [10, 0], sizes = [54, 128], strides = [1, 1]} : vector<64x128xbf16> to vector<54x128xbf16>
    %cst_32 = arith.constant 0.000000e+00 : bf16
    %54 = vector.broadcast %cst_32 : bf16 to vector<10x128xbf16>
    %55 = tpu.concatenate %53, %54 in 0 : vector<54x128xbf16>, vector<10x128xbf16> -> vector<64x128xbf16>
    %c8 = arith.constant 8 : index
    %c0_33 = arith.constant 0 : index
    %c0_34 = arith.constant 0 : index
    %56 = vector.load %arg2[%c8, %c0_33, %c0_34] : memref<9x128x128xbf16, #tpu.memory_space<vmem>>, vector<1x128x128xbf16>
    %57 = vector.shape_cast %56 : vector<1x128x128xbf16> to vector<128x128xbf16>
    %cst_35 = arith.constant dense<0.000000e+00> : vector<64x128xf32>
    %58 = tpu.matmul %55, %57, %cst_35 {dimension_numbers = #tpu.dot_dimension_numbers<[1], [0], [0], [1], [0, 0, 1, 1], [], []>} : vector<64x128xbf16>, vector<128x128xbf16>, vector<64x128xf32> -> vector<64x128xf32>
    %59 = arith.addf %52, %58 : vector<64x128xf32>
    %c0_36 = arith.constant 0 : index
    %c0_37 = arith.constant 0 : index
    %60 = vector.load %arg3[%c0_36, %c0_37] : memref<1x128xf32, #tpu.memory_space<vmem>>, vector<1x128xf32>
    %61 = vector.broadcast %60 : vector<1x128xf32> to vector<64x128xf32>
    %62 = arith.addf %59, %61 : vector<64x128xf32>
    %cst_38 = arith.constant 0.000000e+00 : f32
    %63 = vector.broadcast %cst_38 : f32 to vector<64x128xf32>
    %64 = arith.maximumf %62, %63 : vector<64x128xf32>
    %65 = arith.truncf %64 : vector<64x128xf32> to vector<64x128xbf16>
    %c0_39 = arith.constant 0 : index
    %c0_40 = arith.constant 0 : index
    %66 = vector.load %arg4[%c0_39, %c0_40] : memref<64x128xbf16, #tpu.memory_space<vmem>>, vector<64x128xbf16>
    tpu.vector_store %arg4[%c0_39, %c0_40], %65 {strides = array<i32>} : memref<64x128xbf16, #tpu.memory_space<vmem>>, vector<64x128xbf16>,
    return
  }
  func.func @transform_0(%arg0: i32) -> (i32, i32) {
    %c0_i32 = arith.constant 0 : i32
    %c0_i32_0 = arith.constant 0 : i32
    return %arg0, %c0_i32 : i32, i32
  }
  func.func @transform_1(%arg0: i32) -> (i32, i32, i32) {
    %c0_i32 = arith.constant 0 : i32
    %c0_i32_0 = arith.constant 0 : i32
    %c0_i32_1 = arith.constant 0 : i32
    %c0_i32_2 = arith.constant 0 : i32
    return %c0_i32, %c0_i32_0, %c0_i32_1 : i32, i32, i32
  }
  func.func @transform_2(%arg0: i32) -> (i32, i32) {
    %c0_i32 = arith.constant 0 : i32
    %c0_i32_0 = arith.constant 0 : i32
    %c0_i32_1 = arith.constant 0 : i32
    return %c0_i32, %c0_i32_0 : i32, i32
  }
  func.func @transform_3(%arg0: i32) -> (i32, i32) {
    %c0_i32 = arith.constant 0 : i32
    %c0_i32_0 = arith.constant 0 : i32
    return %arg0, %c0_i32 : i32, i32
  }
}

module attributes {stable_mosaic.version = 11 : i64} {
  func.func @_dueling_head_kernel(%arg0: i32, %arg1: i32, %arg2: memref<8x512xbf16, #tpu.memory_space<vmem>>, %arg3: memref<512x512xbf16, #tpu.memory_space<vmem>>, %arg4: memref<1x512xf32, #tpu.memory_space<vmem>>, %arg5: memref<512x128xbf16, #tpu.memory_space<vmem>>, %arg6: memref<1x128xf32, #tpu.memory_space<vmem>>, %arg7: memref<8x128xf32, #tpu.memory_space<vmem>>, %arg8: memref<8x512xf32, #tpu.memory_space<vmem>>) attributes {dimension_semantics = [#tpu.dimension_semantics<parallel>, #tpu.dimension_semantics<arbitrary>], iteration_bounds = array<i64: 1, 1>, scalar_prefetch = 0 : i64, scratch_operands = 1 : i64, tpu.core_type = #tpu.core_type<tc>, window_params = [{transform_indices = @transform_0, window_bounds = array<i64: 8, 512>}, {transform_indices = @transform_1, window_bounds = array<i64: 512, 512>}, {pipeline_mode = #tpu.pipeline_mode<synchronous>, transform_indices = @transform_2, window_bounds = array<i64: 1, 512>}, {pipeline_mode = #tpu.pipeline_mode<synchronous>, transform_indices = @transform_3, window_bounds = array<i64: 512, 128>}, {pipeline_mode = #tpu.pipeline_mode<synchronous>, transform_indices = @transform_4, window_bounds = array<i64: 1, 128>}, {transform_indices = @transform_5, window_bounds = array<i64: 8, 128>}]} {
    %c0_i32 = arith.constant 0 : i32
    %0 = arith.cmpi eq, %arg1, %c0_i32 : i32
    %1 = arith.extui %0 : i1 to i32
    %c0_i32_0 = arith.constant 0 : i32
    %2 = arith.cmpi ne, %1, %c0_i32_0 : i32
    scf.if %2 {
      %cst_10 = arith.constant 0.000000e+00 : f32
      %12 = vector.broadcast %cst_10 : f32 to vector<8x512xf32>
      %c0_11 = arith.constant 0 : index
      %c0_12 = arith.constant 0 : index
      %13 = vector.load %arg8[%c0_11, %c0_12] : memref<8x512xf32, #tpu.memory_space<vmem>>, vector<8x512xf32>
      tpu.vector_store %arg8[%c0_11, %c0_12], %12 {strides = array<i32>} : memref<8x512xf32, #tpu.memory_space<vmem>>, vector<8x512xf32>,
    } else {
    }
    %c0 = arith.constant 0 : index
    %c0_1 = arith.constant 0 : index
    %3 = vector.load %arg8[%c0, %c0_1] : memref<8x512xf32, #tpu.memory_space<vmem>>, vector<8x512xf32>
    %c0_2 = arith.constant 0 : index
    %c0_3 = arith.constant 0 : index
    %4 = vector.load %arg2[%c0_2, %c0_3] : memref<8x512xbf16, #tpu.memory_space<vmem>>, vector<8x512xbf16>
    %c0_4 = arith.constant 0 : index
    %c0_5 = arith.constant 0 : index
    %5 = vector.load %arg3[%c0_4, %c0_5] : memref<512x512xbf16, #tpu.memory_space<vmem>>, vector<512x512xbf16>
    %cst = arith.constant dense<0.000000e+00> : vector<8x512xf32>
    %6 = tpu.matmul %4, %5, %cst {dimension_numbers = #tpu.dot_dimension_numbers<[1], [0], [0], [1], [0, 0, 1, 1], [], []>} : vector<8x512xbf16>, vector<512x512xbf16>, vector<8x512xf32> -> vector<8x512xf32>
    %7 = arith.addf %3, %6 : vector<8x512xf32>
    %c0_6 = arith.constant 0 : index
    %c0_7 = arith.constant 0 : index
    %8 = vector.load %arg8[%c0_6, %c0_7] : memref<8x512xf32, #tpu.memory_space<vmem>>, vector<8x512xf32>
    tpu.vector_store %arg8[%c0_6, %c0_7], %7 {strides = array<i32>} : memref<8x512xf32, #tpu.memory_space<vmem>>, vector<8x512xf32>,
    %c0_i32_8 = arith.constant 0 : i32
    %9 = arith.cmpi eq, %arg1, %c0_i32_8 : i32
    %10 = arith.extui %9 : i1 to i32
    %c0_i32_9 = arith.constant 0 : i32
    %11 = arith.cmpi ne, %10, %c0_i32_9 : i32
    scf.if %11 {
      %c0_10 = arith.constant 0 : index
      %c0_11 = arith.constant 0 : index
      %12 = vector.load %arg8[%c0_10, %c0_11] : memref<8x512xf32, #tpu.memory_space<vmem>>, vector<8x512xf32>
      %c0_12 = arith.constant 0 : index
      %c0_13 = arith.constant 0 : index
      %13 = vector.load %arg4[%c0_12, %c0_13] : memref<1x512xf32, #tpu.memory_space<vmem>>, vector<1x512xf32>
      %14 = vector.broadcast %13 : vector<1x512xf32> to vector<8x512xf32>
      %15 = arith.addf %12, %14 : vector<8x512xf32>
      %cst_14 = arith.constant 0.000000e+00 : f32
      %16 = vector.broadcast %cst_14 : f32 to vector<8x512xf32>
      %17 = arith.maximumf %15, %16 : vector<8x512xf32>
      %18 = arith.truncf %17 : vector<8x512xf32> to vector<8x512xbf16>
      %c0_15 = arith.constant 0 : index
      %c0_16 = arith.constant 0 : index
      %19 = vector.load %arg5[%c0_15, %c0_16] : memref<512x128xbf16, #tpu.memory_space<vmem>>, vector<512x128xbf16>
      %cst_17 = arith.constant dense<0.000000e+00> : vector<8x128xf32>
      %20 = tpu.matmul %18, %19, %cst_17 {dimension_numbers = #tpu.dot_dimension_numbers<[1], [0], [0], [1], [0, 0, 1, 1], [], []>} : vector<8x512xbf16>, vector<512x128xbf16>, vector<8x128xf32> -> vector<8x128xf32>
      %c0_18 = arith.constant 0 : index
      %c0_19 = arith.constant 0 : index
      %21 = vector.load %arg6[%c0_18, %c0_19] : memref<1x128xf32, #tpu.memory_space<vmem>>, vector<1x128xf32>
      %22 = vector.broadcast %21 : vector<1x128xf32> to vector<8x128xf32>
      %23 = arith.addf %20, %22 : vector<8x128xf32>
      %c0_20 = arith.constant 0 : index
      %c0_21 = arith.constant 0 : index
      %24 = vector.load %arg7[%c0_20, %c0_21] : memref<8x128xf32, #tpu.memory_space<vmem>>, vector<8x128xf32>
      tpu.vector_store %arg7[%c0_20, %c0_21], %23 {strides = array<i32>} : memref<8x128xf32, #tpu.memory_space<vmem>>, vector<8x128xf32>,
    } else {
    }
    return
  }
  func.func @transform_0(%arg0: i32, %arg1: i32) -> (i32, i32) {
    %c0_i32 = arith.constant 0 : i32
    return %arg0, %arg1 : i32, i32
  }
  func.func @transform_1(%arg0: i32, %arg1: i32) -> (i32, i32) {
    %c0_i32 = arith.constant 0 : i32
    %c0_i32_0 = arith.constant 0 : i32
    return %arg1, %c0_i32 : i32, i32
  }
  func.func @transform_2(%arg0: i32, %arg1: i32) -> (i32, i32) {
    %c0_i32 = arith.constant 0 : i32
    %c0_i32_0 = arith.constant 0 : i32
    %c0_i32_1 = arith.constant 0 : i32
    return %c0_i32, %c0_i32_0 : i32, i32
  }
  func.func @transform_3(%arg0: i32, %arg1: i32) -> (i32, i32) {
    %c0_i32 = arith.constant 0 : i32
    %c0_i32_0 = arith.constant 0 : i32
    %c0_i32_1 = arith.constant 0 : i32
    return %c0_i32, %c0_i32_0 : i32, i32
  }
  func.func @transform_4(%arg0: i32, %arg1: i32) -> (i32, i32) {
    %c0_i32 = arith.constant 0 : i32
    %c0_i32_0 = arith.constant 0 : i32
    %c0_i32_1 = arith.constant 0 : i32
    return %c0_i32, %c0_i32_0 : i32, i32
  }
  func.func @transform_5(%arg0: i32, %arg1: i32) -> (i32, i32) {
    %c0_i32 = arith.constant 0 : i32
    %c0_i32_0 = arith.constant 0 : i32
    return %arg0, %c0_i32 : i32, i32
  }
}

</mosaic_0001>

<llo_original>
// kernel: dueling_dqn_forward.4
$region0: #{dueling_dqn_forward.4}
  #allocation0 [shape = 'u32[]', space=smem, size = 0x4, offset = 0x4, fixed_abs, tag = 'smem constant byte address 0x4 - core index']
  #allocation1 [shape = 'u32[144,128]{1,0:T(1,128)}', space=vmem, size = 0x12000, scoped, tag = 'internal scratch']
  %s0 = inlined_call_operand.vmem [shape: bf16[272,64], index: 0, kind: input, shape index: {}]
  %s1 = inlined_call_operand.vmem [shape: bf16[4,64,64], index: 1, kind: input, shape index: {}]
  %s2 = inlined_call_operand.vmem [shape: f32[1,64], index: 2, kind: input, shape index: {}]
  %s3 = inlined_call_operand.vmem [shape: bf16[272,64], index: 3, kind: output, shape index: {}]
  %s4 = sld [smem:[#allocation0]]
  $region22: #{dueling_dqn_forward.4} parent=0
    _
  %s6 = ssub.s32 1, %s4
  %s7 = scalar_select 0, %s6, %s4
  // Predicated region
  $region2: #{dueling_dqn_forward.4} parent=0 // pred_check
    _
  $region3: #{dueling_dqn_forward.4} parent=0 // pred_check_branch
    %9 = sbr.rel (0) target = $region5
  $region4: #{dueling_dqn_forward.4} parent=0 // pred_region
    _
  $region5: #{dueling_dqn_forward.4} parent=0 // pred_fallthru
    _
  // Predicated region
  $region6: #{dueling_dqn_forward.4} parent=0 // pred_check
    _
  $region7: #{dueling_dqn_forward.4} parent=0 // pred_check_branch
    %11 = sbr.rel (0) target = $region9
  $region8: #{dueling_dqn_forward.4} parent=0 // pred_region
    _
  $region9: #{dueling_dqn_forward.4} parent=0 // pred_fallthru
    _
  // Predicated region
  $region10: #{dueling_dqn_forward.4} parent=0 // pred_check
    _
  $region11: #{dueling_dqn_forward.4} parent=0 // pred_check_branch
    %13 = sbr.rel (0) target = $region13
  $region12: #{dueling_dqn_forward.4} parent=0 // pred_region
    _
  $region13: #{dueling_dqn_forward.4} parent=0 // pred_fallthru
    _
  %v15 = vld [vmem:[%s0] sm:$0xf]
  %v16 = vld [vmem:[%s0 + $0x4] sm:$0xf]
  %v17 = vld [vmem:[%s0 + $0x8] sm:$0xf]
  %v18 = vld [vmem:[%s0 + $0xc] sm:$0xf]
  %v19 = vld [vmem:[%s0 + $0x10] sm:$0xf]
  %v20 = vld [vmem:[%s0 + $0x14] sm:$0xf]
  %v21 = vld [vmem:[%s0 + $0x18] sm:$0xf]
  %v22 = vld [vmem:[%s0 + $0x1c] sm:$0xf]
  %v23 = vld [vmem:[%s0 + $0x20] sm:$0xf]
  %v24 = vld [vmem:[%s0 + $0x24] sm:$0xf]
  %v25 = vld [vmem:[%s0 + $0x28] sm:$0xf]
  %v26 = vld [vmem:[%s0 + $0x2c] sm:$0xf]
  %v27 = vld [vmem:[%s0 + $0x30] sm:$0xf]
  %v28 = vld [vmem:[%s0 + $0x34] sm:$0xf]
  %v29 = vld [vmem:[%s0 + $0x38] sm:$0xf]
  %v30 = vld [vmem:[%s0 + $0x3c] sm:$0xf]
  %v31 = vld [vmem:[%s0 + $0x40] sm:$0xf]
  %v32 = vld [vmem:[%s0 + $0x44] sm:$0xf]
  %v33 = vld [vmem:[%s0 + $0x48] sm:$0xf]
  %v34 = vld [vmem:[%s0 + $0x4c] sm:$0xf]
  %v35 = vld [vmem:[%s0 + $0x50] sm:$0xf]
  %v36 = vld [vmem:[%s0 + $0x54] sm:$0xf]
  %v37 = vld [vmem:[%s0 + $0x58] sm:$0xf]
  %v38 = vld [vmem:[%s0 + $0x5c] sm:$0xf]
  %v39 = vld [vmem:[%s0 + $0x60] sm:$0xf]
  %v40 = vld [vmem:[%s0 + $0x64] sm:$0xf]
  %v41 = vld [vmem:[%s0 + $0x68] sm:$0xf]
  %v42 = vld [vmem:[%s0 + $0x6c] sm:$0xf]
  %v43 = vld [vmem:[%s0 + $0x70] sm:$0xf]
  %v44 = vld [vmem:[%s0 + $0x74] sm:$0xf]
  %v45 = vld [vmem:[%s0 + $0x78] sm:$0xf]
  %v46 = vld [vmem:[%s0 + $0x7c] sm:$0xf]
  %v47 = vld [vmem:[%s0 + $0x80] sm:$0xf]
  %v48 = vld [vmem:[%s0 + $0x84] sm:$0xf]
  %v49 = vld [vmem:[%s1] sm:$0xf]
  %v50 = vld [vmem:[%s1 + $0x4] sm:$0xf]
  %v51 = vld [vmem:[%s1 + $0x8] sm:$0xf]
  %v52 = vld [vmem:[%s1 + $0xc] sm:$0xf]
  %v53 = vld [vmem:[%s1 + $0x10] sm:$0xf]
  %v54 = vld [vmem:[%s1 + $0x14] sm:$0xf]
  %v55 = vld [vmem:[%s1 + $0x18] sm:$0xf]
  %v56 = vld [vmem:[%s1 + $0x1c] sm:$0xf]
  %v91 = vunpack.c.l.b16 %v15
  %v92 = vunpack.c.l.b16 %v16
  %v93 = vunpack.c.l.b16 %v17
  %v94 = vunpack.c.l.b16 %v18
  %v95 = vunpack.c.l.b16 %v19
  %v96 = vunpack.c.l.b16 %v20
  %v97 = vunpack.c.l.b16 %v21
  %v98 = vunpack.c.l.b16 %v22
  %v99 = vunpack.c.l.b16 %v23
  %v100 = vunpack.c.l.b16 %v24
  %v101 = vunpack.c.l.b16 %v25
  %v102 = vunpack.c.l.b16 %v26
  %v103 = vunpack.c.l.b16 %v27
  %v104 = vunpack.c.l.b16 %v28
  %v105 = vunpack.c.l.b16 %v29
  %v106 = vunpack.c.l.b16 %v30
  %v107 = vunpack.c.l.b16 %v31
  %v108 = vunpack.c.l.b16 %v32
  %v109 = vunpack.c.l.b16 %v33
  %v110 = vunpack.c.l.b16 %v34
  %v111 = vunpack.c.l.b16 %v35
  %v112 = vunpack.c.l.b16 %v36
  %v113 = vunpack.c.l.b16 %v37
  %v114 = vunpack.c.l.b16 %v38
  %v115 = vunpack.c.l.b16 %v39
  %v116 = vunpack.c.l.b16 %v40
  %v117 = vunpack.c.l.b16 %v41
  %v118 = vunpack.c.l.b16 %v42
  %v119 = vunpack.c.l.b16 %v43
  %v120 = vunpack.c.l.b16 %v44
  %v121 = vunpack.c.l.b16 %v45
  %v122 = vunpack.c.l.b16 %v46
  %v123 = vunpack.c.l.b16 %v47
  %v124 = vunpack.c.l.b16 %v48
  %v125 = vpack.c.b16 %v92, %v91
  %v126 = vpack.c.b16 %v94, %v93
  %v127 = vpack.c.b16 %v96, %v95
  %v128 = vpack.c.b16 %v98, %v97
  %v129 = vpack.c.b16 %v100, %v99
  %v130 = vpack.c.b16 %v102, %v101
  %v131 = vpack.c.b16 %v104, %v103
  %v132 = vpack.c.b16 %v106, %v105
  %v133 = vpack.c.b16 %v108, %v107
  %v134 = vpack.c.b16 %v110, %v109
  %v135 = vpack.c.b16 %v112, %v111
  %v136 = vpack.c.b16 %v114, %v113
  %v137 = vpack.c.b16 %v116, %v115
  %v138 = vpack.c.b16 %v118, %v117
  %v139 = vpack.c.b16 %v120, %v119
  %v140 = vpack.c.b16 %v122, %v121
  %v141 = vpack.c.b16 %v124, %v123
  %vm142 = vsmask.f32 7424
  %v144 = vshrl.u32 %v125, 16
  %v146 = vshll.u32 %v125, 16
  %v148 = vrot.slane %v146, 1
  %v149 = vor.u32 %v144, %v148
  %v151 = vshll.u32 %v126, 16
  %v153 = vrot.slane %v151, 1
  %v154 = vsel %vm142, %v149, %v153
  %v155 = vshrl.u32 %v126, 16
  %v157 = vor.u32 %v155, %v153
  %v159 = vshll.u32 %v127, 16
  %v161 = vrot.slane %v159, 1
  %v162 = vsel %vm142, %v157, %v161
  %v163 = vshrl.u32 %v127, 16
  %v165 = vor.u32 %v163, %v161
  %v167 = vshll.u32 %v128, 16
  %v169 = vrot.slane %v167, 1
  %v170 = vsel %vm142, %v165, %v169
  %v171 = vshrl.u32 %v128, 16
  %v173 = vor.u32 %v171, %v169
  %v175 = vshll.u32 %v129, 16
  %v177 = vrot.slane %v175, 1
  %v178 = vsel %vm142, %v173, %v177
  %v179 = vshrl.u32 %v129, 16
  %v181 = vor.u32 %v179, %v177
  %v183 = vshll.u32 %v130, 16
  %v185 = vrot.slane %v183, 1
  %v186 = vsel %vm142, %v181, %v185
  %v187 = vshrl.u32 %v130, 16
  %v189 = vor.u32 %v187, %v185
  %v191 = vshll.u32 %v131, 16
  %v193 = vrot.slane %v191, 1
  %v194 = vsel %vm142, %v189, %v193
  %v195 = vshrl.u32 %v131, 16
  %v197 = vor.u32 %v195, %v193
  %v199 = vshll.u32 %v132, 16
  %v201 = vrot.slane %v199, 1
  %v202 = vsel %vm142, %v197, %v201
  %v203 = vshrl.u32 %v132, 16
  %v205 = vor.u32 %v203, %v201
  %v207 = vshll.u32 %v133, 16
  %v209 = vrot.slane %v207, 1
  %v210 = vsel %vm142, %v205, %v209
  %v211 = vshrl.u32 %v133, 16
  %v213 = vor.u32 %v211, %v209
  %v215 = vshll.u32 %v134, 16
  %v217 = vrot.slane %v215, 1
  %v218 = vsel %vm142, %v213, %v217
  %v219 = vshrl.u32 %v134, 16
  %v221 = vor.u32 %v219, %v217
  %v223 = vshll.u32 %v135, 16
  %v225 = vrot.slane %v223, 1
  %v226 = vsel %vm142, %v221, %v225
  %v227 = vshrl.u32 %v135, 16
  %v229 = vor.u32 %v227, %v225
  %v231 = vshll.u32 %v136, 16
  %v233 = vrot.slane %v231, 1
  %v234 = vsel %vm142, %v229, %v233
  %v235 = vshrl.u32 %v136, 16
  %v237 = vor.u32 %v235, %v233
  %v239 = vshll.u32 %v137, 16
  %v241 = vrot.slane %v239, 1
  %v242 = vsel %vm142, %v237, %v241
  %v243 = vshrl.u32 %v137, 16
  %v245 = vor.u32 %v243, %v241
  %v247 = vshll.u32 %v138, 16
  %v249 = vrot.slane %v247, 1
  %v250 = vsel %vm142, %v245, %v249
  %v251 = vshrl.u32 %v138, 16
  %v253 = vor.u32 %v251, %v249
  %v255 = vshll.u32 %v139, 16
  %v257 = vrot.slane %v255, 1
  %v258 = vsel %vm142, %v253, %v257
  %v259 = vshrl.u32 %v139, 16
  %v261 = vor.u32 %v259, %v257
  %v263 = vshll.u32 %v140, 16
  %v265 = vrot.slane %v263, 1
  %v266 = vsel %vm142, %v261, %v265
  %v267 = vshrl.u32 %v140, 16
  %v269 = vor.u32 %v267, %v265
  %v271 = vshll.u32 %v141, 16
  %v273 = vrot.slane %v271, 1
  %v274 = vsel %vm142, %v269, %v273
  %v275 = vshrl.u32 %v141, 16
  %v277 = vor.u32 %v275, %v273
  %vm279 = vcmask 1047552
  %vm280 = vmand %vm279, %vm142
  %v281 = vsel %vm280, %v277, 0
  %s282 = scalar_lea.vmem %s1, 32
  %v283 = vld [vmem:[%s282] sm:$0xf]
  %v284 = vld [vmem:[%s282 + $0x4] sm:$0xf]
  %v285 = vld [vmem:[%s282 + $0x8] sm:$0xf]
  %v286 = vld [vmem:[%s282 + $0xc] sm:$0xf]
  %v287 = vld [vmem:[%s282 + $0x10] sm:$0xf]
  %v288 = vld [vmem:[%s282 + $0x14] sm:$0xf]
  %v289 = vld [vmem:[%s282 + $0x18] sm:$0xf]
  %v290 = vld [vmem:[%s282 + $0x1c] sm:$0xf]
  %v299 = vunpack.c.l.b16 %v283
  %v300 = vunpack.c.l.b16 %v284
  %v301 = vunpack.c.l.b16 %v285
  %v302 = vunpack.c.l.b16 %v286
  %v303 = vunpack.c.l.b16 %v287
  %v304 = vunpack.c.l.b16 %v288
  %v305 = vunpack.c.l.b16 %v289
  %v306 = vunpack.c.l.b16 %v290
  %v307 = vpack.c.b16 %v300, %v299
  %v308 = vpack.c.b16 %v302, %v301
  %v309 = vpack.c.b16 %v304, %v303
  %v310 = vpack.c.b16 %v306, %v305
  %vm315 = vcmask 523264
  %v317 = vsel %vm315, %v154, 0
  %v320 = vsel %vm315, %v162, 0
  %v323 = vsel %vm315, %v170, 0
  %v326 = vsel %vm315, %v178, 0
  %v329 = vsel %vm315, %v186, 0
  %v332 = vsel %vm315, %v194, 0
  %v335 = vsel %vm315, %v202, 0
  %v338 = vsel %vm315, %v210, 0
  %v341 = vsel %vm315, %v218, 0
  %v344 = vsel %vm315, %v226, 0
  %v347 = vsel %vm315, %v234, 0
  %v350 = vsel %vm315, %v242, 0
  %v353 = vsel %vm315, %v250, 0
  %v356 = vsel %vm315, %v258, 0
  %v359 = vsel %vm315, %v266, 0
  %v362 = vsel %vm315, %v274, 0
  %v365 = vsel %vm315, %v281, 0
  %367 = vmatprep.subr.bf16.mxu0 0
  %368 = vmatpush1.bf16.msra.mxu0 %v307
  %369 = vmatprep.subr.bf16.mxu0 0
  %370 = vmatpush1.bf16.msra.mxu0 %v308
  %371 = vmatprep.subr.bf16.mxu0 0
  %372 = vmatpush1.bf16.msra.mxu0 %v309
  %373 = vmatprep.subr.bf16.mxu0 0
  %374 = vmatpush1.bf16.msra.mxu0 %v310
  %375 = vmatprep.subr.bf16.mxu0 0
  %376 = vmatpush1.bf16.msra.mxu0 0
  %377 = vmatprep.subr.bf16.mxu0 0
  %378 = vmatpush1.bf16.msra.mxu0 0
  %379 = vmatprep.subr.bf16.mxu0 0
  %380 = vmatpush1.bf16.msra.mxu0 0
  %381 = vmatprep.subr.bf16.mxu0 0
  %382 = vmatpush1.bf16.msra.mxu0 0
  %383 = vmatprep.subr.bf16.mxu0 0
  %384 = vmatpush1.bf16.msra.mxu0 0
  %385 = vmatprep.subr.bf16.mxu0 0
  %386 = vmatpush1.bf16.msra.mxu0 0
  %387 = vmatprep.subr.bf16.mxu0 0
  %388 = vmatpush1.bf16.msra.mxu0 0
  %389 = vmatprep.subr.bf16.mxu0 0
  %390 = vmatpush1.bf16.msra.mxu0 0
  %391 = vmatprep.subr.bf16.mxu0 0
  %392 = vmatpush1.bf16.msra.mxu0 0
  %393 = vmatprep.subr.bf16.mxu0 0
  %394 = vmatpush1.bf16.msra.mxu0 0
  %395 = vmatprep.subr.bf16.mxu0 0
  %396 = vmatpush1.bf16.msra.mxu0 0
  %397 = vmatprep.subr.bf16.mxu0 0
  %398 = vmatpush1.bf16.msra.mxu0 0
  %399 = vmatprep.mubr.bf16.mxu0 0
  %400 = vmatmul.mubr.bf16.gmra.mrb[0].mxu0 %v317
  %v401 = vpop.f32.mrb[0].mxu0
  %v402 = vadd.f32 0.0, %v401
  %v403 = vpop.f32.mrb[0].mxu0
  %v404 = vpop.f32.mrb[0].mxu0
  %v405 = vadd.f32 0.0, %v404
  %v406 = vpop.f32.mrb[0].mxu0
  %407 = vmatprep.mubr.bf16.mxu0 0
  %408 = vmatmul.mubr.bf16.gmra.mrb[0].mxu0 %v320
  %v409 = vpop.f32.mrb[0].mxu0
  %v410 = vadd.f32 0.0, %v409
  %v411 = vpop.f32.mrb[0].mxu0
  %v412 = vpop.f32.mrb[0].mxu0
  %v413 = vadd.f32 0.0, %v412
  %v414 = vpop.f32.mrb[0].mxu0
  %415 = vmatprep.mubr.bf16.mxu0 0
  %416 = vmatmul.mubr.bf16.gmra.mrb[0].mxu0 %v323
  %v417 = vpop.f32.mrb[0].mxu0
  %v418 = vadd.f32 0.0, %v417
  %v419 = vpop.f32.mrb[0].mxu0
  %v420 = vpop.f32.mrb[0].mxu0
  %v421 = vadd.f32 0.0, %v420
  %v422 = vpop.f32.mrb[0].mxu0
  %423 = vmatprep.mubr.bf16.mxu0 0
  %424 = vmatmul.mubr.bf16.gmra.mrb[0].mxu0 %v326
  %v425 = vpop.f32.mrb[0].mxu0
  %v426 = vadd.f32 0.0, %v425
  %v427 = vpop.f32.mrb[0].mxu0
  %v428 = vpop.f32.mrb[0].mxu0
  %v429 = vadd.f32 0.0, %v428
  %v430 = vpop.f32.mrb[0].mxu0
  %431 = vmatprep.mubr.bf16.mxu0 0
  %432 = vmatmul.mubr.bf16.gmra.mrb[0].mxu0 %v329
  %v433 = vpop.f32.mrb[0].mxu0
  %v434 = vadd.f32 0.0, %v433
  %v435 = vpop.f32.mrb[0].mxu0
  %v436 = vpop.f32.mrb[0].mxu0
  %v437 = vadd.f32 0.0, %v436
  %v438 = vpop.f32.mrb[0].mxu0
  %439 = vmatprep.mubr.bf16.mxu0 0
  %440 = vmatmul.mubr.bf16.gmra.mrb[0].mxu0 %v332
  %v441 = vpop.f32.mrb[0].mxu0
  %v442 = vadd.f32 0.0, %v441
  %v443 = vpop.f32.mrb[0].mxu0
  %v444 = vpop.f32.mrb[0].mxu0
  %v445 = vadd.f32 0.0, %v444
  %v446 = vpop.f32.mrb[0].mxu0
  %447 = vmatprep.mubr.bf16.mxu0 0
  %448 = vmatmul.mubr.bf16.gmra.mrb[0].mxu0 %v335
  %v449 = vpop.f32.mrb[0].mxu0
  %v450 = vadd.f32 0.0, %v449
  %v451 = vpop.f32.mrb[0].mxu0
  %v452 = vpop.f32.mrb[0].mxu0
  %v453 = vadd.f32 0.0, %v452
  %v454 = vpop.f32.mrb[0].mxu0
  %455 = vmatprep.mubr.bf16.mxu0 0
  %456 = vmatmul.mubr.bf16.gmra.mrb[0].mxu0 %v338
  %v457 = vpop.f32.mrb[0].mxu0
  %v458 = vadd.f32 0.0, %v457
  %v459 = vpop.f32.mrb[0].mxu0
  %v460 = vpop.f32.mrb[0].mxu0
  %v461 = vadd.f32 0.0, %v460
  %v462 = vpop.f32.mrb[0].mxu0
  %463 = vmatprep.mubr.bf16.mxu0 0
  %464 = vmatmul.mubr.bf16.gmra.mrb[0].mxu0 %v341
  %v465 = vpop.f32.mrb[0].mxu0
  %v466 = vadd.f32 0.0, %v465
  %v467 = vpop.f32.mrb[0].mxu0
  %v468 = vpop.f32.mrb[0].mxu0
  %v469 = vadd.f32 0.0, %v468
  %v470 = vpop.f32.mrb[0].mxu0
  %471 = vmatprep.mubr.bf16.mxu0 0
  %472 = vmatmul.mubr.bf16.gmra.mrb[0].mxu0 %v344
  %v473 = vpop.f32.mrb[0].mxu0
  %v474 = vadd.f32 0.0, %v473
  %v475 = vpop.f32.mrb[0].mxu0
  %v476 = vpop.f32.mrb[0].mxu0
  %v477 = vadd.f32 0.0, %v476
  %v478 = vpop.f32.mrb[0].mxu0
  %479 = vmatprep.mubr.bf16.mxu0 0
  %480 = vmatmul.mubr.bf16.gmra.mrb[0].mxu0 %v347
  %v481 = vpop.f32.mrb[0].mxu0
  %v482 = vadd.f32 0.0, %v481
  %v483 = vpop.f32.mrb[0].mxu0
  %v484 = vpop.f32.mrb[0].mxu0
  %v485 = vadd.f32 0.0, %v484
  %v486 = vpop.f32.mrb[0].mxu0
  %487 = vmatprep.mubr.bf16.mxu0 0
  %488 = vmatmul.mubr.bf16.gmra.mrb[0].mxu0 %v350
  %v489 = vpop.f32.mrb[0].mxu0
  %v490 = vadd.f32 0.0, %v489
  %v491 = vpop.f32.mrb[0].mxu0
  %v492 = vpop.f32.mrb[0].mxu0
  %v493 = vadd.f32 0.0, %v492
  %v494 = vpop.f32.mrb[0].mxu0
  %495 = vmatprep.mubr.bf16.mxu0 0
  %496 = vmatmul.mubr.bf16.gmra.mrb[0].mxu0 %v353
  %v497 = vpop.f32.mrb[0].mxu0
  %v498 = vadd.f32 0.0, %v497
  %v499 = vpop.f32.mrb[0].mxu0
  %v500 = vpop.f32.mrb[0].mxu0
  %v501 = vadd.f32 0.0, %v500
  %v502 = vpop.f32.mrb[0].mxu0
  %503 = vmatprep.mubr.bf16.mxu0 0
  %504 = vmatmul.mubr.bf16.gmra.mrb[0].mxu0 %v356
  %v505 = vpop.f32.mrb[0].mxu0
  %v506 = vadd.f32 0.0, %v505
  %v507 = vpop.f32.mrb[0].mxu0
  %v508 = vpop.f32.mrb[0].mxu0
  %v509 = vadd.f32 0.0, %v508
  %v510 = vpop.f32.mrb[0].mxu0
  %511 = vmatprep.mubr.bf16.mxu0 0
  %512 = vmatmul.mubr.bf16.gmra.mrb[0].mxu0 %v359
  %v513 = vpop.f32.mrb[0].mxu0
  %v514 = vadd.f32 0.0, %v513
  %v515 = vpop.f32.mrb[0].mxu0
  %v516 = vpop.f32.mrb[0].mxu0
  %v517 = vadd.f32 0.0, %v516
  %v518 = vpop.f32.mrb[0].mxu0
  %519 = vmatprep.mubr.bf16.mxu0 0
  %520 = vmatmul.mubr.bf16.gmra.mrb[0].mxu0 %v362
  %v521 = vpop.f32.mrb[0].mxu0
  %v522 = vadd.f32 0.0, %v521
  %v523 = vpop.f32.mrb[0].mxu0
  %v524 = vpop.f32.mrb[0].mxu0
  %v525 = vadd.f32 0.0, %v524
  %v526 = vpop.f32.mrb[0].mxu0
  %527 = vmatprep.mubr.bf16.mxu0 0
  %528 = vmatmul.mubr.bf16.gmra.mrb[0].mxu0 %v365
  %v529 = vpop.f32.mrb[0].mxu0
  %v530 = vadd.f32 0.0, %v529
  %v531 = vpop.f32.mrb[0].mxu0
  %v532 = vpop.f32.mrb[0].mxu0
  %v533 = vadd.f32 0.0, %v532
  %v534 = vpop.f32.mrb[0].mxu0
  %535 = vdwg.mxu0
  %v544 = vunpack.c.l.b16 %v49
  %v545 = vunpack.c.l.b16 %v50
  %v546 = vunpack.c.l.b16 %v51
  %v547 = vunpack.c.l.b16 %v52
  %v548 = vunpack.c.l.b16 %v53
  %v549 = vunpack.c.l.b16 %v54
  %v550 = vunpack.c.l.b16 %v55
  %v551 = vunpack.c.l.b16 %v56
  %v552 = vpack.c.b16 %v545, %v544
  %v553 = vpack.c.b16 %v547, %v546
  %v554 = vpack.c.b16 %v549, %v548
  %v555 = vpack.c.b16 %v551, %v550
  %v560 = vsel %vm315, %v125, 0
  %v562 = vsel %vm315, %v126, 0
  %v564 = vsel %vm315, %v127, 0
  %v566 = vsel %vm315, %v128, 0
  %v568 = vsel %vm315, %v129, 0
  %v570 = vsel %vm315, %v130, 0
  %v572 = vsel %vm315, %v131, 0
  %v574 = vsel %vm315, %v132, 0
  %v576 = vsel %vm315, %v133, 0
  %v578 = vsel %vm315, %v134, 0
  %v580 = vsel %vm315, %v135, 0
  %v582 = vsel %vm315, %v136, 0
  %v584 = vsel %vm315, %v137, 0
  %v586 = vsel %vm315, %v138, 0
  %v588 = vsel %vm315, %v139, 0
  %v590 = vsel %vm315, %v140, 0
  %v592 = vsel %vm315, %v141, 0
  %594 = vmatprep.subr.bf16.mxu0 0
  %595 = vmatpush1.bf16.msra.mxu0 %v552
  %596 = vmatprep.subr.bf16.mxu0 0
  %597 = vmatpush1.bf16.msra.mxu0 %v553
  %598 = vmatprep.subr.bf16.mxu0 0
  %599 = vmatpush1.bf16.msra.mxu0 %v554
  %600 = vmatprep.subr.bf16.mxu0 0
  %601 = vmatpush1.bf16.msra.mxu0 %v555
  %602 = vmatprep.subr.bf16.mxu0 0
  %603 = vmatpush1.bf16.msra.mxu0 0
  %604 = vmatprep.subr.bf16.mxu0 0
  %605 = vmatpush1.bf16.msra.mxu0 0
  %606 = vmatprep.subr.bf16.mxu0 0
  %607 = vmatpush1.bf16.msra.mxu0 0
  %608 = vmatprep.subr.bf16.mxu0 0
  %609 = vmatpush1.bf16.msra.mxu0 0
  %610 = vmatprep.subr.bf16.mxu0 0
  %611 = vmatpush1.bf16.msra.mxu0 0
  %612 = vmatprep.subr.bf16.mxu0 0
  %613 = vmatpush1.bf16.msra.mxu0 0
  %614 = vmatprep.subr.bf16.mxu0 0
  %615 = vmatpush1.bf16.msra.mxu0 0
  %616 = vmatprep.subr.bf16.mxu0 0
  %617 = vmatpush1.bf16.msra.mxu0 0
  %618 = vmatprep.subr.bf16.mxu0 0
  %619 = vmatpush1.bf16.msra.mxu0 0
  %620 = vmatprep.subr.bf16.mxu0 0
  %621 = vmatpush1.bf16.msra.mxu0 0
  %622 = vmatprep.subr.bf16.mxu0 0
  %623 = vmatpush1.bf16.msra.mxu0 0
  %624 = vmatprep.subr.bf16.mxu0 0
  %625 = vmatpush1.bf16.msra.mxu0 0
  %626 = vmatprep.mubr.bf16.mxu0 0
  %627 = vmatmul.mubr.bf16.gmra.mrb[0].mxu0 %v560
  %v628 = vpop.f32.mrb[0].mxu0
  %v629 = vadd.f32 %v402, %v628
  %v630 = vpop.f32.mrb[0].mxu0
  %v631 = vpop.f32.mrb[0].mxu0
  %v632 = vadd.f32 %v405, %v631
  %v633 = vpop.f32.mrb[0].mxu0
  %634 = vmatprep.mubr.bf16.mxu0 0
  %635 = vmatmul.mubr.bf16.gmra.mrb[0].mxu0 %v562
  %v636 = vpop.f32.mrb[0].mxu0
  %v637 = vadd.f32 %v410, %v636
  %v638 = vpop.f32.mrb[0].mxu0
  %v639 = vpop.f32.mrb[0].mxu0
  %v640 = vadd.f32 %v413, %v639
  %v641 = vpop.f32.mrb[0].mxu0
  %642 = vmatprep.mubr.bf16.mxu0 0
  %643 = vmatmul.mubr.bf16.gmra.mrb[0].mxu0 %v564
  %v644 = vpop.f32.mrb[0].mxu0
  %v645 = vadd.f32 %v418, %v644
  %v646 = vpop.f32.mrb[0].mxu0
  %v647 = vpop.f32.mrb[0].mxu0
  %v648 = vadd.f32 %v421, %v647
  %v649 = vpop.f32.mrb[0].mxu0
  %650 = vmatprep.mubr.bf16.mxu0 0
  %651 = vmatmul.mubr.bf16.gmra.mrb[0].mxu0 %v566
  %v652 = vpop.f32.mrb[0].mxu0
  %v653 = vadd.f32 %v426, %v652
  %v654 = vpop.f32.mrb[0].mxu0
  %v655 = vpop.f32.mrb[0].mxu0
  %v656 = vadd.f32 %v429, %v655
  %v657 = vpop.f32.mrb[0].mxu0
  %658 = vmatprep.mubr.bf16.mxu0 0
  %659 = vmatmul.mubr.bf16.gmra.mrb[0].mxu0 %v568
  %v660 = vpop.f32.mrb[0].mxu0
  %v661 = vadd.f32 %v434, %v660
  %v662 = vpop.f32.mrb[0].mxu0
  %v663 = vpop.f32.mrb[0].mxu0
  %v664 = vadd.f32 %v437, %v663
  %v665 = vpop.f32.mrb[0].mxu0
  %666 = vmatprep.mubr.bf16.mxu0 0
  %667 = vmatmul.mubr.bf16.gmra.mrb[0].mxu0 %v570
  %v668 = vpop.f32.mrb[0].mxu0
  %v669 = vadd.f32 %v442, %v668
  %v670 = vpop.f32.mrb[0].mxu0
  %v671 = vpop.f32.mrb[0].mxu0
  %v672 = vadd.f32 %v445, %v671
  %v673 = vpop.f32.mrb[0].mxu0
  %674 = vmatprep.mubr.bf16.mxu0 0
  %675 = vmatmul.mubr.bf16.gmra.mrb[0].mxu0 %v572
  %v676 = vpop.f32.mrb[0].mxu0
  %v677 = vadd.f32 %v450, %v676
  %v678 = vpop.f32.mrb[0].mxu0
  %v679 = vpop.f32.mrb[0].mxu0
  %v680 = vadd.f32 %v453, %v679
  %v681 = vpop.f32.mrb[0].mxu0
  %682 = vmatprep.mubr.bf16.mxu0 0
  %683 = vmatmul.mubr.bf16.gmra.mrb[0].mxu0 %v574
  %v684 = vpop.f32.mrb[0].mxu0
  %v685 = vadd.f32 %v458, %v684
  %v686 = vpop.f32.mrb[0].mxu0
  %v687 = vpop.f32.mrb[0].mxu0
  %v688 = vadd.f32 %v461, %v687
  %v689 = vpop.f32.mrb[0].mxu0
  %690 = vmatprep.mubr.bf16.mxu0 0
  %691 = vmatmul.mubr.bf16.gmra.mrb[0].mxu0 %v576
  %v692 = vpop.f32.mrb[0].mxu0
  %v693 = vadd.f32 %v466, %v692
  %v694 = vpop.f32.mrb[0].mxu0
  %v695 = vpop.f32.mrb[0].mxu0
  %v696 = vadd.f32 %v469, %v695
  %v697 = vpop.f32.mrb[0].mxu0
  %698 = vmatprep.mubr.bf16.mxu0 0
  %699 = vmatmul.mubr.bf16.gmra.mrb[0].mxu0 %v578
  %v700 = vpop.f32.mrb[0].mxu0
  %v701 = vadd.f32 %v474, %v700
  %v702 = vpop.f32.mrb[0].mxu0
  %v703 = vpop.f32.mrb[0].mxu0
  %v704 = vadd.f32 %v477, %v703
  %v705 = vpop.f32.mrb[0].mxu0
  %706 = vmatprep.mubr.bf16.mxu0 0
  %707 = vmatmul.mubr.bf16.gmra.mrb[0].mxu0 %v580
  %v708 = vpop.f32.mrb[0].mxu0
  %v709 = vadd.f32 %v482, %v708
  %v710 = vpop.f32.mrb[0].mxu0
  %v711 = vpop.f32.mrb[0].mxu0
  %v712 = vadd.f32 %v485, %v711
  %v713 = vpop.f32.mrb[0].mxu0
  %714 = vmatprep.mubr.bf16.mxu0 0
  %715 = vmatmul.mubr.bf16.gmra.mrb[0].mxu0 %v582
  %v716 = vpop.f32.mrb[0].mxu0
  %v717 = vadd.f32 %v490, %v716
  %v718 = vpop.f32.mrb[0].mxu0
  %v719 = vpop.f32.mrb[0].mxu0
  %v720 = vadd.f32 %v493, %v719
  %v721 = vpop.f32.mrb[0].mxu0
  %722 = vmatprep.mubr.bf16.mxu0 0
  %723 = vmatmul.mubr.bf16.gmra.mrb[0].mxu0 %v584
  %v724 = vpop.f32.mrb[0].mxu0
  %v725 = vadd.f32 %v498, %v724
  %v726 = vpop.f32.mrb[0].mxu0
  %v727 = vpop.f32.mrb[0].mxu0
  %v728 = vadd.f32 %v501, %v727
  %v729 = vpop.f32.mrb[0].mxu0
  %730 = vmatprep.mubr.bf16.mxu0 0
  %731 = vmatmul.mubr.bf16.gmra.mrb[0].mxu0 %v586
  %v732 = vpop.f32.mrb[0].mxu0
  %v733 = vadd.f32 %v506, %v732
  %v734 = vpop.f32.mrb[0].mxu0
  %v735 = vpop.f32.mrb[0].mxu0
  %v736 = vadd.f32 %v509, %v735
  %v737 = vpop.f32.mrb[0].mxu0
  %738 = vmatprep.mubr.bf16.mxu0 0
  %739 = vmatmul.mubr.bf16.gmra.mrb[0].mxu0 %v588
  %v740 = vpop.f32.mrb[0].mxu0
  %v741 = vadd.f32 %v514, %v740
  %v742 = vpop.f32.mrb[0].mxu0
  %v743 = vpop.f32.mrb[0].mxu0
  %v744 = vadd.f32 %v517, %v743
  %v745 = vpop.f32.mrb[0].mxu0
  %746 = vmatprep.mubr.bf16.mxu0 0
  %747 = vmatmul.mubr.bf16.gmra.mrb[0].mxu0 %v590
  %v748 = vpop.f32.mrb[0].mxu0
  %v749 = vadd.f32 %v522, %v748
  %v750 = vpop.f32.mrb[0].mxu0
  %v751 = vpop.f32.mrb[0].mxu0
  %v752 = vadd.f32 %v525, %v751
  %v753 = vpop.f32.mrb[0].mxu0
  %754 = vmatprep.mubr.bf16.mxu0 0
  %755 = vmatmul.mubr.bf16.gmra.mrb[0].mxu0 %v592
  %v756 = vpop.f32.mrb[0].mxu0
  %v757 = vadd.f32 %v530, %v756
  %v758 = vpop.f32.mrb[0].mxu0
  %v759 = vpop.f32.mrb[0].mxu0
  %v760 = vadd.f32 %v533, %v759
  %v761 = vpop.f32.mrb[0].mxu0
  %762 = vdwg.mxu0
  %v763 = vpack.c.b16 %v93, %v92
  %v764 = vpack.c.b16 %v95, %v94
  %v765 = vpack.c.b16 %v97, %v96
  %v766 = vpack.c.b16 %v99, %v98
  %v767 = vpack.c.b16 %v101, %v100
  %v768 = vpack.c.b16 %v103, %v102
  %v769 = vpack.c.b16 %v105, %v104
  %v770 = vpack.c.b16 %v107, %v106
  %v771 = vpack.c.b16 %v109, %v108
  %v772 = vpack.c.b16 %v111, %v110
  %v773 = vpack.c.b16 %v113, %v112
  %v774 = vpack.c.b16 %v115, %v114
  %v775 = vpack.c.b16 %v117, %v116
  %v776 = vpack.c.b16 %v119, %v118
  %v777 = vpack.c.b16 %v121, %v120
  %v778 = vpack.c.b16 %v123, %v122
  %v779 = vpack.c.b16 %v124, %v124
  %vm780 = vsmask.f32 6400
  %v782 = vshrl.u32 %v763, 16
  %v784 = vrot.slane %v782, 1
  %v785 = vshll.u32 %v763, 16
  %v787 = vrot.slane %v785, 2
  %v788 = vor.u32 %v784, %v787
  %v790 = vshrl.u32 %v764, 16
  %v792 = vrot.slane %v790, 1
  %v793 = vshll.u32 %v764, 16
  %v795 = vrot.slane %v793, 2
  %v796 = vor.u32 %v792, %v795
  %v797 = vsel %vm780, %v788, %v796
  %v799 = vshrl.u32 %v765, 16
  %v801 = vrot.slane %v799, 1
  %v802 = vshll.u32 %v765, 16
  %v804 = vrot.slane %v802, 2
  %v805 = vor.u32 %v801, %v804
  %v806 = vsel %vm780, %v796, %v805
  %v808 = vshrl.u32 %v766, 16
  %v810 = vrot.slane %v808, 1
  %v811 = vshll.u32 %v766, 16
  %v813 = vrot.slane %v811, 2
  %v814 = vor.u32 %v810, %v813
  %v815 = vsel %vm780, %v805, %v814
  %v817 = vshrl.u32 %v767, 16
  %v819 = vrot.slane %v817, 1
  %v820 = vshll.u32 %v767, 16
  %v822 = vrot.slane %v820, 2
  %v823 = vor.u32 %v819, %v822
  %v824 = vsel %vm780, %v814, %v823
  %v826 = vshrl.u32 %v768, 16
  %v828 = vrot.slane %v826, 1
  %v829 = vshll.u32 %v768, 16
  %v831 = vrot.slane %v829, 2
  %v832 = vor.u32 %v828, %v831
  %v833 = vsel %vm780, %v823, %v832
  %v835 = vshrl.u32 %v769, 16
  %v837 = vrot.slane %v835, 1
  %v838 = vshll.u32 %v769, 16
  %v840 = vrot.slane %v838, 2
  %v841 = vor.u32 %v837, %v840
  %v842 = vsel %vm780, %v832, %v841
  %v844 = vshrl.u32 %v770, 16
  %v846 = vrot.slane %v844, 1
  %v847 = vshll.u32 %v770, 16
  %v849 = vrot.slane %v847, 2
  %v850 = vor.u32 %v846, %v849
  %v851 = vsel %vm780, %v841, %v850
  %v853 = vshrl.u32 %v771, 16
  %v855 = vrot.slane %v853, 1
  %v856 = vshll.u32 %v771, 16
  %v858 = vrot.slane %v856, 2
  %v859 = vor.u32 %v855, %v858
  %v860 = vsel %vm780, %v850, %v859
  %v862 = vshrl.u32 %v772, 16
  %v864 = vrot.slane %v862, 1
  %v865 = vshll.u32 %v772, 16
  %v867 = vrot.slane %v865, 2
  %v868 = vor.u32 %v864, %v867
  %v869 = vsel %vm780, %v859, %v868
  %v871 = vshrl.u32 %v773, 16
  %v873 = vrot.slane %v871, 1
  %v874 = vshll.u32 %v773, 16
  %v876 = vrot.slane %v874, 2
  %v877 = vor.u32 %v873, %v876
  %v878 = vsel %vm780, %v868, %v877
  %v880 = vshrl.u32 %v774, 16
  %v882 = vrot.slane %v880, 1
  %v883 = vshll.u32 %v774, 16
  %v885 = vrot.slane %v883, 2
  %v886 = vor.u32 %v882, %v885
  %v887 = vsel %vm780, %v877, %v886
  %v889 = vshrl.u32 %v775, 16
  %v891 = vrot.slane %v889, 1
  %v892 = vshll.u32 %v775, 16
  %v894 = vrot.slane %v892, 2
  %v895 = vor.u32 %v891, %v894
  %v896 = vsel %vm780, %v886, %v895
  %v898 = vshrl.u32 %v776, 16
  %v900 = vrot.slane %v898, 1
  %v901 = vshll.u32 %v776, 16
  %v903 = vrot.slane %v901, 2
  %v904 = vor.u32 %v900, %v903
  %v905 = vsel %vm780, %v895, %v904
  %v907 = vshrl.u32 %v777, 16
  %v909 = vrot.slane %v907, 1
  %v910 = vshll.u32 %v777, 16
  %v912 = vrot.slane %v910, 2
  %v913 = vor.u32 %v909, %v912
  %v914 = vsel %vm780, %v904, %v913
  %v916 = vshrl.u32 %v778, 16
  %v918 = vrot.slane %v916, 1
  %v919 = vshll.u32 %v778, 16
  %v921 = vrot.slane %v919, 2
  %v922 = vor.u32 %v918, %v921
  %v923 = vsel %vm780, %v913, %v922
  %v925 = vshrl.u32 %v779, 16
  %v927 = vrot.slane %v925, 1
  %v928 = vshll.u32 %v779, 16
  %v930 = vrot.slane %v928, 2
  %v931 = vor.u32 %v927, %v930
  %v932 = vsel %vm780, %v922, %v931
  %vm934 = vcmask 1042432
  %vm935 = vsmask.f32 2304
  %vm936 = vmand %vm934, %vm935
  %v937 = vsel %vm936, %v931, 0
  %s938 = scalar_lea.vmem %s1, 64
  %v939 = vld [vmem:[%s938] sm:$0xf]
  %v940 = vld [vmem:[%s938 + $0x4] sm:$0xf]
  %v941 = vld [vmem:[%s938 + $0x8] sm:$0xf]
  %v942 = vld [vmem:[%s938 + $0xc] sm:$0xf]
  %v943 = vld [vmem:[%s938 + $0x10] sm:$0xf]
  %v944 = vld [vmem:[%s938 + $0x14] sm:$0xf]
  %v945 = vld [vmem:[%s938 + $0x18] sm:$0xf]
  %v946 = vld [vmem:[%s938 + $0x1c] sm:$0xf]
  %v955 = vunpack.c.l.b16 %v939
  %v956 = vunpack.c.l.b16 %v940
  %v957 = vunpack.c.l.b16 %v941
  %v958 = vunpack.c.l.b16 %v942
  %v959 = vunpack.c.l.b16 %v943
  %v960 = vunpack.c.l.b16 %v944
  %v961 = vunpack.c.l.b16 %v945
  %v962 = vunpack.c.l.b16 %v946
  %v963 = vpack.c.b16 %v956, %v955
  %v964 = vpack.c.b16 %v958, %v957
  %v965 = vpack.c.b16 %v960, %v959
  %v966 = vpack.c.b16 %v962, %v961
  %v972 = vsel %vm315, %v797, 0
  %v975 = vsel %vm315, %v806, 0
  %v978 = vsel %vm315, %v815, 0
  %v981 = vsel %vm315, %v824, 0
  %v984 = vsel %vm315, %v833, 0
  %v987 = vsel %vm315, %v842, 0
  %v990 = vsel %vm315, %v851, 0
  %v993 = vsel %vm315, %v860, 0
  %v996 = vsel %vm315, %v869, 0
  %v999 = vsel %vm315, %v878, 0
  %v1002 = vsel %vm315, %v887, 0
  %v1005 = vsel %vm315, %v896, 0
  %v1008 = vsel %vm315, %v905, 0
  %v1011 = vsel %vm315, %v914, 0
  %v1014 = vsel %vm315, %v923, 0
  %v1017 = vsel %vm315, %v932, 0
  %v1020 = vsel %vm315, %v937, 0
  %1022 = vmatprep.subr.bf16.mxu0 0
  %1023 = vmatpush1.bf16.msra.mxu0 %v963
  %1024 = vmatprep.subr.bf16.mxu0 0
  %1025 = vmatpush1.bf16.msra.mxu0 %v964
  %1026 = vmatprep.subr.bf16.mxu0 0
  %1027 = vmatpush1.bf16.msra.mxu0 %v965
  %1028 = vmatprep.subr.bf16.mxu0 0
  %1029 = vmatpush1.bf16.msra.mxu0 %v966
  %1030 = vmatprep.subr.bf16.mxu0 0
  %1031 = vmatpush1.bf16.msra.mxu0 0
  %1032 = vmatprep.subr.bf16.mxu0 0
  %1033 = vmatpush1.bf16.msra.mxu0 0
  %1034 = vmatprep.subr.bf16.mxu0 0
  %1035 = vmatpush1.bf16.msra.mxu0 0
  %1036 = vmatprep.subr.bf16.mxu0 0
  %1037 = vmatpush1.bf16.msra.mxu0 0
  %1038 = vmatprep.subr.bf16.mxu0 0
  %1039 = vmatpush1.bf16.msra.mxu0 0
  %1040 = vmatprep.subr.bf16.mxu0 0
  %1041 = vmatpush1.bf16.msra.mxu0 0
  %1042 = vmatprep.subr.bf16.mxu0 0
  %1043 = vmatpush1.bf16.msra.mxu0 0
  %1044 = vmatprep.subr.bf16.mxu0 0
  %1045 = vmatpush1.bf16.msra.mxu0 0
  %1046 = vmatprep.subr.bf16.mxu0 0
  %1047 = vmatpush1.bf16.msra.mxu0 0
  %1048 = vmatprep.subr.bf16.mxu0 0
  %1049 = vmatpush1.bf16.msra.mxu0 0
  %1050 = vmatprep.subr.bf16.mxu0 0
  %1051 = vmatpush1.bf16.msra.mxu0 0
  %1052 = vmatprep.subr.bf16.mxu0 0
  %1053 = vmatpush1.bf16.msra.mxu0 0
  %1054 = vmatprep.mubr.bf16.mxu0 0
  %1055 = vmatmul.mubr.bf16.gmra.mrb[0].mxu0 %v972
  %v1056 = vpop.f32.mrb[0].mxu0
  %v1057 = vadd.f32 0.0, %v1056
  %v1058 = vpop.f32.mrb[0].mxu0
  %v1059 = vpop.f32.mrb[0].mxu0
  %v1060 = vadd.f32 0.0, %v1059
  %v1061 = vpop.f32.mrb[0].mxu0
  %1062 = vmatprep.mubr.bf16.mxu0 0
  %1063 = vmatmul.mubr.bf16.gmra.mrb[0].mxu0 %v975
  %v1064 = vpop.f32.mrb[0].mxu0
  %v1065 = vadd.f32 0.0, %v1064
  %v1066 = vpop.f32.mrb[0].mxu0
  %v1067 = vpop.f32.mrb[0].mxu0
  %v1068 = vadd.f32 0.0, %v1067
  %v1069 = vpop.f32.mrb[0].mxu0
  %1070 = vmatprep.mubr.bf16.mxu0 0
  %1071 = vmatmul.mubr.bf16.gmra.mrb[0].mxu0 %v978
  %v1072 = vpop.f32.mrb[0].mxu0
  %v1073 = vadd.f32 0.0, %v1072
  %v1074 = vpop.f32.mrb[0].mxu0
  %v1075 = vpop.f32.mrb[0].mxu0
  %v1076 = vadd.f32 0.0, %v1075
  %v1077 = vpop.f32.mrb[0].mxu0
  %1078 = vmatprep.mubr.bf16.mxu0 0
  %1079 = vmatmul.mubr.bf16.gmra.mrb[0].mxu0 %v981
  %v1080 = vpop.f32.mrb[0].mxu0
  %v1081 = vadd.f32 0.0, %v1080
  %v1082 = vpop.f32.mrb[0].mxu0
  %v1083 = vpop.f32.mrb[0].mxu0
  %v1084 = vadd.f32 0.0, %v1083
  %v1085 = vpop.f32.mrb[0].mxu0
  %1086 = vmatprep.mubr.bf16.mxu0 0
  %1087 = vmatmul.mubr.bf16.gmra.mrb[0].mxu0 %v984
  %v1088 = vpop.f32.mrb[0].mxu0
  %v1089 = vadd.f32 0.0, %v1088
  %v1090 = vpop.f32.mrb[0].mxu0
  %v1091 = vpop.f32.mrb[0].mxu0
  %v1092 = vadd.f32 0.0, %v1091
  %v1093 = vpop.f32.mrb[0].mxu0
  %1094 = vmatprep.mubr.bf16.mxu0 0
  %1095 = vmatmul.mubr.bf16.gmra.mrb[0].mxu0 %v987
  %v1096 = vpop.f32.mrb[0].mxu0
  %v1097 = vadd.f32 0.0, %v1096
  %v1098 = vpop.f32.mrb[0].mxu0
  %v1099 = vpop.f32.mrb[0].mxu0
  %v1100 = vadd.f32 0.0, %v1099
  %v1101 = vpop.f32.mrb[0].mxu0
  %1102 = vmatprep.mubr.bf16.mxu0 0
  %1103 = vmatmul.mubr.bf16.gmra.mrb[0].mxu0 %v990
  %v1104 = vpop.f32.mrb[0].mxu0
  %v1105 = vadd.f32 0.0, %v1104
  %v1106 = vpop.f32.mrb[0].mxu0
  %v1107 = vpop.f32.mrb[0].mxu0
  %v1108 = vadd.f32 0.0, %v1107
  %v1109 = vpop.f32.mrb[0].mxu0
  %1110 = vmatprep.mubr.bf16.mxu0 0
  %1111 = vmatmul.mubr.bf16.gmra.mrb[0].mxu0 %v993
  %v1112 = vpop.f32.mrb[0].mxu0
  %v1113 = vadd.f32 0.0, %v1112
  %v1114 = vpop.f32.mrb[0].mxu0
  %v1115 = vpop.f32.mrb[0].mxu0
  %v1116 = vadd.f32 0.0, %v1115
  %v1117 = vpop.f32.mrb[0].mxu0
  %1118 = vmatprep.mubr.bf16.mxu0 0
  %1119 = vmatmul.mubr.bf16.gmra.mrb[0].mxu0 %v996
  %v1120 = vpop.f32.mrb[0].mxu0
  %v1121 = vadd.f32 0.0, %v1120
  %v1122 = vpop.f32.mrb[0].mxu0
  %v1123 = vpop.f32.mrb[0].mxu0
  %v1124 = vadd.f32 0.0, %v1123
  %v1125 = vpop.f32.mrb[0].mxu0
  %1126 = vmatprep.mubr.bf16.mxu0 0
  %1127 = vmatmul.mubr.bf16.gmra.mrb[0].mxu0 %v999
  %v1128 = vpop.f32.mrb[0].mxu0
  %v1129 = vadd.f32 0.0, %v1128
  %v1130 = vpop.f32.mrb[0].mxu0
  %v1131 = vpop.f32.mrb[0].mxu0
  %v1132 = vadd.f32 0.0, %v1131
  %v1133 = vpop.f32.mrb[0].mxu0
  %1134 = vmatprep.mubr.bf16.mxu0 0
  %1135 = vmatmul.mubr.bf16.gmra.mrb[0].mxu0 %v1002
  %v1136 = vpop.f32.mrb[0].mxu0
  %v1137 = vadd.f32 0.0, %v1136
  %v1138 = vpop.f32.mrb[0].mxu0
  %v1139 = vpop.f32.mrb[0].mxu0
  %v1140 = vadd.f32 0.0, %v1139
  %v1141 = vpop.f32.mrb[0].mxu0
  %1142 = vmatprep.mubr.bf16.mxu0 0
  %1143 = vmatmul.mubr.bf16.gmra.mrb[0].mxu0 %v1005
  %v1144 = vpop.f32.mrb[0].mxu0
  %v1145 = vadd.f32 0.0, %v1144
  %v1146 = vpop.f32.mrb[0].mxu0
  %v1147 = vpop.f32.mrb[0].mxu0
  %v1148 = vadd.f32 0.0, %v1147
  %v1149 = vpop.f32.mrb[0].mxu0
  %1150 = vmatprep.mubr.bf16.mxu0 0
  %1151 = vmatmul.mubr.bf16.gmra.mrb[0].mxu0 %v1008
  %v1152 = vpop.f32.mrb[0].mxu0
  %v1153 = vadd.f32 0.0, %v1152
  %v1154 = vpop.f32.mrb[0].mxu0
  %v1155 = vpop.f32.mrb[0].mxu0
  %v1156 = vadd.f32 0.0, %v1155
  %v1157 = vpop.f32.mrb[0].mxu0
  %1158 = vmatprep.mubr.bf16.mxu0 0
  %1159 = vmatmul.mubr.bf16.gmra.mrb[0].mxu0 %v1011
  %v1160 = vpop.f32.mrb[0].mxu0
  %v1161 = vadd.f32 0.0, %v1160
  %v1162 = vpop.f32.mrb[0].mxu0
  %v1163 = vpop.f32.mrb[0].mxu0
  %v1164 = vadd.f32 0.0, %v1163
  %v1165 = vpop.f32.mrb[0].mxu0
  %1166 = vmatprep.mubr.bf16.mxu0 0
  %1167 = vmatmul.mubr.bf16.gmra.mrb[0].mxu0 %v1014
  %v1168 = vpop.f32.mrb[0].mxu0
  %v1169 = vadd.f32 0.0, %v1168
  %v1170 = vpop.f32.mrb[0].mxu0
  %v1171 = vpop.f32.mrb[0].mxu0
  %v1172 = vadd.f32 0.0, %v1171
  %v1173 = vpop.f32.mrb[0].mxu0
  %1174 = vmatprep.mubr.bf16.mxu0 0
  %1175 = vmatmul.mubr.bf16.gmra.mrb[0].mxu0 %v1017
  %v1176 = vpop.f32.mrb[0].mxu0
  %v1177 = vadd.f32 0.0, %v1176
  %v1178 = vpop.f32.mrb[0].mxu0
  %v1179 = vpop.f32.mrb[0].mxu0
  %v1180 = vadd.f32 0.0, %v1179
  %v1181 = vpop.f32.mrb[0].mxu0
  %1182 = vmatprep.mubr.bf16.mxu0 0
  %1183 = vmatmul.mubr.bf16.gmra.mrb[0].mxu0 %v1020
  %v1184 = vpop.f32.mrb[0].mxu0
  %v1185 = vadd.f32 0.0, %v1184
  %v1186 = vpop.f32.mrb[0].mxu0
  %v1187 = vpop.f32.mrb[0].mxu0
  %v1188 = vadd.f32 0.0, %v1187
  %v1189 = vpop.f32.mrb[0].mxu0
  %1190 = vdwg.mxu0
  %v1191 = vadd.f32 %v629, %v1057
  %v1192 = vadd.f32 %v632, %v1060
  %v1193 = vadd.f32 %v637, %v1065
  %v1194 = vadd.f32 %v640, %v1068
  %v1195 = vadd.f32 %v645, %v1073
  %v1196 = vadd.f32 %v648, %v1076
  %v1197 = vadd.f32 %v653, %v1081
  %v1198 = vadd.f32 %v656, %v1084
  %v1199 = vadd.f32 %v661, %v1089
  %v1200 = vadd.f32 %v664, %v1092
  %v1201 = vadd.f32 %v669, %v1097
  %v1202 = vadd.f32 %v672, %v1100
  %v1203 = vadd.f32 %v677, %v1105
  %v1204 = vadd.f32 %v680, %v1108
  %v1205 = vadd.f32 %v685, %v1113
  %v1206 = vadd.f32 %v688, %v1116
  %v1207 = vadd.f32 %v693, %v1121
  %v1208 = vadd.f32 %v696, %v1124
  %v1209 = vadd.f32 %v701, %v1129
  %v1210 = vadd.f32 %v704, %v1132
  %v1211 = vadd.f32 %v709, %v1137
  %v1212 = vadd.f32 %v712, %v1140
  %v1213 = vadd.f32 %v717, %v1145
  %v1214 = vadd.f32 %v720, %v1148
  %v1215 = vadd.f32 %v725, %v1153
  %v1216 = vadd.f32 %v728, %v1156
  %v1217 = vadd.f32 %v733, %v1161
  %v1218 = vadd.f32 %v736, %v1164
  %v1219 = vadd.f32 %v741, %v1169
  %v1220 = vadd.f32 %v744, %v1172
  %v1221 = vadd.f32 %v749, %v1177
  %v1222 = vadd.f32 %v752, %v1180
  %v1223 = vadd.f32 %v757, %v1185
  %v1224 = vadd.f32 %v760, %v1188
  %vm1225 = vcmask 1045504
  %v1226 = vrot.slane %v763, 2
  %v1227 = vrot.slane %v764, 2
  %v1228 = vsel %vm1225, %v1226, %v1227
  %v1229 = vrot.slane %v765, 2
  %v1230 = vsel %vm1225, %v1227, %v1229
  %v1231 = vrot.slane %v766, 2
  %v1232 = vsel %vm1225, %v1229, %v1231
  %v1233 = vrot.slane %v767, 2
  %v1234 = vsel %vm1225, %v1231, %v1233
  %v1235 = vrot.slane %v768, 2
  %v1236 = vsel %vm1225, %v1233, %v1235
  %v1237 = vrot.slane %v769, 2
  %v1238 = vsel %vm1225, %v1235, %v1237
  %v1239 = vrot.slane %v770, 2
  %v1240 = vsel %vm1225, %v1237, %v1239
  %v1241 = vrot.slane %v771, 2
  %v1242 = vsel %vm1225, %v1239, %v1241
  %v1243 = vrot.slane %v772, 2
  %v1244 = vsel %vm1225, %v1241, %v1243
  %v1245 = vrot.slane %v773, 2
  %v1246 = vsel %vm1225, %v1243, %v1245
  %v1247 = vrot.slane %v774, 2
  %v1248 = vsel %vm1225, %v1245, %v1247
  %v1249 = vrot.slane %v775, 2
  %v1250 = vsel %vm1225, %v1247, %v1249
  %v1251 = vrot.slane %v776, 2
  %v1252 = vsel %vm1225, %v1249, %v1251
  %v1253 = vrot.slane %v777, 2
  %v1254 = vsel %vm1225, %v1251, %v1253
  %v1255 = vrot.slane %v778, 2
  %v1256 = vsel %vm1225, %v1253, %v1255
  %v1257 = vrot.slane %v779, 2
  %v1258 = vsel %vm1225, %v1255, %v1257
  %vm1259 = vcmask 1041408
  %v1262 = vsel %vm1259, %v1257, 0
  %s1263 = scalar_lea.vmem %s1, 96
  %v1264 = vld [vmem:[%s1263] sm:$0xf]
  %v1265 = vld [vmem:[%s1263 + $0x4] sm:$0xf]
  %v1266 = vld [vmem:[%s1263 + $0x8] sm:$0xf]
  %v1267 = vld [vmem:[%s1263 + $0xc] sm:$0xf]
  %v1268 = vld [vmem:[%s1263 + $0x10] sm:$0xf]
  %v1269 = vld [vmem:[%s1263 + $0x14] sm:$0xf]
  %v1270 = vld [vmem:[%s1263 + $0x18] sm:$0xf]
  %v1271 = vld [vmem:[%s1263 + $0x1c] sm:$0xf]
  %v1280 = vunpack.c.l.b16 %v1264
  %v1281 = vunpack.c.l.b16 %v1265
  %v1282 = vunpack.c.l.b16 %v1266
  %v1283 = vunpack.c.l.b16 %v1267
  %v1284 = vunpack.c.l.b16 %v1268
  %v1285 = vunpack.c.l.b16 %v1269
  %v1286 = vunpack.c.l.b16 %v1270
  %v1287 = vunpack.c.l.b16 %v1271
  %v1288 = vpack.c.b16 %v1281, %v1280
  %v1289 = vpack.c.b16 %v1283, %v1282
  %v1290 = vpack.c.b16 %v1285, %v1284
  %v1291 = vpack.c.b16 %v1287, %v1286
  %v1297 = vsel %vm315, %v1228, 0
  %v1300 = vsel %vm315, %v1230, 0
  %v1303 = vsel %vm315, %v1232, 0
  %v1306 = vsel %vm315, %v1234, 0
  %v1309 = vsel %vm315, %v1236, 0
  %v1312 = vsel %vm315, %v1238, 0
  %v1315 = vsel %vm315, %v1240, 0
  %v1318 = vsel %vm315, %v1242, 0
  %v1321 = vsel %vm315, %v1244, 0
  %v1324 = vsel %vm315, %v1246, 0
  %v1327 = vsel %vm315, %v1248, 0
  %v1330 = vsel %vm315, %v1250, 0
  %v1333 = vsel %vm315, %v1252, 0
  %v1336 = vsel %vm315, %v1254, 0
  %v1339 = vsel %vm315, %v1256, 0
  %v1342 = vsel %vm315, %v1258, 0
  %v1344 = vsel %vm315, %v1262, 0
  %1346 = vmatprep.subr.bf16.mxu0 0
  %1347 = vmatpush1.bf16.msra.mxu0 %v1288
  %1348 = vmatprep.subr.bf16.mxu0 0
  %1349 = vmatpush1.bf16.msra.mxu0 %v1289
  %1350 = vmatprep.subr.bf16.mxu0 0
  %1351 = vmatpush1.bf16.msra.mxu0 %v1290
  %1352 = vmatprep.subr.bf16.mxu0 0
  %1353 = vmatpush1.bf16.msra.mxu0 %v1291
  %1354 = vmatprep.subr.bf16.mxu0 0
  %1355 = vmatpush1.bf16.msra.mxu0 0
  %1356 = vmatprep.subr.bf16.mxu0 0
  %1357 = vmatpush1.bf16.msra.mxu0 0
  %1358 = vmatprep.subr.bf16.mxu0 0
  %1359 = vmatpush1.bf16.msra.mxu0 0
  %1360 = vmatprep.subr.bf16.mxu0 0
  %1361 = vmatpush1.bf16.msra.mxu0 0
  %1362 = vmatprep.subr.bf16.mxu0 0
  %1363 = vmatpush1.bf16.msra.mxu0 0
  %1364 = vmatprep.subr.bf16.mxu0 0
  %1365 = vmatpush1.bf16.msra.mxu0 0
  %1366 = vmatprep.subr.bf16.mxu0 0
  %1367 = vmatpush1.bf16.msra.mxu0 0
  %1368 = vmatprep.subr.bf16.mxu0 0
  %1369 = vmatpush1.bf16.msra.mxu0 0
  %1370 = vmatprep.subr.bf16.mxu0 0
  %1371 = vmatpush1.bf16.msra.mxu0 0
  %1372 = vmatprep.subr.bf16.mxu0 0
  %1373 = vmatpush1.bf16.msra.mxu0 0
  %1374 = vmatprep.subr.bf16.mxu0 0
  %1375 = vmatpush1.bf16.msra.mxu0 0
  %1376 = vmatprep.subr.bf16.mxu0 0
  %1377 = vmatpush1.bf16.msra.mxu0 0
  %1378 = vmatprep.mubr.bf16.mxu0 0
  %1379 = vmatmul.mubr.bf16.gmra.mrb[0].mxu0 %v1297
  %v1380 = vpop.f32.mrb[0].mxu0
  %v1381 = vadd.f32 0.0, %v1380
  %v1382 = vpop.f32.mrb[0].mxu0
  %v1383 = vpop.f32.mrb[0].mxu0
  %v1384 = vadd.f32 0.0, %v1383
  %v1385 = vpop.f32.mrb[0].mxu0
  %1386 = vmatprep.mubr.bf16.mxu0 0
  %1387 = vmatmul.mubr.bf16.gmra.mrb[0].mxu0 %v1300
  %v1388 = vpop.f32.mrb[0].mxu0
  %v1389 = vadd.f32 0.0, %v1388
  %v1390 = vpop.f32.mrb[0].mxu0
  %v1391 = vpop.f32.mrb[0].mxu0
  %v1392 = vadd.f32 0.0, %v1391
  %v1393 = vpop.f32.mrb[0].mxu0
  %1394 = vmatprep.mubr.bf16.mxu0 0
  %1395 = vmatmul.mubr.bf16.gmra.mrb[0].mxu0 %v1303
  %v1396 = vpop.f32.mrb[0].mxu0
  %v1397 = vadd.f32 0.0, %v1396
  %v1398 = vpop.f32.mrb[0].mxu0
  %v1399 = vpop.f32.mrb[0].mxu0
  %v1400 = vadd.f32 0.0, %v1399
  %v1401 = vpop.f32.mrb[0].mxu0
  %1402 = vmatprep.mubr.bf16.mxu0 0
  %1403 = vmatmul.mubr.bf16.gmra.mrb[0].mxu0 %v1306
  %v1404 = vpop.f32.mrb[0].mxu0
  %v1405 = vadd.f32 0.0, %v1404
  %v1406 = vpop.f32.mrb[0].mxu0
  %v1407 = vpop.f32.mrb[0].mxu0
  %v1408 = vadd.f32 0.0, %v1407
  %v1409 = vpop.f32.mrb[0].mxu0
  %1410 = vmatprep.mubr.bf16.mxu0 0
  %1411 = vmatmul.mubr.bf16.gmra.mrb[0].mxu0 %v1309
  %v1412 = vpop.f32.mrb[0].mxu0
  %v1413 = vadd.f32 0.0, %v1412
  %v1414 = vpop.f32.mrb[0].mxu0
  %v1415 = vpop.f32.mrb[0].mxu0
  %v1416 = vadd.f32 0.0, %v1415
  %v1417 = vpop.f32.mrb[0].mxu0
  %1418 = vmatprep.mubr.bf16.mxu0 0
  %1419 = vmatmul.mubr.bf16.gmra.mrb[0].mxu0 %v1312
  %v1420 = vpop.f32.mrb[0].mxu0
  %v1421 = vadd.f32 0.0, %v1420
  %v1422 = vpop.f32.mrb[0].mxu0
  %v1423 = vpop.f32.mrb[0].mxu0
  %v1424 = vadd.f32 0.0, %v1423
  %v1425 = vpop.f32.mrb[0].mxu0
  %1426 = vmatprep.mubr.bf16.mxu0 0
  %1427 = vmatmul.mubr.bf16.gmra.mrb[0].mxu0 %v1315
  %v1428 = vpop.f32.mrb[0].mxu0
  %v1429 = vadd.f32 0.0, %v1428
  %v1430 = vpop.f32.mrb[0].mxu0
  %v1431 = vpop.f32.mrb[0].mxu0
  %v1432 = vadd.f32 0.0, %v1431
  %v1433 = vpop.f32.mrb[0].mxu0
  %1434 = vmatprep.mubr.bf16.mxu0 0
  %1435 = vmatmul.mubr.bf16.gmra.mrb[0].mxu0 %v1318
  %v1436 = vpop.f32.mrb[0].mxu0
  %v1437 = vadd.f32 0.0, %v1436
  %v1438 = vpop.f32.mrb[0].mxu0
  %v1439 = vpop.f32.mrb[0].mxu0
  %v1440 = vadd.f32 0.0, %v1439
  %v1441 = vpop.f32.mrb[0].mxu0
  %1442 = vmatprep.mubr.bf16.mxu0 0
  %1443 = vmatmul.mubr.bf16.gmra.mrb[0].mxu0 %v1321
  %v1444 = vpop.f32.mrb[0].mxu0
  %v1445 = vadd.f32 0.0, %v1444
  %v1446 = vpop.f32.mrb[0].mxu0
  %v1447 = vpop.f32.mrb[0].mxu0
  %v1448 = vadd.f32 0.0, %v1447
  %v1449 = vpop.f32.mrb[0].mxu0
  %1450 = vmatprep.mubr.bf16.mxu0 0
  %1451 = vmatmul.mubr.bf16.gmra.mrb[0].mxu0 %v1324
  %v1452 = vpop.f32.mrb[0].mxu0
  %v1453 = vadd.f32 0.0, %v1452
  %v1454 = vpop.f32.mrb[0].mxu0
  %v1455 = vpop.f32.mrb[0].mxu0
  %v1456 = vadd.f32 0.0, %v1455
  %v1457 = vpop.f32.mrb[0].mxu0
  %1458 = vmatprep.mubr.bf16.mxu0 0
  %1459 = vmatmul.mubr.bf16.gmra.mrb[0].mxu0 %v1327
  %v1460 = vpop.f32.mrb[0].mxu0
  %v1461 = vadd.f32 0.0, %v1460
  %v1462 = vpop.f32.mrb[0].mxu0
  %v1463 = vpop.f32.mrb[0].mxu0
  %v1464 = vadd.f32 0.0, %v1463
  %v1465 = vpop.f32.mrb[0].mxu0
  %1466 = vmatprep.mubr.bf16.mxu0 0
  %1467 = vmatmul.mubr.bf16.gmra.mrb[0].mxu0 %v1330
  %v1468 = vpop.f32.mrb[0].mxu0
  %v1469 = vadd.f32 0.0, %v1468
  %v1470 = vpop.f32.mrb[0].mxu0
  %v1471 = vpop.f32.mrb[0].mxu0
  %v1472 = vadd.f32 0.0, %v1471
  %v1473 = vpop.f32.mrb[0].mxu0
  %1474 = vmatprep.mubr.bf16.mxu0 0
  %1475 = vmatmul.mubr.bf16.gmra.mrb[0].mxu0 %v1333
  %v1476 = vpop.f32.mrb[0].mxu0
  %v1477 = vadd.f32 0.0, %v1476
  %v1478 = vpop.f32.mrb[0].mxu0
  %v1479 = vpop.f32.mrb[0].mxu0
  %v1480 = vadd.f32 0.0, %v1479
  %v1481 = vpop.f32.mrb[0].mxu0
  %1482 = vmatprep.mubr.bf16.mxu0 0
  %1483 = vmatmul.mubr.bf16.gmra.mrb[0].mxu0 %v1336
  %v1484 = vpop.f32.mrb[0].mxu0
  %v1485 = vadd.f32 0.0, %v1484
  %v1486 = vpop.f32.mrb[0].mxu0
  %v1487 = vpop.f32.mrb[0].mxu0
  %v1488 = vadd.f32 0.0, %v1487
  %v1489 = vpop.f32.mrb[0].mxu0
  %1490 = vmatprep.mubr.bf16.mxu0 0
  %1491 = vmatmul.mubr.bf16.gmra.mrb[0].mxu0 %v1339
  %v1492 = vpop.f32.mrb[0].mxu0
  %v1493 = vadd.f32 0.0, %v1492
  %v1494 = vpop.f32.mrb[0].mxu0
  %v1495 = vpop.f32.mrb[0].mxu0
  %v1496 = vadd.f32 0.0, %v1495
  %v1497 = vpop.f32.mrb[0].mxu0
  %1498 = vmatprep.mubr.bf16.mxu0 0
  %1499 = vmatmul.mubr.bf16.gmra.mrb[0].mxu0 %v1342
  %v1500 = vpop.f32.mrb[0].mxu0
  %v1501 = vadd.f32 0.0, %v1500
  %v1502 = vpop.f32.mrb[0].mxu0
  %v1503 = vpop.f32.mrb[0].mxu0
  %v1504 = vadd.f32 0.0, %v1503
  %v1505 = vpop.f32.mrb[0].mxu0
  %1506 = vmatprep.mubr.bf16.mxu0 0
  %1507 = vmatmul.mubr.bf16.gmra.mrb[0].mxu0 %v1344
  %v1508 = vpop.f32.mrb[0].mxu0
  %v1509 = vadd.f32 0.0, %v1508
  %v1510 = vpop.f32.mrb[0].mxu0
  %v1511 = vpop.f32.mrb[0].mxu0
  %v1512 = vadd.f32 0.0, %v1511
  %v1513 = vpop.f32.mrb[0].mxu0
  %1514 = vdwg.mxu0
  %v1515 = vadd.f32 %v1191, %v1381
  %v1516 = vadd.f32 %v1192, %v1384
  %v1517 = vadd.f32 %v1193, %v1389
  %v1518 = vadd.f32 %v1194, %v1392
  %v1519 = vadd.f32 %v1195, %v1397
  %v1520 = vadd.f32 %v1196, %v1400
  %v1521 = vadd.f32 %v1197, %v1405
  %v1522 = vadd.f32 %v1198, %v1408
  %v1523 = vadd.f32 %v1199, %v1413
  %v1524 = vadd.f32 %v1200, %v1416
  %v1525 = vadd.f32 %v1201, %v1421
  %v1526 = vadd.f32 %v1202, %v1424
  %v1527 = vadd.f32 %v1203, %v1429
  %v1528 = vadd.f32 %v1204, %v1432
  %v1529 = vadd.f32 %v1205, %v1437
  %v1530 = vadd.f32 %v1206, %v1440
  %v1531 = vadd.f32 %v1207, %v1445
  %v1532 = vadd.f32 %v1208, %v1448
  %v1533 = vadd.f32 %v1209, %v1453
  %v1534 = vadd.f32 %v1210, %v1456
  %v1535 = vadd.f32 %v1211, %v1461
  %v1536 = vadd.f32 %v1212, %v1464
  %v1537 = vadd.f32 %v1213, %v1469
  %v1538 = vadd.f32 %v1214, %v1472
  %v1539 = vadd.f32 %v1215, %v1477
  %v1540 = vadd.f32 %v1216, %v1480
  %v1541 = vadd.f32 %v1217, %v1485
  %v1542 = vadd.f32 %v1218, %v1488
  %v1543 = vadd.f32 %v1219, %v1493
  %v1544 = vadd.f32 %v1220, %v1496
  %v1545 = vadd.f32 %v1221, %v1501
  %v1546 = vadd.f32 %v1222, %v1504
  %v1547 = vadd.f32 %v1223, %v1509
  %v1548 = vadd.f32 %v1224, %v1512
  %v1549 = vld [vmem:[%s2] sm:$0x1]
  %v1551 = vlaneseq
  %v1552 = vshrl.u32 %v1551, 7
  %v1553 = vsub.s32 0, %v1552
  %v1554 = vrot.slane %v1549, %v1553
  %v1556 = vadd.f32 %v1515, %v1554
  %v1557 = vadd.f32 %v1516, %v1554
  %v1558 = vadd.f32 %v1517, %v1554
  %v1559 = vadd.f32 %v1518, %v1554
  %v1560 = vadd.f32 %v1519, %v1554
  %v1561 = vadd.f32 %v1520, %v1554
  %v1562 = vadd.f32 %v1521, %v1554
  %v1563 = vadd.f32 %v1522, %v1554
  %v1564 = vadd.f32 %v1523, %v1554
  %v1565 = vadd.f32 %v1524, %v1554
  %v1566 = vadd.f32 %v1525, %v1554
  %v1567 = vadd.f32 %v1526, %v1554
  %v1568 = vadd.f32 %v1527, %v1554
  %v1569 = vadd.f32 %v1528, %v1554
  %v1570 = vadd.f32 %v1529, %v1554
  %v1571 = vadd.f32 %v1530, %v1554
  %v1572 = vadd.f32 %v1531, %v1554
  %v1573 = vadd.f32 %v1532, %v1554
  %v1574 = vadd.f32 %v1533, %v1554
  %v1575 = vadd.f32 %v1534, %v1554
  %v1576 = vadd.f32 %v1535, %v1554
  %v1577 = vadd.f32 %v1536, %v1554
  %v1578 = vadd.f32 %v1537, %v1554
  %v1579 = vadd.f32 %v1538, %v1554
  %v1580 = vadd.f32 %v1539, %v1554
  %v1581 = vadd.f32 %v1540, %v1554
  %v1582 = vadd.f32 %v1541, %v1554
  %v1583 = vadd.f32 %v1542, %v1554
  %v1584 = vadd.f32 %v1543, %v1554
  %v1585 = vadd.f32 %v1544, %v1554
  %v1586 = vadd.f32 %v1545, %v1554
  %v1587 = vadd.f32 %v1546, %v1554
  %v1588 = vadd.f32 %v1547, %v1554
  %v1589 = vadd.f32 %v1548, %v1554
  %v1590 = vmax.f32 %v1556, 0.0
  %v1591 = vmax.f32 %v1557, 0.0
  %v1592 = vmax.f32 %v1558, 0.0
  %v1593 = vmax.f32 %v1559, 0.0
  %v1594 = vmax.f32 %v1560, 0.0
  %v1595 = vmax.f32 %v1561, 0.0
  %v1596 = vmax.f32 %v1562, 0.0
  %v1597 = vmax.f32 %v1563, 0.0
  %v1598 = vmax.f32 %v1564, 0.0
  %v1599 = vmax.f32 %v1565, 0.0
  %v1600 = vmax.f32 %v1566, 0.0
  %v1601 = vmax.f32 %v1567, 0.0
  %v1602 = vmax.f32 %v1568, 0.0
  %v1603 = vmax.f32 %v1569, 0.0
  %v1604 = vmax.f32 %v1570, 0.0
  %v1605 = vmax.f32 %v1571, 0.0
  %v1606 = vmax.f32 %v1572, 0.0
  %v1607 = vmax.f32 %v1573, 0.0
  %v1608 = vmax.f32 %v1574, 0.0
  %v1609 = vmax.f32 %v1575, 0.0
  %v1610 = vmax.f32 %v1576, 0.0
  %v1611 = vmax.f32 %v1577, 0.0
  %v1612 = vmax.f32 %v1578, 0.0
  %v1613 = vmax.f32 %v1579, 0.0
  %v1614 = vmax.f32 %v1580, 0.0
  %v1615 = vmax.f32 %v1581, 0.0
  %v1616 = vmax.f32 %v1582, 0.0
  %v1617 = vmax.f32 %v1583, 0.0
  %v1618 = vmax.f32 %v1584, 0.0
  %v1619 = vmax.f32 %v1585, 0.0
  %v1620 = vmax.f32 %v1586, 0.0
  %v1621 = vmax.f32 %v1587, 0.0
  %v1622 = vmax.f32 %v1588, 0.0
  %v1623 = vmax.f32 %v1589, 0.0
  %v1624 = vpack.c.bf16 %v1591, %v1590
  %v1625 = vpack.c.bf16 %v1593, %v1592
  %v1626 = vpack.c.bf16 %v1595, %v1594
  %v1627 = vpack.c.bf16 %v1597, %v1596
  %v1628 = vpack.c.bf16 %v1599, %v1598
  %v1629 = vpack.c.bf16 %v1601, %v1600
  %v1630 = vpack.c.bf16 %v1603, %v1602
  %v1631 = vpack.c.bf16 %v1605, %v1604
  %v1632 = vpack.c.bf16 %v1607, %v1606
  %v1633 = vpack.c.bf16 %v1609, %v1608
  %v1634 = vpack.c.bf16 %v1611, %v1610
  %v1635 = vpack.c.bf16 %v1613, %v1612
  %v1636 = vpack.c.bf16 %v1615, %v1614
  %v1637 = vpack.c.bf16 %v1617, %v1616
  %v1638 = vpack.c.bf16 %v1619, %v1618
  %v1639 = vpack.c.bf16 %v1621, %v1620
  %v1640 = vpack.c.bf16 %v1623, %v1622
  %v1658 = vunpack.c.l.b16 %v1624
  %v1659 = vunpack.c.h.b16 %v1624
  %v1660 = vunpack.c.l.b16 %v1625
  %v1661 = vunpack.c.h.b16 %v1625
  %v1662 = vunpack.c.l.b16 %v1626
  %v1663 = vunpack.c.h.b16 %v1626
  %v1664 = vunpack.c.l.b16 %v1627
  %v1665 = vunpack.c.h.b16 %v1627
  %v1666 = vunpack.c.l.b16 %v1628
  %v1667 = vunpack.c.h.b16 %v1628
  %v1668 = vunpack.c.l.b16 %v1629
  %v1669 = vunpack.c.h.b16 %v1629
  %v1670 = vunpack.c.l.b16 %v1630
  %v1671 = vunpack.c.h.b16 %v1630
  %v1672 = vunpack.c.l.b16 %v1631
  %v1673 = vunpack.c.h.b16 %v1631
  %v1674 = vunpack.c.l.b16 %v1632
  %v1675 = vunpack.c.h.b16 %v1632
  %v1676 = vunpack.c.l.b16 %v1633
  %v1677 = vunpack.c.h.b16 %v1633
  %v1678 = vunpack.c.l.b16 %v1634
  %v1679 = vunpack.c.h.b16 %v1634
  %v1680 = vunpack.c.l.b16 %v1635
  %v1681 = vunpack.c.h.b16 %v1635
  %v1682 = vunpack.c.l.b16 %v1636
  %v1683 = vunpack.c.h.b16 %v1636
  %v1684 = vunpack.c.l.b16 %v1637
  %v1685 = vunpack.c.h.b16 %v1637
  %v1686 = vunpack.c.l.b16 %v1638
  %v1687 = vunpack.c.h.b16 %v1638
  %v1688 = vunpack.c.l.b16 %v1639
  %v1689 = vunpack.c.h.b16 %v1639
  %v1690 = vunpack.c.l.b16 %v1640
  %v1691 = vunpack.c.h.b16 %v1640
  %v1692 = vpack.c.b16 %v1658, %v1658
  %v1693 = vpack.c.b16 %v1659, %v1659
  %v1694 = vpack.c.b16 %v1660, %v1660
  %v1695 = vpack.c.b16 %v1661, %v1661
  %v1696 = vpack.c.b16 %v1662, %v1662
  %v1697 = vpack.c.b16 %v1663, %v1663
  %v1698 = vpack.c.b16 %v1664, %v1664
  %v1699 = vpack.c.b16 %v1665, %v1665
  %v1700 = vpack.c.b16 %v1666, %v1666
  %v1701 = vpack.c.b16 %v1667, %v1667
  %v1702 = vpack.c.b16 %v1668, %v1668
  %v1703 = vpack.c.b16 %v1669, %v1669
  %v1704 = vpack.c.b16 %v1670, %v1670
  %v1705 = vpack.c.b16 %v1671, %v1671
  %v1706 = vpack.c.b16 %v1672, %v1672
  %v1707 = vpack.c.b16 %v1673, %v1673
  %v1708 = vpack.c.b16 %v1674, %v1674
  %v1709 = vpack.c.b16 %v1675, %v1675
  %v1710 = vpack.c.b16 %v1676, %v1676
  %v1711 = vpack.c.b16 %v1677, %v1677
  %v1712 = vpack.c.b16 %v1678, %v1678
  %v1713 = vpack.c.b16 %v1679, %v1679
  %v1714 = vpack.c.b16 %v1680, %v1680
  %v1715 = vpack.c.b16 %v1681, %v1681
  %v1716 = vpack.c.b16 %v1682, %v1682
  %v1717 = vpack.c.b16 %v1683, %v1683
  %v1718 = vpack.c.b16 %v1684, %v1684
  %v1719 = vpack.c.b16 %v1685, %v1685
  %v1720 = vpack.c.b16 %v1686, %v1686
  %v1721 = vpack.c.b16 %v1687, %v1687
  %v1722 = vpack.c.b16 %v1688, %v1688
  %v1723 = vpack.c.b16 %v1689, %v1689
  %v1724 = vpack.c.b16 %v1690, %v1690
  %v1725 = vpack.c.b16 %v1691, %v1691
  %vm1760 = vcmask 519168
  %1761 = vst.msk [vmem:[%s3] sm:$0xf] %vm1760, %v1692
  %1762 = vst.msk [vmem:[%s3 + $0x4] sm:$0xf] %vm1760, %v1693
  %1763 = vst.msk [vmem:[%s3 + $0x8] sm:$0xf] %vm1760, %v1694
  %1764 = vst.msk [vmem:[%s3 + $0xc] sm:$0xf] %vm1760, %v1695
  %1765 = vst.msk [vmem:[%s3 + $0x10] sm:$0xf] %vm1760, %v1696
  %1766 = vst.msk [vmem:[%s3 + $0x14] sm:$0xf] %vm1760, %v1697
  %1767 = vst.msk [vmem:[%s3 + $0x18] sm:$0xf] %vm1760, %v1698
  %1768 = vst.msk [vmem:[%s3 + $0x1c] sm:$0xf] %vm1760, %v1699
  %1769 = vst.msk [vmem:[%s3 + $0x20] sm:$0xf] %vm1760, %v1700
  %1770 = vst.msk [vmem:[%s3 + $0x24] sm:$0xf] %vm1760, %v1701
  %1771 = vst.msk [vmem:[%s3 + $0x28] sm:$0xf] %vm1760, %v1702
  %1772 = vst.msk [vmem:[%s3 + $0x2c] sm:$0xf] %vm1760, %v1703
  %1773 = vst.msk [vmem:[%s3 + $0x30] sm:$0xf] %vm1760, %v1704
  %1774 = vst.msk [vmem:[%s3 + $0x34] sm:$0xf] %vm1760, %v1705
  %1775 = vst.msk [vmem:[%s3 + $0x38] sm:$0xf] %vm1760, %v1706
  %1776 = vst.msk [vmem:[%s3 + $0x3c] sm:$0xf] %vm1760, %v1707
  %1777 = vst.msk [vmem:[%s3 + $0x40] sm:$0xf] %vm1760, %v1708
  %1778 = vst.msk [vmem:[%s3 + $0x44] sm:$0xf] %vm1760, %v1709
  %1779 = vst.msk [vmem:[%s3 + $0x48] sm:$0xf] %vm1760, %v1710
  %1780 = vst.msk [vmem:[%s3 + $0x4c] sm:$0xf] %vm1760, %v1711
  %1781 = vst.msk [vmem:[%s3 + $0x50] sm:$0xf] %vm1760, %v1712
  %1782 = vst.msk [vmem:[%s3 + $0x54] sm:$0xf] %vm1760, %v1713
  %1783 = vst.msk [vmem:[%s3 + $0x58] sm:$0xf] %vm1760, %v1714
  %1784 = vst.msk [vmem:[%s3 + $0x5c] sm:$0xf] %vm1760, %v1715
  %1785 = vst.msk [vmem:[%s3 + $0x60] sm:$0xf] %vm1760, %v1716
  %1786 = vst.msk [vmem:[%s3 + $0x64] sm:$0xf] %vm1760, %v1717
  %1787 = vst.msk [vmem:[%s3 + $0x68] sm:$0xf] %vm1760, %v1718
  %1788 = vst.msk [vmem:[%s3 + $0x6c] sm:$0xf] %vm1760, %v1719
  %1789 = vst.msk [vmem:[%s3 + $0x70] sm:$0xf] %vm1760, %v1720
  %1790 = vst.msk [vmem:[%s3 + $0x74] sm:$0xf] %vm1760, %v1721
  %1791 = vst.msk [vmem:[%s3 + $0x78] sm:$0xf] %vm1760, %v1722
  %1792 = vst.msk [vmem:[%s3 + $0x7c] sm:$0xf] %vm1760, %v1723
  %1793 = vst.msk [vmem:[%s3 + $0x80] sm:$0xf] %vm1760, %v1724
  %1794 = vst.msk [vmem:[%s3 + $0x84] sm:$0xf] %vm1760, %v1725
  // Predicated region
  $region14: #{dueling_dqn_forward.4} parent=0 // pred_check
    _
  $region15: #{dueling_dqn_forward.4} parent=0 // pred_check_branch
    %1796 = sbr.rel (0) target = $region17
  $region16: #{dueling_dqn_forward.4} parent=0 // pred_region
    _
  $region17: #{dueling_dqn_forward.4} parent=0 // pred_fallthru
    _
  // Predicated region
  $region18: #{dueling_dqn_forward.4} parent=0 // pred_check
    _
  $region19: #{dueling_dqn_forward.4} parent=0 // pred_check_branch
    %1798 = sbr.rel (0) target = $region21
  $region20: #{dueling_dqn_forward.4} parent=0 // pred_region
    _
  $region21: #{dueling_dqn_forward.4} parent=0 // pred_fallthru
    _

// kernel: dueling_dqn_forward.5
$region0: #{dueling_dqn_forward.5}
  #allocation0 [shape = 'u32[]', space=smem, size = 0x4, offset = 0x4, fixed_abs, tag = 'smem constant byte address 0x4 - core index']
  #allocation1 [shape = 'u32[144,128]{1,0:T(1,128)}', space=vmem, size = 0x12000, scoped, tag = 'internal scratch']
  %s0 = inlined_call_operand.vmem [shape: bf16[64,256], index: 0, kind: input, shape index: {}]
  %s1 = inlined_call_operand.vmem [shape: bf16[4,256,128], index: 1, kind: input, shape index: {}]
  %s2 = inlined_call_operand.vmem [shape: f32[1,128], index: 2, kind: input, shape index: {}]
  %s3 = inlined_call_operand.vmem [shape: bf16[64,128], index: 3, kind: output, shape index: {}]
  %s4 = sld [smem:[#allocation0]]
  $region22: #{dueling_dqn_forward.5} parent=0
    _
  %s6 = ssub.s32 1, %s4
  %s7 = scalar_select 0, %s6, %s4
  // Predicated region
  $region2: #{dueling_dqn_forward.5} parent=0 // pred_check
    _
  $region3: #{dueling_dqn_forward.5} parent=0 // pred_check_branch
    %9 = sbr.rel (0) target = $region5
  $region4: #{dueling_dqn_forward.5} parent=0 // pred_region
    _
  $region5: #{dueling_dqn_forward.5} parent=0 // pred_fallthru
    _
  // Predicated region
  $region6: #{dueling_dqn_forward.5} parent=0 // pred_check
    _
  $region7: #{dueling_dqn_forward.5} parent=0 // pred_check_branch
    %11 = sbr.rel (0) target = $region9
  $region8: #{dueling_dqn_forward.5} parent=0 // pred_region
    _
  $region9: #{dueling_dqn_forward.5} parent=0 // pred_fallthru
    _
  // Predicated region
  $region10: #{dueling_dqn_forward.5} parent=0 // pred_check
    _
  $region11: #{dueling_dqn_forward.5} parent=0 // pred_check_branch
    %13 = sbr.rel (0) target = $region13
  $region12: #{dueling_dqn_forward.5} parent=0 // pred_region
    _
  $region13: #{dueling_dqn_forward.5} parent=0 // pred_fallthru
    _
  %v15 = vld [vmem:[%s0] sm:$0xff]
  %v16 = vld [vmem:[%s0 + $0x8] sm:$0xff]
  %v17 = vld [vmem:[%s0 + $0x10] sm:$0xff]
  %v18 = vld [vmem:[%s0 + $0x18] sm:$0xff]
  %v19 = vld [vmem:[%s0 + $0x20] sm:$0xff]
  %v20 = vld [vmem:[%s0 + $0x28] sm:$0xff]
  %v21 = vld [vmem:[%s0 + $0x30] sm:$0xff]
  %v22 = vld [vmem:[%s0 + $0x38] sm:$0xff]
  %v23 = vld [vmem:[%s1] sm:$0xf]
  %v24 = vld [vmem:[%s1 + $0x4] sm:$0xf]
  %v25 = vld [vmem:[%s1 + $0x8] sm:$0xf]
  %v26 = vld [vmem:[%s1 + $0xc] sm:$0xf]
  %v27 = vld [vmem:[%s1 + $0x10] sm:$0xf]
  %v28 = vld [vmem:[%s1 + $0x14] sm:$0xf]
  %v29 = vld [vmem:[%s1 + $0x18] sm:$0xf]
  %v30 = vld [vmem:[%s1 + $0x1c] sm:$0xf]
  %v31 = vld [vmem:[%s1 + $0x20] sm:$0xf]
  %v32 = vld [vmem:[%s1 + $0x24] sm:$0xf]
  %v33 = vld [vmem:[%s1 + $0x28] sm:$0xf]
  %v34 = vld [vmem:[%s1 + $0x2c] sm:$0xf]
  %v35 = vld [vmem:[%s1 + $0x30] sm:$0xf]
  %v36 = vld [vmem:[%s1 + $0x34] sm:$0xf]
  %v37 = vld [vmem:[%s1 + $0x38] sm:$0xf]
  %v38 = vld [vmem:[%s1 + $0x3c] sm:$0xf]
  %v39 = vld [vmem:[%s1 + $0x40] sm:$0xf]
  %v40 = vld [vmem:[%s1 + $0x44] sm:$0xf]
  %v41 = vld [vmem:[%s1 + $0x48] sm:$0xf]
  %v42 = vld [vmem:[%s1 + $0x4c] sm:$0xf]
  %v43 = vld [vmem:[%s1 + $0x50] sm:$0xf]
  %v44 = vld [vmem:[%s1 + $0x54] sm:$0xf]
  %v45 = vld [vmem:[%s1 + $0x58] sm:$0xf]
  %v46 = vld [vmem:[%s1 + $0x5c] sm:$0xf]
  %v47 = vld [vmem:[%s1 + $0x60] sm:$0xf]
  %v48 = vld [vmem:[%s1 + $0x64] sm:$0xf]
  %v49 = vld [vmem:[%s1 + $0x68] sm:$0xf]
  %v50 = vld [vmem:[%s1 + $0x6c] sm:$0xf]
  %v51 = vld [vmem:[%s1 + $0x70] sm:$0xf]
  %v52 = vld [vmem:[%s1 + $0x74] sm:$0xf]
  %v53 = vld [vmem:[%s1 + $0x78] sm:$0xf]
  %v54 = vld [vmem:[%s1 + $0x7c] sm:$0xf]
  %v63 = vunpack.c.l.b16 %v15
  %v64 = vunpack.c.h.b16 %v15
  %v65 = vunpack.c.l.b16 %v16
  %v66 = vunpack.c.h.b16 %v16
  %v67 = vunpack.c.l.b16 %v17
  %v68 = vunpack.c.h.b16 %v17
  %v69 = vunpack.c.l.b16 %v18
  %v70 = vunpack.c.h.b16 %v18
  %v71 = vunpack.c.l.b16 %v19
  %v72 = vunpack.c.h.b16 %v19
  %v73 = vunpack.c.l.b16 %v20
  %v74 = vunpack.c.h.b16 %v20
  %v75 = vunpack.c.l.b16 %v21
  %v76 = vunpack.c.h.b16 %v21
  %v77 = vunpack.c.l.b16 %v22
  %v78 = vunpack.c.h.b16 %v22
  %v79 = vpack.c.b16 %v65, %v63
  %v80 = vpack.c.b16 %v66, %v64
  %v81 = vpack.c.b16 %v69, %v67
  %v82 = vpack.c.b16 %v70, %v68
  %v83 = vpack.c.b16 %v73, %v71
  %v84 = vpack.c.b16 %v74, %v72
  %v85 = vpack.c.b16 %v77, %v75
  %v86 = vpack.c.b16 %v78, %v76
  %vm87 = vsmask.f32 7424
  %v89 = vshrl.u32 %v79, 16
  %v91 = vshll.u32 %v79, 16
  %v93 = vrot.slane %v91, 1
  %v94 = vor.u32 %v89, %v93
  %v96 = vshll.u32 %v81, 16
  %v98 = vrot.slane %v96, 1
  %v99 = vsel %vm87, %v94, %v98
  %v101 = vshrl.u32 %v80, 16
  %v103 = vshll.u32 %v80, 16
  %v105 = vrot.slane %v103, 1
  %v106 = vor.u32 %v101, %v105
  %v108 = vshll.u32 %v82, 16
  %v110 = vrot.slane %v108, 1
  %v111 = vsel %vm87, %v106, %v110
  %v112 = vshrl.u32 %v81, 16
  %v114 = vor.u32 %v112, %v98
  %v116 = vshll.u32 %v83, 16
  %v118 = vrot.slane %v116, 1
  %v119 = vsel %vm87, %v114, %v118
  %v120 = vshrl.u32 %v82, 16
  %v122 = vor.u32 %v120, %v110
  %v124 = vshll.u32 %v84, 16
  %v126 = vrot.slane %v124, 1
  %v127 = vsel %vm87, %v122, %v126
  %v128 = vshrl.u32 %v83, 16
  %v130 = vor.u32 %v128, %v118
  %v132 = vshll.u32 %v85, 16
  %v134 = vrot.slane %v132, 1
  %v135 = vsel %vm87, %v130, %v134
  %v136 = vshrl.u32 %v84, 16
  %v138 = vor.u32 %v136, %v126
  %v140 = vshll.u32 %v86, 16
  %v142 = vrot.slane %v140, 1
  %v143 = vsel %vm87, %v138, %v142
  %v144 = vshrl.u32 %v85, 16
  %v146 = vor.u32 %v144, %v134
  %v147 = vshrl.u32 %v86, 16
  %v149 = vor.u32 %v147, %v142
  %vm158 = vcmask 1047552
  %vm159 = vmand %vm158, %vm87
  %v160 = vsel %vm159, %v146, 0
  %v161 = vsel %vm159, %v149, 0
  %s162 = scalar_lea.vmem %s1, 128
  %v163 = vld [vmem:[%s162] sm:$0xf]
  %v164 = vld [vmem:[%s162 + $0x4] sm:$0xf]
  %v165 = vld [vmem:[%s162 + $0x8] sm:$0xf]
  %v166 = vld [vmem:[%s162 + $0xc] sm:$0xf]
  %v167 = vld [vmem:[%s162 + $0x10] sm:$0xf]
  %v168 = vld [vmem:[%s162 + $0x14] sm:$0xf]
  %v169 = vld [vmem:[%s162 + $0x18] sm:$0xf]
  %v170 = vld [vmem:[%s162 + $0x1c] sm:$0xf]
  %v171 = vld [vmem:[%s162 + $0x20] sm:$0xf]
  %v172 = vld [vmem:[%s162 + $0x24] sm:$0xf]
  %v173 = vld [vmem:[%s162 + $0x28] sm:$0xf]
  %v174 = vld [vmem:[%s162 + $0x2c] sm:$0xf]
  %v175 = vld [vmem:[%s162 + $0x30] sm:$0xf]
  %v176 = vld [vmem:[%s162 + $0x34] sm:$0xf]
  %v177 = vld [vmem:[%s162 + $0x38] sm:$0xf]
  %v178 = vld [vmem:[%s162 + $0x3c] sm:$0xf]
  %v179 = vld [vmem:[%s162 + $0x40] sm:$0xf]
  %v180 = vld [vmem:[%s162 + $0x44] sm:$0xf]
  %v181 = vld [vmem:[%s162 + $0x48] sm:$0xf]
  %v182 = vld [vmem:[%s162 + $0x4c] sm:$0xf]
  %v183 = vld [vmem:[%s162 + $0x50] sm:$0xf]
  %v184 = vld [vmem:[%s162 + $0x54] sm:$0xf]
  %v185 = vld [vmem:[%s162 + $0x58] sm:$0xf]
  %v186 = vld [vmem:[%s162 + $0x5c] sm:$0xf]
  %v187 = vld [vmem:[%s162 + $0x60] sm:$0xf]
  %v188 = vld [vmem:[%s162 + $0x64] sm:$0xf]
  %v189 = vld [vmem:[%s162 + $0x68] sm:$0xf]
  %v190 = vld [vmem:[%s162 + $0x6c] sm:$0xf]
  %v191 = vld [vmem:[%s162 + $0x70] sm:$0xf]
  %v192 = vld [vmem:[%s162 + $0x74] sm:$0xf]
  %v193 = vld [vmem:[%s162 + $0x78] sm:$0xf]
  %v194 = vld [vmem:[%s162 + $0x7c] sm:$0xf]
  %v227 = vunpack.c.l.b16 %v163
  %v228 = vunpack.c.l.b16 %v164
  %v229 = vunpack.c.l.b16 %v165
  %v230 = vunpack.c.l.b16 %v166
  %v231 = vunpack.c.l.b16 %v167
  %v232 = vunpack.c.l.b16 %v168
  %v233 = vunpack.c.l.b16 %v169
  %v234 = vunpack.c.l.b16 %v170
  %v235 = vunpack.c.l.b16 %v171
  %v236 = vunpack.c.l.b16 %v172
  %v237 = vunpack.c.l.b16 %v173
  %v238 = vunpack.c.l.b16 %v174
  %v239 = vunpack.c.l.b16 %v175
  %v240 = vunpack.c.l.b16 %v176
  %v241 = vunpack.c.l.b16 %v177
  %v242 = vunpack.c.l.b16 %v178
  %v243 = vunpack.c.l.b16 %v179
  %v244 = vunpack.c.l.b16 %v180
  %v245 = vunpack.c.l.b16 %v181
  %v246 = vunpack.c.l.b16 %v182
  %v247 = vunpack.c.l.b16 %v183
  %v248 = vunpack.c.l.b16 %v184
  %v249 = vunpack.c.l.b16 %v185
  %v250 = vunpack.c.l.b16 %v186
  %v251 = vunpack.c.l.b16 %v187
  %v252 = vunpack.c.l.b16 %v188
  %v253 = vunpack.c.l.b16 %v189
  %v254 = vunpack.c.l.b16 %v190
  %v255 = vunpack.c.l.b16 %v191
  %v256 = vunpack.c.l.b16 %v192
  %v257 = vunpack.c.l.b16 %v193
  %v258 = vunpack.c.l.b16 %v194
  %v259 = vpack.c.b16 %v228, %v227
  %v260 = vpack.c.b16 %v230, %v229
  %v261 = vpack.c.b16 %v232, %v231
  %v262 = vpack.c.b16 %v234, %v233
  %v263 = vpack.c.b16 %v236, %v235
  %v264 = vpack.c.b16 %v238, %v237
  %v265 = vpack.c.b16 %v240, %v239
  %v266 = vpack.c.b16 %v242, %v241
  %v267 = vpack.c.b16 %v244, %v243
  %v268 = vpack.c.b16 %v246, %v245
  %v269 = vpack.c.b16 %v248, %v247
  %v270 = vpack.c.b16 %v250, %v249
  %v271 = vpack.c.b16 %v252, %v251
  %v272 = vpack.c.b16 %v254, %v253
  %v273 = vpack.c.b16 %v256, %v255
  %v274 = vpack.c.b16 %v258, %v257
  %291 = vmatprep.subr.bf16.mxu0 0
  %292 = vmatpush1.bf16.msra.mxu0 %v259
  %293 = vmatprep.subr.bf16.mxu0 0
  %294 = vmatpush1.bf16.msra.mxu0 %v260
  %295 = vmatprep.subr.bf16.mxu0 0
  %296 = vmatpush1.bf16.msra.mxu0 %v261
  %297 = vmatprep.subr.bf16.mxu0 0
  %298 = vmatpush1.bf16.msra.mxu0 %v262
  %299 = vmatprep.subr.bf16.mxu0 0
  %300 = vmatpush1.bf16.msra.mxu0 %v263
  %301 = vmatprep.subr.bf16.mxu0 0
  %302 = vmatpush1.bf16.msra.mxu0 %v264
  %303 = vmatprep.subr.bf16.mxu0 0
  %304 = vmatpush1.bf16.msra.mxu0 %v265
  %305 = vmatprep.subr.bf16.mxu0 0
  %306 = vmatpush1.bf16.msra.mxu0 %v266
  %307 = vmatprep.subr.bf16.mxu0 0
  %308 = vmatpush1.bf16.msra.mxu0 %v267
  %309 = vmatprep.subr.bf16.mxu0 0
  %310 = vmatpush1.bf16.msra.mxu0 %v268
  %311 = vmatprep.subr.bf16.mxu0 0
  %312 = vmatpush1.bf16.msra.mxu0 %v269
  %313 = vmatprep.subr.bf16.mxu0 0
  %314 = vmatpush1.bf16.msra.mxu0 %v270
  %315 = vmatprep.subr.bf16.mxu0 0
  %316 = vmatpush1.bf16.msra.mxu0 %v271
  %317 = vmatprep.subr.bf16.mxu0 0
  %318 = vmatpush1.bf16.msra.mxu0 %v272
  %319 = vmatprep.subr.bf16.mxu0 0
  %320 = vmatpush1.bf16.msra.mxu0 %v273
  %321 = vmatprep.subr.bf16.mxu0 0
  %322 = vmatpush1.bf16.msra.mxu0 %v274
  %323 = vmatprep.mubr.bf16.mxu0 %v111
  %324 = vmatmul.mubr.bf16.gmra.mrb[0].mxu0 %v99
  %v325 = vpop.f32.mrb[0].mxu0
  %v326 = vadd.f32 0.0, %v325
  %v327 = vpop.f32.mrb[0].mxu0
  %v328 = vpop.f32.mrb[0].mxu0
  %v329 = vadd.f32 0.0, %v328
  %v330 = vpop.f32.mrb[0].mxu0
  %331 = vmatprep.mubr.bf16.mxu0 %v127
  %332 = vmatmul.mubr.bf16.gmra.mrb[0].mxu0 %v119
  %v333 = vpop.f32.mrb[0].mxu0
  %v334 = vadd.f32 0.0, %v333
  %v335 = vpop.f32.mrb[0].mxu0
  %v336 = vpop.f32.mrb[0].mxu0
  %v337 = vadd.f32 0.0, %v336
  %v338 = vpop.f32.mrb[0].mxu0
  %339 = vmatprep.mubr.bf16.mxu0 %v143
  %340 = vmatmul.mubr.bf16.gmra.mrb[0].mxu0 %v135
  %v341 = vpop.f32.mrb[0].mxu0
  %v342 = vadd.f32 0.0, %v341
  %v343 = vpop.f32.mrb[0].mxu0
  %v344 = vpop.f32.mrb[0].mxu0
  %v345 = vadd.f32 0.0, %v344
  %v346 = vpop.f32.mrb[0].mxu0
  %347 = vmatprep.mubr.bf16.mxu0 %v161
  %348 = vmatmul.mubr.bf16.gmra.mrb[0].mxu0 %v160
  %v349 = vpop.f32.mrb[0].mxu0
  %v350 = vadd.f32 0.0, %v349
  %v351 = vpop.f32.mrb[0].mxu0
  %v352 = vpop.f32.mrb[0].mxu0
  %v353 = vadd.f32 0.0, %v352
  %v354 = vpop.f32.mrb[0].mxu0
  %355 = vdwg.mxu0
  %v396 = vunpack.c.l.b16 %v23
  %v397 = vunpack.c.l.b16 %v24
  %v398 = vunpack.c.l.b16 %v25
  %v399 = vunpack.c.l.b16 %v26
  %v400 = vunpack.c.l.b16 %v27
  %v401 = vunpack.c.l.b16 %v28
  %v402 = vunpack.c.l.b16 %v29
  %v403 = vunpack.c.l.b16 %v30
  %v404 = vunpack.c.l.b16 %v31
  %v405 = vunpack.c.l.b16 %v32
  %v406 = vunpack.c.l.b16 %v33
  %v407 = vunpack.c.l.b16 %v34
  %v408 = vunpack.c.l.b16 %v35
  %v409 = vunpack.c.l.b16 %v36
  %v410 = vunpack.c.l.b16 %v37
  %v411 = vunpack.c.l.b16 %v38
  %v412 = vunpack.c.l.b16 %v39
  %v413 = vunpack.c.l.b16 %v40
  %v414 = vunpack.c.l.b16 %v41
  %v415 = vunpack.c.l.b16 %v42
  %v416 = vunpack.c.l.b16 %v43
  %v417 = vunpack.c.l.b16 %v44
  %v418 = vunpack.c.l.b16 %v45
  %v419 = vunpack.c.l.b16 %v46
  %v420 = vunpack.c.l.b16 %v47
  %v421 = vunpack.c.l.b16 %v48
  %v422 = vunpack.c.l.b16 %v49
  %v423 = vunpack.c.l.b16 %v50
  %v424 = vunpack.c.l.b16 %v51
  %v425 = vunpack.c.l.b16 %v52
  %v426 = vunpack.c.l.b16 %v53
  %v427 = vunpack.c.l.b16 %v54
  %v428 = vpack.c.b16 %v397, %v396
  %v429 = vpack.c.b16 %v399, %v398
  %v430 = vpack.c.b16 %v401, %v400
  %v431 = vpack.c.b16 %v403, %v402
  %v432 = vpack.c.b16 %v405, %v404
  %v433 = vpack.c.b16 %v407, %v406
  %v434 = vpack.c.b16 %v409, %v408
  %v435 = vpack.c.b16 %v411, %v410
  %v436 = vpack.c.b16 %v413, %v412
  %v437 = vpack.c.b16 %v415, %v414
  %v438 = vpack.c.b16 %v417, %v416
  %v439 = vpack.c.b16 %v419, %v418
  %v440 = vpack.c.b16 %v421, %v420
  %v441 = vpack.c.b16 %v423, %v422
  %v442 = vpack.c.b16 %v425, %v424
  %v443 = vpack.c.b16 %v427, %v426
  %460 = vmatprep.subr.bf16.mxu0 0
  %461 = vmatpush1.bf16.msra.mxu0 %v428
  %462 = vmatprep.subr.bf16.mxu0 0
  %463 = vmatpush1.bf16.msra.mxu0 %v429
  %464 = vmatprep.subr.bf16.mxu0 0
  %465 = vmatpush1.bf16.msra.mxu0 %v430
  %466 = vmatprep.subr.bf16.mxu0 0
  %467 = vmatpush1.bf16.msra.mxu0 %v431
  %468 = vmatprep.subr.bf16.mxu0 0
  %469 = vmatpush1.bf16.msra.mxu0 %v432
  %470 = vmatprep.subr.bf16.mxu0 0
  %471 = vmatpush1.bf16.msra.mxu0 %v433
  %472 = vmatprep.subr.bf16.mxu0 0
  %473 = vmatpush1.bf16.msra.mxu0 %v434
  %474 = vmatprep.subr.bf16.mxu0 0
  %475 = vmatpush1.bf16.msra.mxu0 %v435
  %476 = vmatprep.subr.bf16.mxu0 0
  %477 = vmatpush1.bf16.msra.mxu0 %v436
  %478 = vmatprep.subr.bf16.mxu0 0
  %479 = vmatpush1.bf16.msra.mxu0 %v437
  %480 = vmatprep.subr.bf16.mxu0 0
  %481 = vmatpush1.bf16.msra.mxu0 %v438
  %482 = vmatprep.subr.bf16.mxu0 0
  %483 = vmatpush1.bf16.msra.mxu0 %v439
  %484 = vmatprep.subr.bf16.mxu0 0
  %485 = vmatpush1.bf16.msra.mxu0 %v440
  %486 = vmatprep.subr.bf16.mxu0 0
  %487 = vmatpush1.bf16.msra.mxu0 %v441
  %488 = vmatprep.subr.bf16.mxu0 0
  %489 = vmatpush1.bf16.msra.mxu0 %v442
  %490 = vmatprep.subr.bf16.mxu0 0
  %491 = vmatpush1.bf16.msra.mxu0 %v443
  %492 = vmatprep.mubr.bf16.mxu0 %v80
  %493 = vmatmul.mubr.bf16.gmra.mrb[0].mxu0 %v79
  %v494 = vpop.f32.mrb[0].mxu0
  %v495 = vadd.f32 %v326, %v494
  %v496 = vpop.f32.mrb[0].mxu0
  %v497 = vpop.f32.mrb[0].mxu0
  %v498 = vadd.f32 %v329, %v497
  %v499 = vpop.f32.mrb[0].mxu0
  %500 = vmatprep.mubr.bf16.mxu0 %v82
  %501 = vmatmul.mubr.bf16.gmra.mrb[0].mxu0 %v81
  %v502 = vpop.f32.mrb[0].mxu0
  %v503 = vadd.f32 %v334, %v502
  %v504 = vpop.f32.mrb[0].mxu0
  %v505 = vpop.f32.mrb[0].mxu0
  %v506 = vadd.f32 %v337, %v505
  %v507 = vpop.f32.mrb[0].mxu0
  %508 = vmatprep.mubr.bf16.mxu0 %v84
  %509 = vmatmul.mubr.bf16.gmra.mrb[0].mxu0 %v83
  %v510 = vpop.f32.mrb[0].mxu0
  %v511 = vadd.f32 %v342, %v510
  %v512 = vpop.f32.mrb[0].mxu0
  %v513 = vpop.f32.mrb[0].mxu0
  %v514 = vadd.f32 %v345, %v513
  %v515 = vpop.f32.mrb[0].mxu0
  %516 = vmatprep.mubr.bf16.mxu0 %v86
  %517 = vmatmul.mubr.bf16.gmra.mrb[0].mxu0 %v85
  %v518 = vpop.f32.mrb[0].mxu0
  %v519 = vadd.f32 %v350, %v518
  %v520 = vpop.f32.mrb[0].mxu0
  %v521 = vpop.f32.mrb[0].mxu0
  %v522 = vadd.f32 %v353, %v521
  %v523 = vpop.f32.mrb[0].mxu0
  %524 = vdwg.mxu0
  %vm525 = vsmask.f32 5376
  %v526 = vrot.slane %v89, 2
  %v527 = vrot.slane %v91, 3
  %v528 = vor.u32 %v526, %v527
  %v529 = vrot.slane %v112, 2
  %v530 = vrot.slane %v96, 3
  %v531 = vor.u32 %v529, %v530
  %v532 = vsel %vm525, %v528, %v531
  %v533 = vrot.slane %v101, 2
  %v534 = vrot.slane %v103, 3
  %v535 = vor.u32 %v533, %v534
  %v536 = vrot.slane %v120, 2
  %v537 = vrot.slane %v108, 3
  %v538 = vor.u32 %v536, %v537
  %v539 = vsel %vm525, %v535, %v538
  %v540 = vrot.slane %v128, 2
  %v541 = vrot.slane %v116, 3
  %v542 = vor.u32 %v540, %v541
  %v543 = vsel %vm525, %v531, %v542
  %v544 = vrot.slane %v136, 2
  %v545 = vrot.slane %v124, 3
  %v546 = vor.u32 %v544, %v545
  %v547 = vsel %vm525, %v538, %v546
  %v548 = vrot.slane %v144, 2
  %v549 = vrot.slane %v132, 3
  %v550 = vor.u32 %v548, %v549
  %v551 = vsel %vm525, %v542, %v550
  %v552 = vrot.slane %v147, 2
  %v553 = vrot.slane %v140, 3
  %v554 = vor.u32 %v552, %v553
  %v555 = vsel %vm525, %v546, %v554
  %vm564 = vcmask 1045504
  %vm565 = vmand %vm564, %vm525
  %v566 = vsel %vm565, %v550, 0
  %v567 = vsel %vm565, %v554, 0
  %s568 = scalar_lea.vmem %s1, 256
  %v569 = vld [vmem:[%s568] sm:$0xf]
  %v570 = vld [vmem:[%s568 + $0x4] sm:$0xf]
  %v571 = vld [vmem:[%s568 + $0x8] sm:$0xf]
  %v572 = vld [vmem:[%s568 + $0xc] sm:$0xf]
  %v573 = vld [vmem:[%s568 + $0x10] sm:$0xf]
  %v574 = vld [vmem:[%s568 + $0x14] sm:$0xf]
  %v575 = vld [vmem:[%s568 + $0x18] sm:$0xf]
  %v576 = vld [vmem:[%s568 + $0x1c] sm:$0xf]
  %v577 = vld [vmem:[%s568 + $0x20] sm:$0xf]
  %v578 = vld [vmem:[%s568 + $0x24] sm:$0xf]
  %v579 = vld [vmem:[%s568 + $0x28] sm:$0xf]
  %v580 = vld [vmem:[%s568 + $0x2c] sm:$0xf]
  %v581 = vld [vmem:[%s568 + $0x30] sm:$0xf]
  %v582 = vld [vmem:[%s568 + $0x34] sm:$0xf]
  %v583 = vld [vmem:[%s568 + $0x38] sm:$0xf]
  %v584 = vld [vmem:[%s568 + $0x3c] sm:$0xf]
  %v585 = vld [vmem:[%s568 + $0x40] sm:$0xf]
  %v586 = vld [vmem:[%s568 + $0x44] sm:$0xf]
  %v587 = vld [vmem:[%s568 + $0x48] sm:$0xf]
  %v588 = vld [vmem:[%s568 + $0x4c] sm:$0xf]
  %v589 = vld [vmem:[%s568 + $0x50] sm:$0xf]
  %v590 = vld [vmem:[%s568 + $0x54] sm:$0xf]
  %v591 = vld [vmem:[%s568 + $0x58] sm:$0xf]
  %v592 = vld [vmem:[%s568 + $0x5c] sm:$0xf]
  %v593 = vld [vmem:[%s568 + $0x60] sm:$0xf]
  %v594 = vld [vmem:[%s568 + $0x64] sm:$0xf]
  %v595 = vld [vmem:[%s568 + $0x68] sm:$0xf]
  %v596 = vld [vmem:[%s568 + $0x6c] sm:$0xf]
  %v597 = vld [vmem:[%s568 + $0x70] sm:$0xf]
  %v598 = vld [vmem:[%s568 + $0x74] sm:$0xf]
  %v599 = vld [vmem:[%s568 + $0x78] sm:$0xf]
  %v600 = vld [vmem:[%s568 + $0x7c] sm:$0xf]
  %v633 = vunpack.c.l.b16 %v569
  %v634 = vunpack.c.l.b16 %v570
  %v635 = vunpack.c.l.b16 %v571
  %v636 = vunpack.c.l.b16 %v572
  %v637 = vunpack.c.l.b16 %v573
  %v638 = vunpack.c.l.b16 %v574
  %v639 = vunpack.c.l.b16 %v575
  %v640 = vunpack.c.l.b16 %v576
  %v641 = vunpack.c.l.b16 %v577
  %v642 = vunpack.c.l.b16 %v578
  %v643 = vunpack.c.l.b16 %v579
  %v644 = vunpack.c.l.b16 %v580
  %v645 = vunpack.c.l.b16 %v581
  %v646 = vunpack.c.l.b16 %v582
  %v647 = vunpack.c.l.b16 %v583
  %v648 = vunpack.c.l.b16 %v584
  %v649 = vunpack.c.l.b16 %v585
  %v650 = vunpack.c.l.b16 %v586
  %v651 = vunpack.c.l.b16 %v587
  %v652 = vunpack.c.l.b16 %v588
  %v653 = vunpack.c.l.b16 %v589
  %v654 = vunpack.c.l.b16 %v590
  %v655 = vunpack.c.l.b16 %v591
  %v656 = vunpack.c.l.b16 %v592
  %v657 = vunpack.c.l.b16 %v593
  %v658 = vunpack.c.l.b16 %v594
  %v659 = vunpack.c.l.b16 %v595
  %v660 = vunpack.c.l.b16 %v596
  %v661 = vunpack.c.l.b16 %v597
  %v662 = vunpack.c.l.b16 %v598
  %v663 = vunpack.c.l.b16 %v599
  %v664 = vunpack.c.l.b16 %v600
  %v665 = vpack.c.b16 %v634, %v633
  %v666 = vpack.c.b16 %v636, %v635
  %v667 = vpack.c.b16 %v638, %v637
  %v668 = vpack.c.b16 %v640, %v639
  %v669 = vpack.c.b16 %v642, %v641
  %v670 = vpack.c.b16 %v644, %v643
  %v671 = vpack.c.b16 %v646, %v645
  %v672 = vpack.c.b16 %v648, %v647
  %v673 = vpack.c.b16 %v650, %v649
  %v674 = vpack.c.b16 %v652, %v651
  %v675 = vpack.c.b16 %v654, %v653
  %v676 = vpack.c.b16 %v656, %v655
  %v677 = vpack.c.b16 %v658, %v657
  %v678 = vpack.c.b16 %v660, %v659
  %v679 = vpack.c.b16 %v662, %v661
  %v680 = vpack.c.b16 %v664, %v663
  %697 = vmatprep.subr.bf16.mxu0 0
  %698 = vmatpush1.bf16.msra.mxu0 %v665
  %699 = vmatprep.subr.bf16.mxu0 0
  %700 = vmatpush1.bf16.msra.mxu0 %v666
  %701 = vmatprep.subr.bf16.mxu0 0
  %702 = vmatpush1.bf16.msra.mxu0 %v667
  %703 = vmatprep.subr.bf16.mxu0 0
  %704 = vmatpush1.bf16.msra.mxu0 %v668
  %705 = vmatprep.subr.bf16.mxu0 0
  %706 = vmatpush1.bf16.msra.mxu0 %v669
  %707 = vmatprep.subr.bf16.mxu0 0
  %708 = vmatpush1.bf16.msra.mxu0 %v670
  %709 = vmatprep.subr.bf16.mxu0 0
  %710 = vmatpush1.bf16.msra.mxu0 %v671
  %711 = vmatprep.subr.bf16.mxu0 0
  %712 = vmatpush1.bf16.msra.mxu0 %v672
  %713 = vmatprep.subr.bf16.mxu0 0
  %714 = vmatpush1.bf16.msra.mxu0 %v673
  %715 = vmatprep.subr.bf16.mxu0 0
  %716 = vmatpush1.bf16.msra.mxu0 %v674
  %717 = vmatprep.subr.bf16.mxu0 0
  %718 = vmatpush1.bf16.msra.mxu0 %v675
  %719 = vmatprep.subr.bf16.mxu0 0
  %720 = vmatpush1.bf16.msra.mxu0 %v676
  %721 = vmatprep.subr.bf16.mxu0 0
  %722 = vmatpush1.bf16.msra.mxu0 %v677
  %723 = vmatprep.subr.bf16.mxu0 0
  %724 = vmatpush1.bf16.msra.mxu0 %v678
  %725 = vmatprep.subr.bf16.mxu0 0
  %726 = vmatpush1.bf16.msra.mxu0 %v679
  %727 = vmatprep.subr.bf16.mxu0 0
  %728 = vmatpush1.bf16.msra.mxu0 %v680
  %729 = vmatprep.mubr.bf16.mxu0 %v539
  %730 = vmatmul.mubr.bf16.gmra.mrb[0].mxu0 %v532
  %v731 = vpop.f32.mrb[0].mxu0
  %v732 = vadd.f32 0.0, %v731
  %v733 = vpop.f32.mrb[0].mxu0
  %v734 = vpop.f32.mrb[0].mxu0
  %v735 = vadd.f32 0.0, %v734
  %v736 = vpop.f32.mrb[0].mxu0
  %737 = vmatprep.mubr.bf16.mxu0 %v547
  %738 = vmatmul.mubr.bf16.gmra.mrb[0].mxu0 %v543
  %v739 = vpop.f32.mrb[0].mxu0
  %v740 = vadd.f32 0.0, %v739
  %v741 = vpop.f32.mrb[0].mxu0
  %v742 = vpop.f32.mrb[0].mxu0
  %v743 = vadd.f32 0.0, %v742
  %v744 = vpop.f32.mrb[0].mxu0
  %745 = vmatprep.mubr.bf16.mxu0 %v555
  %746 = vmatmul.mubr.bf16.gmra.mrb[0].mxu0 %v551
  %v747 = vpop.f32.mrb[0].mxu0
  %v748 = vadd.f32 0.0, %v747
  %v749 = vpop.f32.mrb[0].mxu0
  %v750 = vpop.f32.mrb[0].mxu0
  %v751 = vadd.f32 0.0, %v750
  %v752 = vpop.f32.mrb[0].mxu0
  %753 = vmatprep.mubr.bf16.mxu0 %v567
  %754 = vmatmul.mubr.bf16.gmra.mrb[0].mxu0 %v566
  %v755 = vpop.f32.mrb[0].mxu0
  %v756 = vadd.f32 0.0, %v755
  %v757 = vpop.f32.mrb[0].mxu0
  %v758 = vpop.f32.mrb[0].mxu0
  %v759 = vadd.f32 0.0, %v758
  %v760 = vpop.f32.mrb[0].mxu0
  %761 = vdwg.mxu0
  %v762 = vadd.f32 %v495, %v732
  %v763 = vadd.f32 %v498, %v735
  %v764 = vadd.f32 %v503, %v740
  %v765 = vadd.f32 %v506, %v743
  %v766 = vadd.f32 %v511, %v748
  %v767 = vadd.f32 %v514, %v751
  %v768 = vadd.f32 %v519, %v756
  %v769 = vadd.f32 %v522, %v759
  %vm770 = vcmask 1044480
  %v771 = vrot.slane %v79, 3
  %v772 = vrot.slane %v81, 3
  %v773 = vsel %vm770, %v771, %v772
  %v774 = vrot.slane %v80, 3
  %v775 = vrot.slane %v82, 3
  %v776 = vsel %vm770, %v774, %v775
  %v777 = vrot.slane %v83, 3
  %v778 = vsel %vm770, %v772, %v777
  %v779 = vrot.slane %v84, 3
  %v780 = vsel %vm770, %v775, %v779
  %v781 = vrot.slane %v85, 3
  %v782 = vsel %vm770, %v777, %v781
  %v783 = vrot.slane %v86, 3
  %v784 = vsel %vm770, %v779, %v783
  %vm791 = vcmask 1044480
  %v794 = vsel %vm791, %v781, 0
  %v797 = vsel %vm791, %v783, 0
  %s799 = scalar_lea.vmem %s1, 384
  %v800 = vld [vmem:[%s799] sm:$0xf]
  %v801 = vld [vmem:[%s799 + $0x4] sm:$0xf]
  %v802 = vld [vmem:[%s799 + $0x8] sm:$0xf]
  %v803 = vld [vmem:[%s799 + $0xc] sm:$0xf]
  %v804 = vld [vmem:[%s799 + $0x10] sm:$0xf]
  %v805 = vld [vmem:[%s799 + $0x14] sm:$0xf]
  %v806 = vld [vmem:[%s799 + $0x18] sm:$0xf]
  %v807 = vld [vmem:[%s799 + $0x1c] sm:$0xf]
  %v808 = vld [vmem:[%s799 + $0x20] sm:$0xf]
  %v809 = vld [vmem:[%s799 + $0x24] sm:$0xf]
  %v810 = vld [vmem:[%s799 + $0x28] sm:$0xf]
  %v811 = vld [vmem:[%s799 + $0x2c] sm:$0xf]
  %v812 = vld [vmem:[%s799 + $0x30] sm:$0xf]
  %v813 = vld [vmem:[%s799 + $0x34] sm:$0xf]
  %v814 = vld [vmem:[%s799 + $0x38] sm:$0xf]
  %v815 = vld [vmem:[%s799 + $0x3c] sm:$0xf]
  %v816 = vld [vmem:[%s799 + $0x40] sm:$0xf]
  %v817 = vld [vmem:[%s799 + $0x44] sm:$0xf]
  %v818 = vld [vmem:[%s799 + $0x48] sm:$0xf]
  %v819 = vld [vmem:[%s799 + $0x4c] sm:$0xf]
  %v820 = vld [vmem:[%s799 + $0x50] sm:$0xf]
  %v821 = vld [vmem:[%s799 + $0x54] sm:$0xf]
  %v822 = vld [vmem:[%s799 + $0x58] sm:$0xf]
  %v823 = vld [vmem:[%s799 + $0x5c] sm:$0xf]
  %v824 = vld [vmem:[%s799 + $0x60] sm:$0xf]
  %v825 = vld [vmem:[%s799 + $0x64] sm:$0xf]
  %v826 = vld [vmem:[%s799 + $0x68] sm:$0xf]
  %v827 = vld [vmem:[%s799 + $0x6c] sm:$0xf]
  %v828 = vld [vmem:[%s799 + $0x70] sm:$0xf]
  %v829 = vld [vmem:[%s799 + $0x74] sm:$0xf]
  %v830 = vld [vmem:[%s799 + $0x78] sm:$0xf]
  %v831 = vld [vmem:[%s799 + $0x7c] sm:$0xf]
  %v864 = vunpack.c.l.b16 %v800
  %v865 = vunpack.c.l.b16 %v801
  %v866 = vunpack.c.l.b16 %v802
  %v867 = vunpack.c.l.b16 %v803
  %v868 = vunpack.c.l.b16 %v804
  %v869 = vunpack.c.l.b16 %v805
  %v870 = vunpack.c.l.b16 %v806
  %v871 = vunpack.c.l.b16 %v807
  %v872 = vunpack.c.l.b16 %v808
  %v873 = vunpack.c.l.b16 %v809
  %v874 = vunpack.c.l.b16 %v810
  %v875 = vunpack.c.l.b16 %v811
  %v876 = vunpack.c.l.b16 %v812
  %v877 = vunpack.c.l.b16 %v813
  %v878 = vunpack.c.l.b16 %v814
  %v879 = vunpack.c.l.b16 %v815
  %v880 = vunpack.c.l.b16 %v816
  %v881 = vunpack.c.l.b16 %v817
  %v882 = vunpack.c.l.b16 %v818
  %v883 = vunpack.c.l.b16 %v819
  %v884 = vunpack.c.l.b16 %v820
  %v885 = vunpack.c.l.b16 %v821
  %v886 = vunpack.c.l.b16 %v822
  %v887 = vunpack.c.l.b16 %v823
  %v888 = vunpack.c.l.b16 %v824
  %v889 = vunpack.c.l.b16 %v825
  %v890 = vunpack.c.l.b16 %v826
  %v891 = vunpack.c.l.b16 %v827
  %v892 = vunpack.c.l.b16 %v828
  %v893 = vunpack.c.l.b16 %v829
  %v894 = vunpack.c.l.b16 %v830
  %v895 = vunpack.c.l.b16 %v831
  %v896 = vpack.c.b16 %v865, %v864
  %v897 = vpack.c.b16 %v867, %v866
  %v898 = vpack.c.b16 %v869, %v868
  %v899 = vpack.c.b16 %v871, %v870
  %v900 = vpack.c.b16 %v873, %v872
  %v901 = vpack.c.b16 %v875, %v874
  %v902 = vpack.c.b16 %v877, %v876
  %v903 = vpack.c.b16 %v879, %v878
  %v904 = vpack.c.b16 %v881, %v880
  %v905 = vpack.c.b16 %v883, %v882
  %v906 = vpack.c.b16 %v885, %v884
  %v907 = vpack.c.b16 %v887, %v886
  %v908 = vpack.c.b16 %v889, %v888
  %v909 = vpack.c.b16 %v891, %v890
  %v910 = vpack.c.b16 %v893, %v892
  %v911 = vpack.c.b16 %v895, %v894
  %928 = vmatprep.subr.bf16.mxu0 0
  %929 = vmatpush1.bf16.msra.mxu0 %v896
  %930 = vmatprep.subr.bf16.mxu0 0
  %931 = vmatpush1.bf16.msra.mxu0 %v897
  %932 = vmatprep.subr.bf16.mxu0 0
  %933 = vmatpush1.bf16.msra.mxu0 %v898
  %934 = vmatprep.subr.bf16.mxu0 0
  %935 = vmatpush1.bf16.msra.mxu0 %v899
  %936 = vmatprep.subr.bf16.mxu0 0
  %937 = vmatpush1.bf16.msra.mxu0 %v900
  %938 = vmatprep.subr.bf16.mxu0 0
  %939 = vmatpush1.bf16.msra.mxu0 %v901
  %940 = vmatprep.subr.bf16.mxu0 0
  %941 = vmatpush1.bf16.msra.mxu0 %v902
  %942 = vmatprep.subr.bf16.mxu0 0
  %943 = vmatpush1.bf16.msra.mxu0 %v903
  %944 = vmatprep.subr.bf16.mxu0 0
  %945 = vmatpush1.bf16.msra.mxu0 %v904
  %946 = vmatprep.subr.bf16.mxu0 0
  %947 = vmatpush1.bf16.msra.mxu0 %v905
  %948 = vmatprep.subr.bf16.mxu0 0
  %949 = vmatpush1.bf16.msra.mxu0 %v906
  %950 = vmatprep.subr.bf16.mxu0 0
  %951 = vmatpush1.bf16.msra.mxu0 %v907
  %952 = vmatprep.subr.bf16.mxu0 0
  %953 = vmatpush1.bf16.msra.mxu0 %v908
  %954 = vmatprep.subr.bf16.mxu0 0
  %955 = vmatpush1.bf16.msra.mxu0 %v909
  %956 = vmatprep.subr.bf16.mxu0 0
  %957 = vmatpush1.bf16.msra.mxu0 %v910
  %958 = vmatprep.subr.bf16.mxu0 0
  %959 = vmatpush1.bf16.msra.mxu0 %v911
  %960 = vmatprep.mubr.bf16.mxu0 %v776
  %961 = vmatmul.mubr.bf16.gmra.mrb[0].mxu0 %v773
  %v962 = vpop.f32.mrb[0].mxu0
  %v963 = vadd.f32 0.0, %v962
  %v964 = vpop.f32.mrb[0].mxu0
  %v965 = vpop.f32.mrb[0].mxu0
  %v966 = vadd.f32 0.0, %v965
  %v967 = vpop.f32.mrb[0].mxu0
  %968 = vmatprep.mubr.bf16.mxu0 %v780
  %969 = vmatmul.mubr.bf16.gmra.mrb[0].mxu0 %v778
  %v970 = vpop.f32.mrb[0].mxu0
  %v971 = vadd.f32 0.0, %v970
  %v972 = vpop.f32.mrb[0].mxu0
  %v973 = vpop.f32.mrb[0].mxu0
  %v974 = vadd.f32 0.0, %v973
  %v975 = vpop.f32.mrb[0].mxu0
  %976 = vmatprep.mubr.bf16.mxu0 %v784
  %977 = vmatmul.mubr.bf16.gmra.mrb[0].mxu0 %v782
  %v978 = vpop.f32.mrb[0].mxu0
  %v979 = vadd.f32 0.0, %v978
  %v980 = vpop.f32.mrb[0].mxu0
  %v981 = vpop.f32.mrb[0].mxu0
  %v982 = vadd.f32 0.0, %v981
  %v983 = vpop.f32.mrb[0].mxu0
  %984 = vmatprep.mubr.bf16.mxu0 %v797
  %985 = vmatmul.mubr.bf16.gmra.mrb[0].mxu0 %v794
  %v986 = vpop.f32.mrb[0].mxu0
  %v987 = vadd.f32 0.0, %v986
  %v988 = vpop.f32.mrb[0].mxu0
  %v989 = vpop.f32.mrb[0].mxu0
  %v990 = vadd.f32 0.0, %v989
  %v991 = vpop.f32.mrb[0].mxu0
  %992 = vdwg.mxu0
  %v993 = vadd.f32 %v762, %v963
  %v994 = vadd.f32 %v763, %v966
  %v995 = vadd.f32 %v764, %v971
  %v996 = vadd.f32 %v765, %v974
  %v997 = vadd.f32 %v766, %v979
  %v998 = vadd.f32 %v767, %v982
  %v999 = vadd.f32 %v768, %v987
  %v1000 = vadd.f32 %v769, %v990
  %v1001 = vld [vmem:[%s2] sm:$0x1]
  %v1003 = vlaneseq
  %v1004 = vshrl.u32 %v1003, 7
  %v1005 = vsub.s32 0, %v1004
  %v1006 = vrot.slane %v1001, %v1005
  %v1008 = vadd.f32 %v993, %v1006
  %v1009 = vadd.f32 %v994, %v1006
  %v1010 = vadd.f32 %v995, %v1006
  %v1011 = vadd.f32 %v996, %v1006
  %v1012 = vadd.f32 %v997, %v1006
  %v1013 = vadd.f32 %v998, %v1006
  %v1014 = vadd.f32 %v999, %v1006
  %v1015 = vadd.f32 %v1000, %v1006
  %v1016 = vmax.f32 %v1008, 0.0
  %v1017 = vmax.f32 %v1009, 0.0
  %v1018 = vmax.f32 %v1010, 0.0
  %v1019 = vmax.f32 %v1011, 0.0
  %v1020 = vmax.f32 %v1012, 0.0
  %v1021 = vmax.f32 %v1013, 0.0
  %v1022 = vmax.f32 %v1014, 0.0
  %v1023 = vmax.f32 %v1015, 0.0
  %v1024 = vpack.c.bf16 %v1017, %v1016
  %v1025 = vpack.c.bf16 %v1019, %v1018
  %v1026 = vpack.c.bf16 %v1021, %v1020
  %v1027 = vpack.c.bf16 %v1023, %v1022
  %v1032 = vunpack.c.l.b16 %v1024
  %v1033 = vunpack.c.h.b16 %v1024
  %v1034 = vunpack.c.l.b16 %v1025
  %v1035 = vunpack.c.h.b16 %v1025
  %v1036 = vunpack.c.l.b16 %v1026
  %v1037 = vunpack.c.h.b16 %v1026
  %v1038 = vunpack.c.l.b16 %v1027
  %v1039 = vunpack.c.h.b16 %v1027
  %v1040 = vpack.c.b16 %v1032, %v1032
  %v1041 = vpack.c.b16 %v1033, %v1033
  %v1042 = vpack.c.b16 %v1034, %v1034
  %v1043 = vpack.c.b16 %v1035, %v1035
  %v1044 = vpack.c.b16 %v1036, %v1036
  %v1045 = vpack.c.b16 %v1037, %v1037
  %v1046 = vpack.c.b16 %v1038, %v1038
  %v1047 = vpack.c.b16 %v1039, %v1039
  %1056 = vst [vmem:[%s3] sm:$0xf] %v1040
  %1057 = vst [vmem:[%s3 + $0x4] sm:$0xf] %v1041
  %1058 = vst [vmem:[%s3 + $0x8] sm:$0xf] %v1042
  %1059 = vst [vmem:[%s3 + $0xc] sm:$0xf] %v1043
  %1060 = vst [vmem:[%s3 + $0x10] sm:$0xf] %v1044
  %1061 = vst [vmem:[%s3 + $0x14] sm:$0xf] %v1045
  %1062 = vst [vmem:[%s3 + $0x18] sm:$0xf] %v1046
  %1063 = vst [vmem:[%s3 + $0x1c] sm:$0xf] %v1047
  // Predicated region
  $region14: #{dueling_dqn_forward.5} parent=0 // pred_check
    _
  $region15: #{dueling_dqn_forward.5} parent=0 // pred_check_branch
    %1065 = sbr.rel (0) target = $region17
  $region16: #{dueling_dqn_forward.5} parent=0 // pred_region
    _
  $region17: #{dueling_dqn_forward.5} parent=0 // pred_fallthru
    _
  // Predicated region
  $region18: #{dueling_dqn_forward.5} parent=0 // pred_check
    _
  $region19: #{dueling_dqn_forward.5} parent=0 // pred_check_branch
    %1067 = sbr.rel (0) target = $region21
  $region20: #{dueling_dqn_forward.5} parent=0 // pred_region
    _
  $region21: #{dueling_dqn_forward.5} parent=0 // pred_fallthru
    _

// kernel: dueling_dqn_forward.6
$region0: #{dueling_dqn_forward.6}
  #allocation0 [shape = 'u32[]', space=smem, size = 0x4, offset = 0x4, fixed_abs, tag = 'smem constant byte address 0x4 - core index']
  #allocation1 [shape = 'u32[144,128]{1,0:T(1,128)}', space=vmem, size = 0x12000, scoped, tag = 'internal scratch']
  %s0 = inlined_call_operand.vmem [shape: bf16[64,128], index: 0, kind: input, shape index: {}]
  %s1 = inlined_call_operand.vmem [shape: bf16[9,128,128], index: 1, kind: input, shape index: {}]
  %s2 = inlined_call_operand.vmem [shape: f32[1,128], index: 2, kind: input, shape index: {}]
  %s3 = inlined_call_operand.vmem [shape: bf16[64,128], index: 3, kind: output, shape index: {}]
  %s4 = sld [smem:[#allocation0]]
  $region22: #{dueling_dqn_forward.6} parent=0
    _
  %s6 = ssub.s32 1, %s4
  %s7 = scalar_select 0, %s6, %s4
  // Predicated region
  $region2: #{dueling_dqn_forward.6} parent=0 // pred_check
    _
  $region3: #{dueling_dqn_forward.6} parent=0 // pred_check_branch
    %9 = sbr.rel (0) target = $region5
  $region4: #{dueling_dqn_forward.6} parent=0 // pred_region
    _
  $region5: #{dueling_dqn_forward.6} parent=0 // pred_fallthru
    _
  // Predicated region
  $region6: #{dueling_dqn_forward.6} parent=0 // pred_check
    _
  $region7: #{dueling_dqn_forward.6} parent=0 // pred_check_branch
    %11 = sbr.rel (0) target = $region9
  $region8: #{dueling_dqn_forward.6} parent=0 // pred_region
    _
  $region9: #{dueling_dqn_forward.6} parent=0 // pred_fallthru
    _
  // Predicated region
  $region10: #{dueling_dqn_forward.6} parent=0 // pred_check
    _
  $region11: #{dueling_dqn_forward.6} parent=0 // pred_check_branch
    %13 = sbr.rel (0) target = $region13
  $region12: #{dueling_dqn_forward.6} parent=0 // pred_region
    _
  $region13: #{dueling_dqn_forward.6} parent=0 // pred_fallthru
    _
  %v15 = vld [vmem:[%s0] sm:$0xf]
  %v16 = vld [vmem:[%s0 + $0x4] sm:$0xf]
  %v17 = vld [vmem:[%s0 + $0x8] sm:$0xf]
  %v18 = vld [vmem:[%s0 + $0xc] sm:$0xf]
  %v19 = vld [vmem:[%s0 + $0x10] sm:$0xf]
  %v20 = vld [vmem:[%s0 + $0x14] sm:$0xf]
  %v21 = vld [vmem:[%s0 + $0x18] sm:$0xf]
  %v22 = vld [vmem:[%s0 + $0x1c] sm:$0xf]
  %v23 = vld [vmem:[%s1] sm:$0xf]
  %v24 = vld [vmem:[%s1 + $0x4] sm:$0xf]
  %v25 = vld [vmem:[%s1 + $0x8] sm:$0xf]
  %v26 = vld [vmem:[%s1 + $0xc] sm:$0xf]
  %v27 = vld [vmem:[%s1 + $0x10] sm:$0xf]
  %v28 = vld [vmem:[%s1 + $0x14] sm:$0xf]
  %v29 = vld [vmem:[%s1 + $0x18] sm:$0xf]
  %v30 = vld [vmem:[%s1 + $0x1c] sm:$0xf]
  %v31 = vld [vmem:[%s1 + $0x20] sm:$0xf]
  %v32 = vld [vmem:[%s1 + $0x24] sm:$0xf]
  %v33 = vld [vmem:[%s1 + $0x28] sm:$0xf]
  %v34 = vld [vmem:[%s1 + $0x2c] sm:$0xf]
  %v35 = vld [vmem:[%s1 + $0x30] sm:$0xf]
  %v36 = vld [vmem:[%s1 + $0x34] sm:$0xf]
  %v37 = vld [vmem:[%s1 + $0x38] sm:$0xf]
  %v38 = vld [vmem:[%s1 + $0x3c] sm:$0xf]
  %v47 = vunpack.c.l.b16 %v15
  %v48 = vunpack.c.l.b16 %v16
  %v49 = vunpack.c.l.b16 %v17
  %v50 = vunpack.c.l.b16 %v18
  %v51 = vunpack.c.l.b16 %v19
  %v52 = vunpack.c.l.b16 %v20
  %v53 = vunpack.c.l.b16 %v21
  %v54 = vunpack.c.l.b16 %v22
  %v55 = vpack.c.b16 %v48, %v47
  %v56 = vpack.c.b16 %v50, %v49
  %v57 = vpack.c.b16 %v52, %v51
  %v58 = vpack.c.b16 %v54, %v53
  %vm59 = vsmask.f32 7424
  %v61 = vshrl.u32 %v55, 16
  %v63 = vshll.u32 %v55, 16
  %v65 = vrot.slane %v63, 1
  %v66 = vor.u32 %v61, %v65
  %v68 = vshll.u32 %v56, 16
  %v70 = vrot.slane %v68, 1
  %v71 = vsel %vm59, %v66, %v70
  %v72 = vshrl.u32 %v56, 16
  %v74 = vor.u32 %v72, %v70
  %v76 = vshll.u32 %v57, 16
  %v78 = vrot.slane %v76, 1
  %v79 = vsel %vm59, %v74, %v78
  %v80 = vshrl.u32 %v57, 16
  %v82 = vor.u32 %v80, %v78
  %v84 = vshll.u32 %v58, 16
  %v86 = vrot.slane %v84, 1
  %v87 = vsel %vm59, %v82, %v86
  %v88 = vshrl.u32 %v58, 16
  %v90 = vor.u32 %v88, %v86
  %vm95 = vcmask 1047552
  %vm96 = vmand %vm95, %vm59
  %v97 = vsel %vm96, %v90, 0
  %s98 = scalar_lea.vmem %s1, 64
  %v99 = vld [vmem:[%s98] sm:$0xf]
  %v100 = vld [vmem:[%s98 + $0x4] sm:$0xf]
  %v101 = vld [vmem:[%s98 + $0x8] sm:$0xf]
  %v102 = vld [vmem:[%s98 + $0xc] sm:$0xf]
  %v103 = vld [vmem:[%s98 + $0x10] sm:$0xf]
  %v104 = vld [vmem:[%s98 + $0x14] sm:$0xf]
  %v105 = vld [vmem:[%s98 + $0x18] sm:$0xf]
  %v106 = vld [vmem:[%s98 + $0x1c] sm:$0xf]
  %v107 = vld [vmem:[%s98 + $0x20] sm:$0xf]
  %v108 = vld [vmem:[%s98 + $0x24] sm:$0xf]
  %v109 = vld [vmem:[%s98 + $0x28] sm:$0xf]
  %v110 = vld [vmem:[%s98 + $0x2c] sm:$0xf]
  %v111 = vld [vmem:[%s98 + $0x30] sm:$0xf]
  %v112 = vld [vmem:[%s98 + $0x34] sm:$0xf]
  %v113 = vld [vmem:[%s98 + $0x38] sm:$0xf]
  %v114 = vld [vmem:[%s98 + $0x3c] sm:$0xf]
  %v131 = vunpack.c.l.b16 %v99
  %v132 = vunpack.c.l.b16 %v100
  %v133 = vunpack.c.l.b16 %v101
  %v134 = vunpack.c.l.b16 %v102
  %v135 = vunpack.c.l.b16 %v103
  %v136 = vunpack.c.l.b16 %v104
  %v137 = vunpack.c.l.b16 %v105
  %v138 = vunpack.c.l.b16 %v106
  %v139 = vunpack.c.l.b16 %v107
  %v140 = vunpack.c.l.b16 %v108
  %v141 = vunpack.c.l.b16 %v109
  %v142 = vunpack.c.l.b16 %v110
  %v143 = vunpack.c.l.b16 %v111
  %v144 = vunpack.c.l.b16 %v112
  %v145 = vunpack.c.l.b16 %v113
  %v146 = vunpack.c.l.b16 %v114
  %v147 = vpack.c.b16 %v132, %v131
  %v148 = vpack.c.b16 %v134, %v133
  %v149 = vpack.c.b16 %v136, %v135
  %v150 = vpack.c.b16 %v138, %v137
  %v151 = vpack.c.b16 %v140, %v139
  %v152 = vpack.c.b16 %v142, %v141
  %v153 = vpack.c.b16 %v144, %v143
  %v154 = vpack.c.b16 %v146, %v145
  %163 = vmatprep.subr.bf16.mxu0 0
  %164 = vmatpush1.bf16.msra.mxu0 %v147
  %165 = vmatprep.subr.bf16.mxu0 0
  %166 = vmatpush1.bf16.msra.mxu0 %v148
  %167 = vmatprep.subr.bf16.mxu0 0
  %168 = vmatpush1.bf16.msra.mxu0 %v149
  %169 = vmatprep.subr.bf16.mxu0 0
  %170 = vmatpush1.bf16.msra.mxu0 %v150
  %171 = vmatprep.subr.bf16.mxu0 0
  %172 = vmatpush1.bf16.msra.mxu0 %v151
  %173 = vmatprep.subr.bf16.mxu0 0
  %174 = vmatpush1.bf16.msra.mxu0 %v152
  %175 = vmatprep.subr.bf16.mxu0 0
  %176 = vmatpush1.bf16.msra.mxu0 %v153
  %177 = vmatprep.subr.bf16.mxu0 0
  %178 = vmatpush1.bf16.msra.mxu0 %v154
  %179 = vmatprep.subr.bf16.mxu0 0
  %180 = vmatpush1.bf16.msra.mxu0 0
  %181 = vmatprep.subr.bf16.mxu0 0
  %182 = vmatpush1.bf16.msra.mxu0 0
  %183 = vmatprep.subr.bf16.mxu0 0
  %184 = vmatpush1.bf16.msra.mxu0 0
  %185 = vmatprep.subr.bf16.mxu0 0
  %186 = vmatpush1.bf16.msra.mxu0 0
  %187 = vmatprep.subr.bf16.mxu0 0
  %188 = vmatpush1.bf16.msra.mxu0 0
  %189 = vmatprep.subr.bf16.mxu0 0
  %190 = vmatpush1.bf16.msra.mxu0 0
  %191 = vmatprep.subr.bf16.mxu0 0
  %192 = vmatpush1.bf16.msra.mxu0 0
  %193 = vmatprep.subr.bf16.mxu0 0
  %194 = vmatpush1.bf16.msra.mxu0 0
  %195 = vmatprep.mubr.bf16.mxu0 0
  %196 = vmatmul.mubr.bf16.gmra.mrb[0].mxu0 %v71
  %v197 = vpop.f32.mrb[0].mxu0
  %v198 = vadd.f32 0.0, %v197
  %v199 = vpop.f32.mrb[0].mxu0
  %v200 = vpop.f32.mrb[0].mxu0
  %v201 = vadd.f32 0.0, %v200
  %v202 = vpop.f32.mrb[0].mxu0
  %203 = vmatprep.mubr.bf16.mxu0 0
  %204 = vmatmul.mubr.bf16.gmra.mrb[0].mxu0 %v79
  %v205 = vpop.f32.mrb[0].mxu0
  %v206 = vadd.f32 0.0, %v205
  %v207 = vpop.f32.mrb[0].mxu0
  %v208 = vpop.f32.mrb[0].mxu0
  %v209 = vadd.f32 0.0, %v208
  %v210 = vpop.f32.mrb[0].mxu0
  %211 = vmatprep.mubr.bf16.mxu0 0
  %212 = vmatmul.mubr.bf16.gmra.mrb[0].mxu0 %v87
  %v213 = vpop.f32.mrb[0].mxu0
  %v214 = vadd.f32 0.0, %v213
  %v215 = vpop.f32.mrb[0].mxu0
  %v216 = vpop.f32.mrb[0].mxu0
  %v217 = vadd.f32 0.0, %v216
  %v218 = vpop.f32.mrb[0].mxu0
  %219 = vmatprep.mubr.bf16.mxu0 0
  %220 = vmatmul.mubr.bf16.gmra.mrb[0].mxu0 %v97
  %v221 = vpop.f32.mrb[0].mxu0
  %v222 = vadd.f32 0.0, %v221
  %v223 = vpop.f32.mrb[0].mxu0
  %v224 = vpop.f32.mrb[0].mxu0
  %v225 = vadd.f32 0.0, %v224
  %v226 = vpop.f32.mrb[0].mxu0
  %227 = vdwg.mxu0
  %v248 = vunpack.c.l.b16 %v23
  %v249 = vunpack.c.l.b16 %v24
  %v250 = vunpack.c.l.b16 %v25
  %v251 = vunpack.c.l.b16 %v26
  %v252 = vunpack.c.l.b16 %v27
  %v253 = vunpack.c.l.b16 %v28
  %v254 = vunpack.c.l.b16 %v29
  %v255 = vunpack.c.l.b16 %v30
  %v256 = vunpack.c.l.b16 %v31
  %v257 = vunpack.c.l.b16 %v32
  %v258 = vunpack.c.l.b16 %v33
  %v259 = vunpack.c.l.b16 %v34
  %v260 = vunpack.c.l.b16 %v35
  %v261 = vunpack.c.l.b16 %v36
  %v262 = vunpack.c.l.b16 %v37
  %v263 = vunpack.c.l.b16 %v38
  %v264 = vpack.c.b16 %v249, %v248
  %v265 = vpack.c.b16 %v251, %v250
  %v266 = vpack.c.b16 %v253, %v252
  %v267 = vpack.c.b16 %v255, %v254
  %v268 = vpack.c.b16 %v257, %v256
  %v269 = vpack.c.b16 %v259, %v258
  %v270 = vpack.c.b16 %v261, %v260
  %v271 = vpack.c.b16 %v263, %v262
  %280 = vmatprep.subr.bf16.mxu0 0
  %281 = vmatpush1.bf16.msra.mxu0 %v264
  %282 = vmatprep.subr.bf16.mxu0 0
  %283 = vmatpush1.bf16.msra.mxu0 %v265
  %284 = vmatprep.subr.bf16.mxu0 0
  %285 = vmatpush1.bf16.msra.mxu0 %v266
  %286 = vmatprep.subr.bf16.mxu0 0
  %287 = vmatpush1.bf16.msra.mxu0 %v267
  %288 = vmatprep.subr.bf16.mxu0 0
  %289 = vmatpush1.bf16.msra.mxu0 %v268
  %290 = vmatprep.subr.bf16.mxu0 0
  %291 = vmatpush1.bf16.msra.mxu0 %v269
  %292 = vmatprep.subr.bf16.mxu0 0
  %293 = vmatpush1.bf16.msra.mxu0 %v270
  %294 = vmatprep.subr.bf16.mxu0 0
  %295 = vmatpush1.bf16.msra.mxu0 %v271
  %296 = vmatprep.subr.bf16.mxu0 0
  %297 = vmatpush1.bf16.msra.mxu0 0
  %298 = vmatprep.subr.bf16.mxu0 0
  %299 = vmatpush1.bf16.msra.mxu0 0
  %300 = vmatprep.subr.bf16.mxu0 0
  %301 = vmatpush1.bf16.msra.mxu0 0
  %302 = vmatprep.subr.bf16.mxu0 0
  %303 = vmatpush1.bf16.msra.mxu0 0
  %304 = vmatprep.subr.bf16.mxu0 0
  %305 = vmatpush1.bf16.msra.mxu0 0
  %306 = vmatprep.subr.bf16.mxu0 0
  %307 = vmatpush1.bf16.msra.mxu0 0
  %308 = vmatprep.subr.bf16.mxu0 0
  %309 = vmatpush1.bf16.msra.mxu0 0
  %310 = vmatprep.subr.bf16.mxu0 0
  %311 = vmatpush1.bf16.msra.mxu0 0
  %312 = vmatprep.mubr.bf16.mxu0 0
  %313 = vmatmul.mubr.bf16.gmra.mrb[0].mxu0 %v55
  %v314 = vpop.f32.mrb[0].mxu0
  %v315 = vadd.f32 %v198, %v314
  %v316 = vpop.f32.mrb[0].mxu0
  %v317 = vpop.f32.mrb[0].mxu0
  %v318 = vadd.f32 %v201, %v317
  %v319 = vpop.f32.mrb[0].mxu0
  %320 = vmatprep.mubr.bf16.mxu0 0
  %321 = vmatmul.mubr.bf16.gmra.mrb[0].mxu0 %v56
  %v322 = vpop.f32.mrb[0].mxu0
  %v323 = vadd.f32 %v206, %v322
  %v324 = vpop.f32.mrb[0].mxu0
  %v325 = vpop.f32.mrb[0].mxu0
  %v326 = vadd.f32 %v209, %v325
  %v327 = vpop.f32.mrb[0].mxu0
  %328 = vmatprep.mubr.bf16.mxu0 0
  %329 = vmatmul.mubr.bf16.gmra.mrb[0].mxu0 %v57
  %v330 = vpop.f32.mrb[0].mxu0
  %v331 = vadd.f32 %v214, %v330
  %v332 = vpop.f32.mrb[0].mxu0
  %v333 = vpop.f32.mrb[0].mxu0
  %v334 = vadd.f32 %v217, %v333
  %v335 = vpop.f32.mrb[0].mxu0
  %336 = vmatprep.mubr.bf16.mxu0 0
  %337 = vmatmul.mubr.bf16.gmra.mrb[0].mxu0 %v58
  %v338 = vpop.f32.mrb[0].mxu0
  %v339 = vadd.f32 %v222, %v338
  %v340 = vpop.f32.mrb[0].mxu0
  %v341 = vpop.f32.mrb[0].mxu0
  %v342 = vadd.f32 %v225, %v341
  %v343 = vpop.f32.mrb[0].mxu0
  %344 = vdwg.mxu0
  %vm345 = vcmask 1046528
  %v346 = vrot.slane %v55, 1
  %v347 = vrot.slane %v56, 1
  %v348 = vsel %vm345, %v346, %v347
  %v349 = vrot.slane %v57, 1
  %v350 = vsel %vm345, %v347, %v349
  %v351 = vrot.slane %v58, 1
  %v352 = vsel %vm345, %v349, %v351
  %vm356 = vcmask 1046528
  %v359 = vsel %vm356, %v351, 0
  %s361 = scalar_lea.vmem %s1, 128
  %v362 = vld [vmem:[%s361] sm:$0xf]
  %v363 = vld [vmem:[%s361 + $0x4] sm:$0xf]
  %v364 = vld [vmem:[%s361 + $0x8] sm:$0xf]
  %v365 = vld [vmem:[%s361 + $0xc] sm:$0xf]
  %v366 = vld [vmem:[%s361 + $0x10] sm:$0xf]
  %v367 = vld [vmem:[%s361 + $0x14] sm:$0xf]
  %v368 = vld [vmem:[%s361 + $0x18] sm:$0xf]
  %v369 = vld [vmem:[%s361 + $0x1c] sm:$0xf]
  %v370 = vld [vmem:[%s361 + $0x20] sm:$0xf]
  %v371 = vld [vmem:[%s361 + $0x24] sm:$0xf]
  %v372 = vld [vmem:[%s361 + $0x28] sm:$0xf]
  %v373 = vld [vmem:[%s361 + $0x2c] sm:$0xf]
  %v374 = vld [vmem:[%s361 + $0x30] sm:$0xf]
  %v375 = vld [vmem:[%s361 + $0x34] sm:$0xf]
  %v376 = vld [vmem:[%s361 + $0x38] sm:$0xf]
  %v377 = vld [vmem:[%s361 + $0x3c] sm:$0xf]
  %v394 = vunpack.c.l.b16 %v362
  %v395 = vunpack.c.l.b16 %v363
  %v396 = vunpack.c.l.b16 %v364
  %v397 = vunpack.c.l.b16 %v365
  %v398 = vunpack.c.l.b16 %v366
  %v399 = vunpack.c.l.b16 %v367
  %v400 = vunpack.c.l.b16 %v368
  %v401 = vunpack.c.l.b16 %v369
  %v402 = vunpack.c.l.b16 %v370
  %v403 = vunpack.c.l.b16 %v371
  %v404 = vunpack.c.l.b16 %v372
  %v405 = vunpack.c.l.b16 %v373
  %v406 = vunpack.c.l.b16 %v374
  %v407 = vunpack.c.l.b16 %v375
  %v408 = vunpack.c.l.b16 %v376
  %v409 = vunpack.c.l.b16 %v377
  %v410 = vpack.c.b16 %v395, %v394
  %v411 = vpack.c.b16 %v397, %v396
  %v412 = vpack.c.b16 %v399, %v398
  %v413 = vpack.c.b16 %v401, %v400
  %v414 = vpack.c.b16 %v403, %v402
  %v415 = vpack.c.b16 %v405, %v404
  %v416 = vpack.c.b16 %v407, %v406
  %v417 = vpack.c.b16 %v409, %v408
  %426 = vmatprep.subr.bf16.mxu0 0
  %427 = vmatpush1.bf16.msra.mxu0 %v410
  %428 = vmatprep.subr.bf16.mxu0 0
  %429 = vmatpush1.bf16.msra.mxu0 %v411
  %430 = vmatprep.subr.bf16.mxu0 0
  %431 = vmatpush1.bf16.msra.mxu0 %v412
  %432 = vmatprep.subr.bf16.mxu0 0
  %433 = vmatpush1.bf16.msra.mxu0 %v413
  %434 = vmatprep.subr.bf16.mxu0 0
  %435 = vmatpush1.bf16.msra.mxu0 %v414
  %436 = vmatprep.subr.bf16.mxu0 0
  %437 = vmatpush1.bf16.msra.mxu0 %v415
  %438 = vmatprep.subr.bf16.mxu0 0
  %439 = vmatpush1.bf16.msra.mxu0 %v416
  %440 = vmatprep.subr.bf16.mxu0 0
  %441 = vmatpush1.bf16.msra.mxu0 %v417
  %442 = vmatprep.subr.bf16.mxu0 0
  %443 = vmatpush1.bf16.msra.mxu0 0
  %444 = vmatprep.subr.bf16.mxu0 0
  %445 = vmatpush1.bf16.msra.mxu0 0
  %446 = vmatprep.subr.bf16.mxu0 0
  %447 = vmatpush1.bf16.msra.mxu0 0
  %448 = vmatprep.subr.bf16.mxu0 0
  %449 = vmatpush1.bf16.msra.mxu0 0
  %450 = vmatprep.subr.bf16.mxu0 0
  %451 = vmatpush1.bf16.msra.mxu0 0
  %452 = vmatprep.subr.bf16.mxu0 0
  %453 = vmatpush1.bf16.msra.mxu0 0
  %454 = vmatprep.subr.bf16.mxu0 0
  %455 = vmatpush1.bf16.msra.mxu0 0
  %456 = vmatprep.subr.bf16.mxu0 0
  %457 = vmatpush1.bf16.msra.mxu0 0
  %458 = vmatprep.mubr.bf16.mxu0 0
  %459 = vmatmul.mubr.bf16.gmra.mrb[0].mxu0 %v348
  %v460 = vpop.f32.mrb[0].mxu0
  %v461 = vadd.f32 0.0, %v460
  %v462 = vpop.f32.mrb[0].mxu0
  %v463 = vpop.f32.mrb[0].mxu0
  %v464 = vadd.f32 0.0, %v463
  %v465 = vpop.f32.mrb[0].mxu0
  %466 = vmatprep.mubr.bf16.mxu0 0
  %467 = vmatmul.mubr.bf16.gmra.mrb[0].mxu0 %v350
  %v468 = vpop.f32.mrb[0].mxu0
  %v469 = vadd.f32 0.0, %v468
  %v470 = vpop.f32.mrb[0].mxu0
  %v471 = vpop.f32.mrb[0].mxu0
  %v472 = vadd.f32 0.0, %v471
  %v473 = vpop.f32.mrb[0].mxu0
  %474 = vmatprep.mubr.bf16.mxu0 0
  %475 = vmatmul.mubr.bf16.gmra.mrb[0].mxu0 %v352
  %v476 = vpop.f32.mrb[0].mxu0
  %v477 = vadd.f32 0.0, %v476
  %v478 = vpop.f32.mrb[0].mxu0
  %v479 = vpop.f32.mrb[0].mxu0
  %v480 = vadd.f32 0.0, %v479
  %v481 = vpop.f32.mrb[0].mxu0
  %482 = vmatprep.mubr.bf16.mxu0 0
  %483 = vmatmul.mubr.bf16.gmra.mrb[0].mxu0 %v359
  %v484 = vpop.f32.mrb[0].mxu0
  %v485 = vadd.f32 0.0, %v484
  %v486 = vpop.f32.mrb[0].mxu0
  %v487 = vpop.f32.mrb[0].mxu0
  %v488 = vadd.f32 0.0, %v487
  %v489 = vpop.f32.mrb[0].mxu0
  %490 = vdwg.mxu0
  %v491 = vadd.f32 %v315, %v461
  %v492 = vadd.f32 %v318, %v464
  %v493 = vadd.f32 %v323, %v469
  %v494 = vadd.f32 %v326, %v472
  %v495 = vadd.f32 %v331, %v477
  %v496 = vadd.f32 %v334, %v480
  %v497 = vadd.f32 %v339, %v485
  %v498 = vadd.f32 %v342, %v488
  %vm499 = vcmask 1045504
  %v500 = vrot.slane %v55, 2
  %v501 = vrot.slane %v56, 2
  %v502 = vsel %vm499, %v500, %v501
  %v503 = vrot.slane %v57, 2
  %v504 = vsel %vm499, %v501, %v503
  %v505 = vrot.slane %v58, 2
  %v506 = vsel %vm499, %v503, %v505
  %vm510 = vcmask 1045504
  %v512 = vsel %vm510, %v505, 0
  %s514 = scalar_lea.vmem %s1, 192
  %v515 = vld [vmem:[%s514] sm:$0xf]
  %v516 = vld [vmem:[%s514 + $0x4] sm:$0xf]
  %v517 = vld [vmem:[%s514 + $0x8] sm:$0xf]
  %v518 = vld [vmem:[%s514 + $0xc] sm:$0xf]
  %v519 = vld [vmem:[%s514 + $0x10] sm:$0xf]
  %v520 = vld [vmem:[%s514 + $0x14] sm:$0xf]
  %v521 = vld [vmem:[%s514 + $0x18] sm:$0xf]
  %v522 = vld [vmem:[%s514 + $0x1c] sm:$0xf]
  %v523 = vld [vmem:[%s514 + $0x20] sm:$0xf]
  %v524 = vld [vmem:[%s514 + $0x24] sm:$0xf]
  %v525 = vld [vmem:[%s514 + $0x28] sm:$0xf]
  %v526 = vld [vmem:[%s514 + $0x2c] sm:$0xf]
  %v527 = vld [vmem:[%s514 + $0x30] sm:$0xf]
  %v528 = vld [vmem:[%s514 + $0x34] sm:$0xf]
  %v529 = vld [vmem:[%s514 + $0x38] sm:$0xf]
  %v530 = vld [vmem:[%s514 + $0x3c] sm:$0xf]
  %v547 = vunpack.c.l.b16 %v515
  %v548 = vunpack.c.l.b16 %v516
  %v549 = vunpack.c.l.b16 %v517
  %v550 = vunpack.c.l.b16 %v518
  %v551 = vunpack.c.l.b16 %v519
  %v552 = vunpack.c.l.b16 %v520
  %v553 = vunpack.c.l.b16 %v521
  %v554 = vunpack.c.l.b16 %v522
  %v555 = vunpack.c.l.b16 %v523
  %v556 = vunpack.c.l.b16 %v524
  %v557 = vunpack.c.l.b16 %v525
  %v558 = vunpack.c.l.b16 %v526
  %v559 = vunpack.c.l.b16 %v527
  %v560 = vunpack.c.l.b16 %v528
  %v561 = vunpack.c.l.b16 %v529
  %v562 = vunpack.c.l.b16 %v530
  %v563 = vpack.c.b16 %v548, %v547
  %v564 = vpack.c.b16 %v550, %v549
  %v565 = vpack.c.b16 %v552, %v551
  %v566 = vpack.c.b16 %v554, %v553
  %v567 = vpack.c.b16 %v556, %v555
  %v568 = vpack.c.b16 %v558, %v557
  %v569 = vpack.c.b16 %v560, %v559
  %v570 = vpack.c.b16 %v562, %v561
  %579 = vmatprep.subr.bf16.mxu0 0
  %580 = vmatpush1.bf16.msra.mxu0 %v563
  %581 = vmatprep.subr.bf16.mxu0 0
  %582 = vmatpush1.bf16.msra.mxu0 %v564
  %583 = vmatprep.subr.bf16.mxu0 0
  %584 = vmatpush1.bf16.msra.mxu0 %v565
  %585 = vmatprep.subr.bf16.mxu0 0
  %586 = vmatpush1.bf16.msra.mxu0 %v566
  %587 = vmatprep.subr.bf16.mxu0 0
  %588 = vmatpush1.bf16.msra.mxu0 %v567
  %589 = vmatprep.subr.bf16.mxu0 0
  %590 = vmatpush1.bf16.msra.mxu0 %v568
  %591 = vmatprep.subr.bf16.mxu0 0
  %592 = vmatpush1.bf16.msra.mxu0 %v569
  %593 = vmatprep.subr.bf16.mxu0 0
  %594 = vmatpush1.bf16.msra.mxu0 %v570
  %595 = vmatprep.subr.bf16.mxu0 0
  %596 = vmatpush1.bf16.msra.mxu0 0
  %597 = vmatprep.subr.bf16.mxu0 0
  %598 = vmatpush1.bf16.msra.mxu0 0
  %599 = vmatprep.subr.bf16.mxu0 0
  %600 = vmatpush1.bf16.msra.mxu0 0
  %601 = vmatprep.subr.bf16.mxu0 0
  %602 = vmatpush1.bf16.msra.mxu0 0
  %603 = vmatprep.subr.bf16.mxu0 0
  %604 = vmatpush1.bf16.msra.mxu0 0
  %605 = vmatprep.subr.bf16.mxu0 0
  %606 = vmatpush1.bf16.msra.mxu0 0
  %607 = vmatprep.subr.bf16.mxu0 0
  %608 = vmatpush1.bf16.msra.mxu0 0
  %609 = vmatprep.subr.bf16.mxu0 0
  %610 = vmatpush1.bf16.msra.mxu0 0
  %611 = vmatprep.mubr.bf16.mxu0 0
  %612 = vmatmul.mubr.bf16.gmra.mrb[0].mxu0 %v502
  %v613 = vpop.f32.mrb[0].mxu0
  %v614 = vadd.f32 0.0, %v613
  %v615 = vpop.f32.mrb[0].mxu0
  %v616 = vpop.f32.mrb[0].mxu0
  %v617 = vadd.f32 0.0, %v616
  %v618 = vpop.f32.mrb[0].mxu0
  %619 = vmatprep.mubr.bf16.mxu0 0
  %620 = vmatmul.mubr.bf16.gmra.mrb[0].mxu0 %v504
  %v621 = vpop.f32.mrb[0].mxu0
  %v622 = vadd.f32 0.0, %v621
  %v623 = vpop.f32.mrb[0].mxu0
  %v624 = vpop.f32.mrb[0].mxu0
  %v625 = vadd.f32 0.0, %v624
  %v626 = vpop.f32.mrb[0].mxu0
  %627 = vmatprep.mubr.bf16.mxu0 0
  %628 = vmatmul.mubr.bf16.gmra.mrb[0].mxu0 %v506
  %v629 = vpop.f32.mrb[0].mxu0
  %v630 = vadd.f32 0.0, %v629
  %v631 = vpop.f32.mrb[0].mxu0
  %v632 = vpop.f32.mrb[0].mxu0
  %v633 = vadd.f32 0.0, %v632
  %v634 = vpop.f32.mrb[0].mxu0
  %635 = vmatprep.mubr.bf16.mxu0 0
  %636 = vmatmul.mubr.bf16.gmra.mrb[0].mxu0 %v512
  %v637 = vpop.f32.mrb[0].mxu0
  %v638 = vadd.f32 0.0, %v637
  %v639 = vpop.f32.mrb[0].mxu0
  %v640 = vpop.f32.mrb[0].mxu0
  %v641 = vadd.f32 0.0, %v640
  %v642 = vpop.f32.mrb[0].mxu0
  %643 = vdwg.mxu0
  %v644 = vadd.f32 %v491, %v614
  %v645 = vadd.f32 %v492, %v617
  %v646 = vadd.f32 %v493, %v622
  %v647 = vadd.f32 %v494, %v625
  %v648 = vadd.f32 %v495, %v630
  %v649 = vadd.f32 %v496, %v633
  %v650 = vadd.f32 %v497, %v638
  %v651 = vadd.f32 %v498, %v641
  %vm652 = vsmask.f32 5376
  %v653 = vrot.slane %v61, 2
  %v654 = vrot.slane %v63, 3
  %v655 = vor.u32 %v653, %v654
  %v656 = vrot.slane %v72, 2
  %v657 = vrot.slane %v68, 3
  %v658 = vor.u32 %v656, %v657
  %v659 = vsel %vm652, %v655, %v658
  %v660 = vrot.slane %v80, 2
  %v661 = vrot.slane %v76, 3
  %v662 = vor.u32 %v660, %v661
  %v663 = vsel %vm652, %v658, %v662
  %v664 = vrot.slane %v88, 2
  %v665 = vrot.slane %v84, 3
  %v666 = vor.u32 %v664, %v665
  %v667 = vsel %vm652, %v662, %v666
  %vm672 = vmand %vm499, %vm652
  %v673 = vsel %vm672, %v666, 0
  %s674 = scalar_lea.vmem %s1, 256
  %v675 = vld [vmem:[%s674] sm:$0xf]
  %v676 = vld [vmem:[%s674 + $0x4] sm:$0xf]
  %v677 = vld [vmem:[%s674 + $0x8] sm:$0xf]
  %v678 = vld [vmem:[%s674 + $0xc] sm:$0xf]
  %v679 = vld [vmem:[%s674 + $0x10] sm:$0xf]
  %v680 = vld [vmem:[%s674 + $0x14] sm:$0xf]
  %v681 = vld [vmem:[%s674 + $0x18] sm:$0xf]
  %v682 = vld [vmem:[%s674 + $0x1c] sm:$0xf]
  %v683 = vld [vmem:[%s674 + $0x20] sm:$0xf]
  %v684 = vld [vmem:[%s674 + $0x24] sm:$0xf]
  %v685 = vld [vmem:[%s674 + $0x28] sm:$0xf]
  %v686 = vld [vmem:[%s674 + $0x2c] sm:$0xf]
  %v687 = vld [vmem:[%s674 + $0x30] sm:$0xf]
  %v688 = vld [vmem:[%s674 + $0x34] sm:$0xf]
  %v689 = vld [vmem:[%s674 + $0x38] sm:$0xf]
  %v690 = vld [vmem:[%s674 + $0x3c] sm:$0xf]
  %v707 = vunpack.c.l.b16 %v675
  %v708 = vunpack.c.l.b16 %v676
  %v709 = vunpack.c.l.b16 %v677
  %v710 = vunpack.c.l.b16 %v678
  %v711 = vunpack.c.l.b16 %v679
  %v712 = vunpack.c.l.b16 %v680
  %v713 = vunpack.c.l.b16 %v681
  %v714 = vunpack.c.l.b16 %v682
  %v715 = vunpack.c.l.b16 %v683
  %v716 = vunpack.c.l.b16 %v684
  %v717 = vunpack.c.l.b16 %v685
  %v718 = vunpack.c.l.b16 %v686
  %v719 = vunpack.c.l.b16 %v687
  %v720 = vunpack.c.l.b16 %v688
  %v721 = vunpack.c.l.b16 %v689
  %v722 = vunpack.c.l.b16 %v690
  %v723 = vpack.c.b16 %v708, %v707
  %v724 = vpack.c.b16 %v710, %v709
  %v725 = vpack.c.b16 %v712, %v711
  %v726 = vpack.c.b16 %v714, %v713
  %v727 = vpack.c.b16 %v716, %v715
  %v728 = vpack.c.b16 %v718, %v717
  %v729 = vpack.c.b16 %v720, %v719
  %v730 = vpack.c.b16 %v722, %v721
  %739 = vmatprep.subr.bf16.mxu0 0
  %740 = vmatpush1.bf16.msra.mxu0 %v723
  %741 = vmatprep.subr.bf16.mxu0 0
  %742 = vmatpush1.bf16.msra.mxu0 %v724
  %743 = vmatprep.subr.bf16.mxu0 0
  %744 = vmatpush1.bf16.msra.mxu0 %v725
  %745 = vmatprep.subr.bf16.mxu0 0
  %746 = vmatpush1.bf16.msra.mxu0 %v726
  %747 = vmatprep.subr.bf16.mxu0 0
  %748 = vmatpush1.bf16.msra.mxu0 %v727
  %749 = vmatprep.subr.bf16.mxu0 0
  %750 = vmatpush1.bf16.msra.mxu0 %v728
  %751 = vmatprep.subr.bf16.mxu0 0
  %752 = vmatpush1.bf16.msra.mxu0 %v729
  %753 = vmatprep.subr.bf16.mxu0 0
  %754 = vmatpush1.bf16.msra.mxu0 %v730
  %755 = vmatprep.subr.bf16.mxu0 0
  %756 = vmatpush1.bf16.msra.mxu0 0
  %757 = vmatprep.subr.bf16.mxu0 0
  %758 = vmatpush1.bf16.msra.mxu0 0
  %759 = vmatprep.subr.bf16.mxu0 0
  %760 = vmatpush1.bf16.msra.mxu0 0
  %761 = vmatprep.subr.bf16.mxu0 0
  %762 = vmatpush1.bf16.msra.mxu0 0
  %763 = vmatprep.subr.bf16.mxu0 0
  %764 = vmatpush1.bf16.msra.mxu0 0
  %765 = vmatprep.subr.bf16.mxu0 0
  %766 = vmatpush1.bf16.msra.mxu0 0
  %767 = vmatprep.subr.bf16.mxu0 0
  %768 = vmatpush1.bf16.msra.mxu0 0
  %769 = vmatprep.subr.bf16.mxu0 0
  %770 = vmatpush1.bf16.msra.mxu0 0
  %771 = vmatprep.mubr.bf16.mxu0 0
  %772 = vmatmul.mubr.bf16.gmra.mrb[0].mxu0 %v659
  %v773 = vpop.f32.mrb[0].mxu0
  %v774 = vadd.f32 0.0, %v773
  %v775 = vpop.f32.mrb[0].mxu0
  %v776 = vpop.f32.mrb[0].mxu0
  %v777 = vadd.f32 0.0, %v776
  %v778 = vpop.f32.mrb[0].mxu0
  %779 = vmatprep.mubr.bf16.mxu0 0
  %780 = vmatmul.mubr.bf16.gmra.mrb[0].mxu0 %v663
  %v781 = vpop.f32.mrb[0].mxu0
  %v782 = vadd.f32 0.0, %v781
  %v783 = vpop.f32.mrb[0].mxu0
  %v784 = vpop.f32.mrb[0].mxu0
  %v785 = vadd.f32 0.0, %v784
  %v786 = vpop.f32.mrb[0].mxu0
  %787 = vmatprep.mubr.bf16.mxu0 0
  %788 = vmatmul.mubr.bf16.gmra.mrb[0].mxu0 %v667
  %v789 = vpop.f32.mrb[0].mxu0
  %v790 = vadd.f32 0.0, %v789
  %v791 = vpop.f32.mrb[0].mxu0
  %v792 = vpop.f32.mrb[0].mxu0
  %v793 = vadd.f32 0.0, %v792
  %v794 = vpop.f32.mrb[0].mxu0
  %795 = vmatprep.mubr.bf16.mxu0 0
  %796 = vmatmul.mubr.bf16.gmra.mrb[0].mxu0 %v673
  %v797 = vpop.f32.mrb[0].mxu0
  %v798 = vadd.f32 0.0, %v797
  %v799 = vpop.f32.mrb[0].mxu0
  %v800 = vpop.f32.mrb[0].mxu0
  %v801 = vadd.f32 0.0, %v800
  %v802 = vpop.f32.mrb[0].mxu0
  %803 = vdwg.mxu0
  %v804 = vadd.f32 %v644, %v774
  %v805 = vadd.f32 %v645, %v777
  %v806 = vadd.f32 %v646, %v782
  %v807 = vadd.f32 %v647, %v785
  %v808 = vadd.f32 %v648, %v790
  %v809 = vadd.f32 %v649, %v793
  %v810 = vadd.f32 %v650, %v798
  %v811 = vadd.f32 %v651, %v801
  %vm812 = vcmask 1044480
  %v813 = vrot.slane %v55, 3
  %v814 = vrot.slane %v56, 3
  %v815 = vsel %vm812, %v813, %v814
  %v816 = vrot.slane %v57, 3
  %v817 = vsel %vm812, %v814, %v816
  %v818 = vrot.slane %v58, 3
  %v819 = vsel %vm812, %v816, %v818
  %vm823 = vcmask 1044480
  %v825 = vsel %vm823, %v818, 0
  %s827 = scalar_lea.vmem %s1, 320
  %v828 = vld [vmem:[%s827] sm:$0xf]
  %v829 = vld [vmem:[%s827 + $0x4] sm:$0xf]
  %v830 = vld [vmem:[%s827 + $0x8] sm:$0xf]
  %v831 = vld [vmem:[%s827 + $0xc] sm:$0xf]
  %v832 = vld [vmem:[%s827 + $0x10] sm:$0xf]
  %v833 = vld [vmem:[%s827 + $0x14] sm:$0xf]
  %v834 = vld [vmem:[%s827 + $0x18] sm:$0xf]
  %v835 = vld [vmem:[%s827 + $0x1c] sm:$0xf]
  %v836 = vld [vmem:[%s827 + $0x20] sm:$0xf]
  %v837 = vld [vmem:[%s827 + $0x24] sm:$0xf]
  %v838 = vld [vmem:[%s827 + $0x28] sm:$0xf]
  %v839 = vld [vmem:[%s827 + $0x2c] sm:$0xf]
  %v840 = vld [vmem:[%s827 + $0x30] sm:$0xf]
  %v841 = vld [vmem:[%s827 + $0x34] sm:$0xf]
  %v842 = vld [vmem:[%s827 + $0x38] sm:$0xf]
  %v843 = vld [vmem:[%s827 + $0x3c] sm:$0xf]
  %v860 = vunpack.c.l.b16 %v828
  %v861 = vunpack.c.l.b16 %v829
  %v862 = vunpack.c.l.b16 %v830
  %v863 = vunpack.c.l.b16 %v831
  %v864 = vunpack.c.l.b16 %v832
  %v865 = vunpack.c.l.b16 %v833
  %v866 = vunpack.c.l.b16 %v834
  %v867 = vunpack.c.l.b16 %v835
  %v868 = vunpack.c.l.b16 %v836
  %v869 = vunpack.c.l.b16 %v837
  %v870 = vunpack.c.l.b16 %v838
  %v871 = vunpack.c.l.b16 %v839
  %v872 = vunpack.c.l.b16 %v840
  %v873 = vunpack.c.l.b16 %v841
  %v874 = vunpack.c.l.b16 %v842
  %v875 = vunpack.c.l.b16 %v843
  %v876 = vpack.c.b16 %v861, %v860
  %v877 = vpack.c.b16 %v863, %v862
  %v878 = vpack.c.b16 %v865, %v864
  %v879 = vpack.c.b16 %v867, %v866
  %v880 = vpack.c.b16 %v869, %v868
  %v881 = vpack.c.b16 %v871, %v870
  %v882 = vpack.c.b16 %v873, %v872
  %v883 = vpack.c.b16 %v875, %v874
  %892 = vmatprep.subr.bf16.mxu0 0
  %893 = vmatpush1.bf16.msra.mxu0 %v876
  %894 = vmatprep.subr.bf16.mxu0 0
  %895 = vmatpush1.bf16.msra.mxu0 %v877
  %896 = vmatprep.subr.bf16.mxu0 0
  %897 = vmatpush1.bf16.msra.mxu0 %v878
  %898 = vmatprep.subr.bf16.mxu0 0
  %899 = vmatpush1.bf16.msra.mxu0 %v879
  %900 = vmatprep.subr.bf16.mxu0 0
  %901 = vmatpush1.bf16.msra.mxu0 %v880
  %902 = vmatprep.subr.bf16.mxu0 0
  %903 = vmatpush1.bf16.msra.mxu0 %v881
  %904 = vmatprep.subr.bf16.mxu0 0
  %905 = vmatpush1.bf16.msra.mxu0 %v882
  %906 = vmatprep.subr.bf16.mxu0 0
  %907 = vmatpush1.bf16.msra.mxu0 %v883
  %908 = vmatprep.subr.bf16.mxu0 0
  %909 = vmatpush1.bf16.msra.mxu0 0
  %910 = vmatprep.subr.bf16.mxu0 0
  %911 = vmatpush1.bf16.msra.mxu0 0
  %912 = vmatprep.subr.bf16.mxu0 0
  %913 = vmatpush1.bf16.msra.mxu0 0
  %914 = vmatprep.subr.bf16.mxu0 0
  %915 = vmatpush1.bf16.msra.mxu0 0
  %916 = vmatprep.subr.bf16.mxu0 0
  %917 = vmatpush1.bf16.msra.mxu0 0
  %918 = vmatprep.subr.bf16.mxu0 0
  %919 = vmatpush1.bf16.msra.mxu0 0
  %920 = vmatprep.subr.bf16.mxu0 0
  %921 = vmatpush1.bf16.msra.mxu0 0
  %922 = vmatprep.subr.bf16.mxu0 0
  %923 = vmatpush1.bf16.msra.mxu0 0
  %924 = vmatprep.mubr.bf16.mxu0 0
  %925 = vmatmul.mubr.bf16.gmra.mrb[0].mxu0 %v815
  %v926 = vpop.f32.mrb[0].mxu0
  %v927 = vadd.f32 0.0, %v926
  %v928 = vpop.f32.mrb[0].mxu0
  %v929 = vpop.f32.mrb[0].mxu0
  %v930 = vadd.f32 0.0, %v929
  %v931 = vpop.f32.mrb[0].mxu0
  %932 = vmatprep.mubr.bf16.mxu0 0
  %933 = vmatmul.mubr.bf16.gmra.mrb[0].mxu0 %v817
  %v934 = vpop.f32.mrb[0].mxu0
  %v935 = vadd.f32 0.0, %v934
  %v936 = vpop.f32.mrb[0].mxu0
  %v937 = vpop.f32.mrb[0].mxu0
  %v938 = vadd.f32 0.0, %v937
  %v939 = vpop.f32.mrb[0].mxu0
  %940 = vmatprep.mubr.bf16.mxu0 0
  %941 = vmatmul.mubr.bf16.gmra.mrb[0].mxu0 %v819
  %v942 = vpop.f32.mrb[0].mxu0
  %v943 = vadd.f32 0.0, %v942
  %v944 = vpop.f32.mrb[0].mxu0
  %v945 = vpop.f32.mrb[0].mxu0
  %v946 = vadd.f32 0.0, %v945
  %v947 = vpop.f32.mrb[0].mxu0
  %948 = vmatprep.mubr.bf16.mxu0 0
  %949 = vmatmul.mubr.bf16.gmra.mrb[0].mxu0 %v825
  %v950 = vpop.f32.mrb[0].mxu0
  %v951 = vadd.f32 0.0, %v950
  %v952 = vpop.f32.mrb[0].mxu0
  %v953 = vpop.f32.mrb[0].mxu0
  %v954 = vadd.f32 0.0, %v953
  %v955 = vpop.f32.mrb[0].mxu0
  %956 = vdwg.mxu0
  %v957 = vadd.f32 %v804, %v927
  %v958 = vadd.f32 %v805, %v930
  %v959 = vadd.f32 %v806, %v935
  %v960 = vadd.f32 %v807, %v938
  %v961 = vadd.f32 %v808, %v943
  %v962 = vadd.f32 %v809, %v946
  %v963 = vadd.f32 %v810, %v951
  %v964 = vadd.f32 %v811, %v954
  %v965 = vpack.c.b16 %v49, %v48
  %v966 = vpack.c.b16 %v51, %v50
  %v967 = vpack.c.b16 %v53, %v52
  %v968 = vpack.c.b16 %v54, %v54
  %vm972 = vcmask 1043456
  %v974 = vsel %vm972, %v968, 0
  %s976 = scalar_lea.vmem %s1, 384
  %v977 = vld [vmem:[%s976] sm:$0xf]
  %v978 = vld [vmem:[%s976 + $0x4] sm:$0xf]
  %v979 = vld [vmem:[%s976 + $0x8] sm:$0xf]
  %v980 = vld [vmem:[%s976 + $0xc] sm:$0xf]
  %v981 = vld [vmem:[%s976 + $0x10] sm:$0xf]
  %v982 = vld [vmem:[%s976 + $0x14] sm:$0xf]
  %v983 = vld [vmem:[%s976 + $0x18] sm:$0xf]
  %v984 = vld [vmem:[%s976 + $0x1c] sm:$0xf]
  %v985 = vld [vmem:[%s976 + $0x20] sm:$0xf]
  %v986 = vld [vmem:[%s976 + $0x24] sm:$0xf]
  %v987 = vld [vmem:[%s976 + $0x28] sm:$0xf]
  %v988 = vld [vmem:[%s976 + $0x2c] sm:$0xf]
  %v989 = vld [vmem:[%s976 + $0x30] sm:$0xf]
  %v990 = vld [vmem:[%s976 + $0x34] sm:$0xf]
  %v991 = vld [vmem:[%s976 + $0x38] sm:$0xf]
  %v992 = vld [vmem:[%s976 + $0x3c] sm:$0xf]
  %v1009 = vunpack.c.l.b16 %v977
  %v1010 = vunpack.c.l.b16 %v978
  %v1011 = vunpack.c.l.b16 %v979
  %v1012 = vunpack.c.l.b16 %v980
  %v1013 = vunpack.c.l.b16 %v981
  %v1014 = vunpack.c.l.b16 %v982
  %v1015 = vunpack.c.l.b16 %v983
  %v1016 = vunpack.c.l.b16 %v984
  %v1017 = vunpack.c.l.b16 %v985
  %v1018 = vunpack.c.l.b16 %v986
  %v1019 = vunpack.c.l.b16 %v987
  %v1020 = vunpack.c.l.b16 %v988
  %v1021 = vunpack.c.l.b16 %v989
  %v1022 = vunpack.c.l.b16 %v990
  %v1023 = vunpack.c.l.b16 %v991
  %v1024 = vunpack.c.l.b16 %v992
  %v1025 = vpack.c.b16 %v1010, %v1009
  %v1026 = vpack.c.b16 %v1012, %v1011
  %v1027 = vpack.c.b16 %v1014, %v1013
  %v1028 = vpack.c.b16 %v1016, %v1015
  %v1029 = vpack.c.b16 %v1018, %v1017
  %v1030 = vpack.c.b16 %v1020, %v1019
  %v1031 = vpack.c.b16 %v1022, %v1021
  %v1032 = vpack.c.b16 %v1024, %v1023
  %1041 = vmatprep.subr.bf16.mxu0 0
  %1042 = vmatpush1.bf16.msra.mxu0 %v1025
  %1043 = vmatprep.subr.bf16.mxu0 0
  %1044 = vmatpush1.bf16.msra.mxu0 %v1026
  %1045 = vmatprep.subr.bf16.mxu0 0
  %1046 = vmatpush1.bf16.msra.mxu0 %v1027
  %1047 = vmatprep.subr.bf16.mxu0 0
  %1048 = vmatpush1.bf16.msra.mxu0 %v1028
  %1049 = vmatprep.subr.bf16.mxu0 0
  %1050 = vmatpush1.bf16.msra.mxu0 %v1029
  %1051 = vmatprep.subr.bf16.mxu0 0
  %1052 = vmatpush1.bf16.msra.mxu0 %v1030
  %1053 = vmatprep.subr.bf16.mxu0 0
  %1054 = vmatpush1.bf16.msra.mxu0 %v1031
  %1055 = vmatprep.subr.bf16.mxu0 0
  %1056 = vmatpush1.bf16.msra.mxu0 %v1032
  %1057 = vmatprep.subr.bf16.mxu0 0
  %1058 = vmatpush1.bf16.msra.mxu0 0
  %1059 = vmatprep.subr.bf16.mxu0 0
  %1060 = vmatpush1.bf16.msra.mxu0 0
  %1061 = vmatprep.subr.bf16.mxu0 0
  %1062 = vmatpush1.bf16.msra.mxu0 0
  %1063 = vmatprep.subr.bf16.mxu0 0
  %1064 = vmatpush1.bf16.msra.mxu0 0
  %1065 = vmatprep.subr.bf16.mxu0 0
  %1066 = vmatpush1.bf16.msra.mxu0 0
  %1067 = vmatprep.subr.bf16.mxu0 0
  %1068 = vmatpush1.bf16.msra.mxu0 0
  %1069 = vmatprep.subr.bf16.mxu0 0
  %1070 = vmatpush1.bf16.msra.mxu0 0
  %1071 = vmatprep.subr.bf16.mxu0 0
  %1072 = vmatpush1.bf16.msra.mxu0 0
  %1073 = vmatprep.mubr.bf16.mxu0 0
  %1074 = vmatmul.mubr.bf16.gmra.mrb[0].mxu0 %v965
  %v1075 = vpop.f32.mrb[0].mxu0
  %v1076 = vadd.f32 0.0, %v1075
  %v1077 = vpop.f32.mrb[0].mxu0
  %v1078 = vpop.f32.mrb[0].mxu0
  %v1079 = vadd.f32 0.0, %v1078
  %v1080 = vpop.f32.mrb[0].mxu0
  %1081 = vmatprep.mubr.bf16.mxu0 0
  %1082 = vmatmul.mubr.bf16.gmra.mrb[0].mxu0 %v966
  %v1083 = vpop.f32.mrb[0].mxu0
  %v1084 = vadd.f32 0.0, %v1083
  %v1085 = vpop.f32.mrb[0].mxu0
  %v1086 = vpop.f32.mrb[0].mxu0
  %v1087 = vadd.f32 0.0, %v1086
  %v1088 = vpop.f32.mrb[0].mxu0
  %1089 = vmatprep.mubr.bf16.mxu0 0
  %1090 = vmatmul.mubr.bf16.gmra.mrb[0].mxu0 %v967
  %v1091 = vpop.f32.mrb[0].mxu0
  %v1092 = vadd.f32 0.0, %v1091
  %v1093 = vpop.f32.mrb[0].mxu0
  %v1094 = vpop.f32.mrb[0].mxu0
  %v1095 = vadd.f32 0.0, %v1094
  %v1096 = vpop.f32.mrb[0].mxu0
  %1097 = vmatprep.mubr.bf16.mxu0 0
  %1098 = vmatmul.mubr.bf16.gmra.mrb[0].mxu0 %v974
  %v1099 = vpop.f32.mrb[0].mxu0
  %v1100 = vadd.f32 0.0, %v1099
  %v1101 = vpop.f32.mrb[0].mxu0
  %v1102 = vpop.f32.mrb[0].mxu0
  %v1103 = vadd.f32 0.0, %v1102
  %v1104 = vpop.f32.mrb[0].mxu0
  %1105 = vdwg.mxu0
  %v1106 = vadd.f32 %v957, %v1076
  %v1107 = vadd.f32 %v958, %v1079
  %v1108 = vadd.f32 %v959, %v1084
  %v1109 = vadd.f32 %v960, %v1087
  %v1110 = vadd.f32 %v961, %v1092
  %v1111 = vadd.f32 %v962, %v1095
  %v1112 = vadd.f32 %v963, %v1100
  %v1113 = vadd.f32 %v964, %v1103
  %v1115 = vshrl.u32 %v965, 16
  %v1117 = vshll.u32 %v965, 16
  %v1119 = vrot.slane %v1117, 1
  %v1120 = vor.u32 %v1115, %v1119
  %v1122 = vshll.u32 %v966, 16
  %v1124 = vrot.slane %v1122, 1
  %v1125 = vsel %vm59, %v1120, %v1124
  %v1126 = vshrl.u32 %v966, 16
  %v1128 = vor.u32 %v1126, %v1124
  %v1130 = vshll.u32 %v967, 16
  %v1132 = vrot.slane %v1130, 1
  %v1133 = vsel %vm59, %v1128, %v1132
  %v1134 = vshrl.u32 %v967, 16
  %v1136 = vor.u32 %v1134, %v1132
  %v1137 = vshll.u32 %v968, 16
  %v1139 = vrot.slane %v1137, 1
  %v1140 = vsel %vm59, %v1136, %v1139
  %v1141 = vshrl.u32 %v968, 16
  %v1143 = vor.u32 %v1141, %v1139
  %vm1148 = vcmask 1043456
  %vm1149 = vsmask.f32 3328
  %vm1150 = vmand %vm1148, %vm1149
  %v1151 = vsel %vm1150, %v1143, 0
  %s1152 = scalar_lea.vmem %s1, 448
  %v1153 = vld [vmem:[%s1152] sm:$0xf]
  %v1154 = vld [vmem:[%s1152 + $0x4] sm:$0xf]
  %v1155 = vld [vmem:[%s1152 + $0x8] sm:$0xf]
  %v1156 = vld [vmem:[%s1152 + $0xc] sm:$0xf]
  %v1157 = vld [vmem:[%s1152 + $0x10] sm:$0xf]
  %v1158 = vld [vmem:[%s1152 + $0x14] sm:$0xf]
  %v1159 = vld [vmem:[%s1152 + $0x18] sm:$0xf]
  %v1160 = vld [vmem:[%s1152 + $0x1c] sm:$0xf]
  %v1161 = vld [vmem:[%s1152 + $0x20] sm:$0xf]
  %v1162 = vld [vmem:[%s1152 + $0x24] sm:$0xf]
  %v1163 = vld [vmem:[%s1152 + $0x28] sm:$0xf]
  %v1164 = vld [vmem:[%s1152 + $0x2c] sm:$0xf]
  %v1165 = vld [vmem:[%s1152 + $0x30] sm:$0xf]
  %v1166 = vld [vmem:[%s1152 + $0x34] sm:$0xf]
  %v1167 = vld [vmem:[%s1152 + $0x38] sm:$0xf]
  %v1168 = vld [vmem:[%s1152 + $0x3c] sm:$0xf]
  %v1185 = vunpack.c.l.b16 %v1153
  %v1186 = vunpack.c.l.b16 %v1154
  %v1187 = vunpack.c.l.b16 %v1155
  %v1188 = vunpack.c.l.b16 %v1156
  %v1189 = vunpack.c.l.b16 %v1157
  %v1190 = vunpack.c.l.b16 %v1158
  %v1191 = vunpack.c.l.b16 %v1159
  %v1192 = vunpack.c.l.b16 %v1160
  %v1193 = vunpack.c.l.b16 %v1161
  %v1194 = vunpack.c.l.b16 %v1162
  %v1195 = vunpack.c.l.b16 %v1163
  %v1196 = vunpack.c.l.b16 %v1164
  %v1197 = vunpack.c.l.b16 %v1165
  %v1198 = vunpack.c.l.b16 %v1166
  %v1199 = vunpack.c.l.b16 %v1167
  %v1200 = vunpack.c.l.b16 %v1168
  %v1201 = vpack.c.b16 %v1186, %v1185
  %v1202 = vpack.c.b16 %v1188, %v1187
  %v1203 = vpack.c.b16 %v1190, %v1189
  %v1204 = vpack.c.b16 %v1192, %v1191
  %v1205 = vpack.c.b16 %v1194, %v1193
  %v1206 = vpack.c.b16 %v1196, %v1195
  %v1207 = vpack.c.b16 %v1198, %v1197
  %v1208 = vpack.c.b16 %v1200, %v1199
  %1217 = vmatprep.subr.bf16.mxu0 0
  %1218 = vmatpush1.bf16.msra.mxu0 %v1201
  %1219 = vmatprep.subr.bf16.mxu0 0
  %1220 = vmatpush1.bf16.msra.mxu0 %v1202
  %1221 = vmatprep.subr.bf16.mxu0 0
  %1222 = vmatpush1.bf16.msra.mxu0 %v1203
  %1223 = vmatprep.subr.bf16.mxu0 0
  %1224 = vmatpush1.bf16.msra.mxu0 %v1204
  %1225 = vmatprep.subr.bf16.mxu0 0
  %1226 = vmatpush1.bf16.msra.mxu0 %v1205
  %1227 = vmatprep.subr.bf16.mxu0 0
  %1228 = vmatpush1.bf16.msra.mxu0 %v1206
  %1229 = vmatprep.subr.bf16.mxu0 0
  %1230 = vmatpush1.bf16.msra.mxu0 %v1207
  %1231 = vmatprep.subr.bf16.mxu0 0
  %1232 = vmatpush1.bf16.msra.mxu0 %v1208
  %1233 = vmatprep.subr.bf16.mxu0 0
  %1234 = vmatpush1.bf16.msra.mxu0 0
  %1235 = vmatprep.subr.bf16.mxu0 0
  %1236 = vmatpush1.bf16.msra.mxu0 0
  %1237 = vmatprep.subr.bf16.mxu0 0
  %1238 = vmatpush1.bf16.msra.mxu0 0
  %1239 = vmatprep.subr.bf16.mxu0 0
  %1240 = vmatpush1.bf16.msra.mxu0 0
  %1241 = vmatprep.subr.bf16.mxu0 0
  %1242 = vmatpush1.bf16.msra.mxu0 0
  %1243 = vmatprep.subr.bf16.mxu0 0
  %1244 = vmatpush1.bf16.msra.mxu0 0
  %1245 = vmatprep.subr.bf16.mxu0 0
  %1246 = vmatpush1.bf16.msra.mxu0 0
  %1247 = vmatprep.subr.bf16.mxu0 0
  %1248 = vmatpush1.bf16.msra.mxu0 0
  %1249 = vmatprep.mubr.bf16.mxu0 0
  %1250 = vmatmul.mubr.bf16.gmra.mrb[0].mxu0 %v1125
  %v1251 = vpop.f32.mrb[0].mxu0
  %v1252 = vadd.f32 0.0, %v1251
  %v1253 = vpop.f32.mrb[0].mxu0
  %v1254 = vpop.f32.mrb[0].mxu0
  %v1255 = vadd.f32 0.0, %v1254
  %v1256 = vpop.f32.mrb[0].mxu0
  %1257 = vmatprep.mubr.bf16.mxu0 0
  %1258 = vmatmul.mubr.bf16.gmra.mrb[0].mxu0 %v1133
  %v1259 = vpop.f32.mrb[0].mxu0
  %v1260 = vadd.f32 0.0, %v1259
  %v1261 = vpop.f32.mrb[0].mxu0
  %v1262 = vpop.f32.mrb[0].mxu0
  %v1263 = vadd.f32 0.0, %v1262
  %v1264 = vpop.f32.mrb[0].mxu0
  %1265 = vmatprep.mubr.bf16.mxu0 0
  %1266 = vmatmul.mubr.bf16.gmra.mrb[0].mxu0 %v1140
  %v1267 = vpop.f32.mrb[0].mxu0
  %v1268 = vadd.f32 0.0, %v1267
  %v1269 = vpop.f32.mrb[0].mxu0
  %v1270 = vpop.f32.mrb[0].mxu0
  %v1271 = vadd.f32 0.0, %v1270
  %v1272 = vpop.f32.mrb[0].mxu0
  %1273 = vmatprep.mubr.bf16.mxu0 0
  %1274 = vmatmul.mubr.bf16.gmra.mrb[0].mxu0 %v1151
  %v1275 = vpop.f32.mrb[0].mxu0
  %v1276 = vadd.f32 0.0, %v1275
  %v1277 = vpop.f32.mrb[0].mxu0
  %v1278 = vpop.f32.mrb[0].mxu0
  %v1279 = vadd.f32 0.0, %v1278
  %v1280 = vpop.f32.mrb[0].mxu0
  %1281 = vdwg.mxu0
  %v1282 = vadd.f32 %v1106, %v1252
  %v1283 = vadd.f32 %v1107, %v1255
  %v1284 = vadd.f32 %v1108, %v1260
  %v1285 = vadd.f32 %v1109, %v1263
  %v1286 = vadd.f32 %v1110, %v1268
  %v1287 = vadd.f32 %v1111, %v1271
  %v1288 = vadd.f32 %v1112, %v1276
  %v1289 = vadd.f32 %v1113, %v1279
  %v1290 = vrot.slane %v965, 1
  %v1291 = vrot.slane %v966, 1
  %v1292 = vsel %vm345, %v1290, %v1291
  %v1293 = vrot.slane %v967, 1
  %v1294 = vsel %vm345, %v1291, %v1293
  %v1295 = vrot.slane %v968, 1
  %v1296 = vsel %vm345, %v1293, %v1295
  %vm1300 = vcmask 1042432
  %v1302 = vsel %vm1300, %v1295, 0
  %s1304 = scalar_lea.vmem %s1, 512
  %v1305 = vld [vmem:[%s1304] sm:$0xf]
  %v1306 = vld [vmem:[%s1304 + $0x4] sm:$0xf]
  %v1307 = vld [vmem:[%s1304 + $0x8] sm:$0xf]
  %v1308 = vld [vmem:[%s1304 + $0xc] sm:$0xf]
  %v1309 = vld [vmem:[%s1304 + $0x10] sm:$0xf]
  %v1310 = vld [vmem:[%s1304 + $0x14] sm:$0xf]
  %v1311 = vld [vmem:[%s1304 + $0x18] sm:$0xf]
  %v1312 = vld [vmem:[%s1304 + $0x1c] sm:$0xf]
  %v1313 = vld [vmem:[%s1304 + $0x20] sm:$0xf]
  %v1314 = vld [vmem:[%s1304 + $0x24] sm:$0xf]
  %v1315 = vld [vmem:[%s1304 + $0x28] sm:$0xf]
  %v1316 = vld [vmem:[%s1304 + $0x2c] sm:$0xf]
  %v1317 = vld [vmem:[%s1304 + $0x30] sm:$0xf]
  %v1318 = vld [vmem:[%s1304 + $0x34] sm:$0xf]
  %v1319 = vld [vmem:[%s1304 + $0x38] sm:$0xf]
  %v1320 = vld [vmem:[%s1304 + $0x3c] sm:$0xf]
  %v1337 = vunpack.c.l.b16 %v1305
  %v1338 = vunpack.c.l.b16 %v1306
  %v1339 = vunpack.c.l.b16 %v1307
  %v1340 = vunpack.c.l.b16 %v1308
  %v1341 = vunpack.c.l.b16 %v1309
  %v1342 = vunpack.c.l.b16 %v1310
  %v1343 = vunpack.c.l.b16 %v1311
  %v1344 = vunpack.c.l.b16 %v1312
  %v1345 = vunpack.c.l.b16 %v1313
  %v1346 = vunpack.c.l.b16 %v1314
  %v1347 = vunpack.c.l.b16 %v1315
  %v1348 = vunpack.c.l.b16 %v1316
  %v1349 = vunpack.c.l.b16 %v1317
  %v1350 = vunpack.c.l.b16 %v1318
  %v1351 = vunpack.c.l.b16 %v1319
  %v1352 = vunpack.c.l.b16 %v1320
  %v1353 = vpack.c.b16 %v1338, %v1337
  %v1354 = vpack.c.b16 %v1340, %v1339
  %v1355 = vpack.c.b16 %v1342, %v1341
  %v1356 = vpack.c.b16 %v1344, %v1343
  %v1357 = vpack.c.b16 %v1346, %v1345
  %v1358 = vpack.c.b16 %v1348, %v1347
  %v1359 = vpack.c.b16 %v1350, %v1349
  %v1360 = vpack.c.b16 %v1352, %v1351
  %1369 = vmatprep.subr.bf16.mxu0 0
  %1370 = vmatpush1.bf16.msra.mxu0 %v1353
  %1371 = vmatprep.subr.bf16.mxu0 0
  %1372 = vmatpush1.bf16.msra.mxu0 %v1354
  %1373 = vmatprep.subr.bf16.mxu0 0
  %1374 = vmatpush1.bf16.msra.mxu0 %v1355
  %1375 = vmatprep.subr.bf16.mxu0 0
  %1376 = vmatpush1.bf16.msra.mxu0 %v1356
  %1377 = vmatprep.subr.bf16.mxu0 0
  %1378 = vmatpush1.bf16.msra.mxu0 %v1357
  %1379 = vmatprep.subr.bf16.mxu0 0
  %1380 = vmatpush1.bf16.msra.mxu0 %v1358
  %1381 = vmatprep.subr.bf16.mxu0 0
  %1382 = vmatpush1.bf16.msra.mxu0 %v1359
  %1383 = vmatprep.subr.bf16.mxu0 0
  %1384 = vmatpush1.bf16.msra.mxu0 %v1360
  %1385 = vmatprep.subr.bf16.mxu0 0
  %1386 = vmatpush1.bf16.msra.mxu0 0
  %1387 = vmatprep.subr.bf16.mxu0 0
  %1388 = vmatpush1.bf16.msra.mxu0 0
  %1389 = vmatprep.subr.bf16.mxu0 0
  %1390 = vmatpush1.bf16.msra.mxu0 0
  %1391 = vmatprep.subr.bf16.mxu0 0
  %1392 = vmatpush1.bf16.msra.mxu0 0
  %1393 = vmatprep.subr.bf16.mxu0 0
  %1394 = vmatpush1.bf16.msra.mxu0 0
  %1395 = vmatprep.subr.bf16.mxu0 0
  %1396 = vmatpush1.bf16.msra.mxu0 0
  %1397 = vmatprep.subr.bf16.mxu0 0
  %1398 = vmatpush1.bf16.msra.mxu0 0
  %1399 = vmatprep.subr.bf16.mxu0 0
  %1400 = vmatpush1.bf16.msra.mxu0 0
  %1401 = vmatprep.mubr.bf16.mxu0 0
  %1402 = vmatmul.mubr.bf16.gmra.mrb[0].mxu0 %v1292
  %v1403 = vpop.f32.mrb[0].mxu0
  %v1404 = vadd.f32 0.0, %v1403
  %v1405 = vpop.f32.mrb[0].mxu0
  %v1406 = vpop.f32.mrb[0].mxu0
  %v1407 = vadd.f32 0.0, %v1406
  %v1408 = vpop.f32.mrb[0].mxu0
  %1409 = vmatprep.mubr.bf16.mxu0 0
  %1410 = vmatmul.mubr.bf16.gmra.mrb[0].mxu0 %v1294
  %v1411 = vpop.f32.mrb[0].mxu0
  %v1412 = vadd.f32 0.0, %v1411
  %v1413 = vpop.f32.mrb[0].mxu0
  %v1414 = vpop.f32.mrb[0].mxu0
  %v1415 = vadd.f32 0.0, %v1414
  %v1416 = vpop.f32.mrb[0].mxu0
  %1417 = vmatprep.mubr.bf16.mxu0 0
  %1418 = vmatmul.mubr.bf16.gmra.mrb[0].mxu0 %v1296
  %v1419 = vpop.f32.mrb[0].mxu0
  %v1420 = vadd.f32 0.0, %v1419
  %v1421 = vpop.f32.mrb[0].mxu0
  %v1422 = vpop.f32.mrb[0].mxu0
  %v1423 = vadd.f32 0.0, %v1422
  %v1424 = vpop.f32.mrb[0].mxu0
  %1425 = vmatprep.mubr.bf16.mxu0 0
  %1426 = vmatmul.mubr.bf16.gmra.mrb[0].mxu0 %v1302
  %v1427 = vpop.f32.mrb[0].mxu0
  %v1428 = vadd.f32 0.0, %v1427
  %v1429 = vpop.f32.mrb[0].mxu0
  %v1430 = vpop.f32.mrb[0].mxu0
  %v1431 = vadd.f32 0.0, %v1430
  %v1432 = vpop.f32.mrb[0].mxu0
  %1433 = vdwg.mxu0
  %v1434 = vadd.f32 %v1282, %v1404
  %v1435 = vadd.f32 %v1283, %v1407
  %v1436 = vadd.f32 %v1284, %v1412
  %v1437 = vadd.f32 %v1285, %v1415
  %v1438 = vadd.f32 %v1286, %v1420
  %v1439 = vadd.f32 %v1287, %v1423
  %v1440 = vadd.f32 %v1288, %v1428
  %v1441 = vadd.f32 %v1289, %v1431
  %v1442 = vld [vmem:[%s2] sm:$0x1]
  %v1444 = vlaneseq
  %v1445 = vshrl.u32 %v1444, 7
  %v1446 = vsub.s32 0, %v1445
  %v1447 = vrot.slane %v1442, %v1446
  %v1449 = vadd.f32 %v1434, %v1447
  %v1450 = vadd.f32 %v1435, %v1447
  %v1451 = vadd.f32 %v1436, %v1447
  %v1452 = vadd.f32 %v1437, %v1447
  %v1453 = vadd.f32 %v1438, %v1447
  %v1454 = vadd.f32 %v1439, %v1447
  %v1455 = vadd.f32 %v1440, %v1447
  %v1456 = vadd.f32 %v1441, %v1447
  %v1457 = vmax.f32 %v1449, 0.0
  %v1458 = vmax.f32 %v1450, 0.0
  %v1459 = vmax.f32 %v1451, 0.0
  %v1460 = vmax.f32 %v1452, 0.0
  %v1461 = vmax.f32 %v1453, 0.0
  %v1462 = vmax.f32 %v1454, 0.0
  %v1463 = vmax.f32 %v1455, 0.0
  %v1464 = vmax.f32 %v1456, 0.0
  %v1465 = vpack.c.bf16 %v1458, %v1457
  %v1466 = vpack.c.bf16 %v1460, %v1459
  %v1467 = vpack.c.bf16 %v1462, %v1461
  %v1468 = vpack.c.bf16 %v1464, %v1463
  %v1473 = vunpack.c.l.b16 %v1465
  %v1474 = vunpack.c.h.b16 %v1465
  %v1475 = vunpack.c.l.b16 %v1466
  %v1476 = vunpack.c.h.b16 %v1466
  %v1477 = vunpack.c.l.b16 %v1467
  %v1478 = vunpack.c.h.b16 %v1467
  %v1479 = vunpack.c.l.b16 %v1468
  %v1480 = vunpack.c.h.b16 %v1468
  %v1481 = vpack.c.b16 %v1473, %v1473
  %v1482 = vpack.c.b16 %v1474, %v1474
  %v1483 = vpack.c.b16 %v1475, %v1475
  %v1484 = vpack.c.b16 %v1476, %v1476
  %v1485 = vpack.c.b16 %v1477, %v1477
  %v1486 = vpack.c.b16 %v1478, %v1478
  %v1487 = vpack.c.b16 %v1479, %v1479
  %v1488 = vpack.c.b16 %v1480, %v1480
  %1497 = vst [vmem:[%s3] sm:$0xf] %v1481
  %1498 = vst [vmem:[%s3 + $0x4] sm:$0xf] %v1482
  %1499 = vst [vmem:[%s3 + $0x8] sm:$0xf] %v1483
  %1500 = vst [vmem:[%s3 + $0xc] sm:$0xf] %v1484
  %1501 = vst [vmem:[%s3 + $0x10] sm:$0xf] %v1485
  %1502 = vst [vmem:[%s3 + $0x14] sm:$0xf] %v1486
  %1503 = vst [vmem:[%s3 + $0x18] sm:$0xf] %v1487
  %1504 = vst [vmem:[%s3 + $0x1c] sm:$0xf] %v1488
  // Predicated region
  $region14: #{dueling_dqn_forward.6} parent=0 // pred_check
    _
  $region15: #{dueling_dqn_forward.6} parent=0 // pred_check_branch
    %1506 = sbr.rel (0) target = $region17
  $region16: #{dueling_dqn_forward.6} parent=0 // pred_region
    _
  $region17: #{dueling_dqn_forward.6} parent=0 // pred_fallthru
    _
  // Predicated region
  $region18: #{dueling_dqn_forward.6} parent=0 // pred_check
    _
  $region19: #{dueling_dqn_forward.6} parent=0 // pred_check_branch
    %1508 = sbr.rel (0) target = $region21
  $region20: #{dueling_dqn_forward.6} parent=0 // pred_region
    _
  $region21: #{dueling_dqn_forward.6} parent=0 // pred_fallthru
    _

// kernel: dueling_dqn_forward.7
$region0: #{dueling_dqn_forward.7}
  #allocation0 [shape = 'u32[]', space=smem, size = 0x4, offset = 0x4, fixed_abs, tag = 'smem constant byte address 0x4 - core index']
  #allocation1 [shape = 'u32[144,128]{1,0:T(1,128)}', space=vmem, size = 0x12000, scoped, tag = 'internal scratch']
  #allocation2 [shape = 'f32[8,512]{1,0:T(8,128)}', space=vmem, size = 0x4000, scoped, tag = 'scratch operand']
  %s0 = inlined_call_operand.vmem [shape: bf16[8,512], index: 0, kind: input, shape index: {}]
  %s1 = inlined_call_operand.vmem [shape: bf16[512,512], index: 1, kind: input, shape index: {}]
  %s2 = inlined_call_operand.vmem [shape: f32[1,512], index: 2, kind: input, shape index: {}]
  %s3 = inlined_call_operand.vmem [shape: bf16[512,128], index: 3, kind: input, shape index: {}]
  %s4 = inlined_call_operand.vmem [shape: f32[1,128], index: 4, kind: input, shape index: {}]
  %s5 = inlined_call_operand.vmem [shape: f32[8,128], index: 5, kind: output, shape index: {}]
  %s6 = sld [smem:[#allocation0]]
  $region38: #{dueling_dqn_forward.7} parent=0
    _
  %s8 = ssub.s32 1, %s6
  %s9 = scalar_select 0, %s8, %s6
  // Predicated region
  $region2: #{dueling_dqn_forward.7} parent=0 // pred_check
    _
  $region3: #{dueling_dqn_forward.7} parent=0 // pred_check_branch
    %11 = sbr.rel (0) target = $region5
  $region4: #{dueling_dqn_forward.7} parent=0 // pred_region
    _
  $region5: #{dueling_dqn_forward.7} parent=0 // pred_fallthru
    _
  // Predicated region
  $region6: #{dueling_dqn_forward.7} parent=0 // pred_check
    _
  $region7: #{dueling_dqn_forward.7} parent=0 // pred_check_branch
    %13 = sbr.rel (0) target = $region9
  $region8: #{dueling_dqn_forward.7} parent=0 // pred_region
    _
  $region9: #{dueling_dqn_forward.7} parent=0 // pred_fallthru
    _
  // Predicated region
  $region10: #{dueling_dqn_forward.7} parent=0 // pred_check
    _
  $region11: #{dueling_dqn_forward.7} parent=0 // pred_check_branch
    %15 = sbr.rel (0) target = $region13
  $region12: #{dueling_dqn_forward.7} parent=0 // pred_region
    _
  $region13: #{dueling_dqn_forward.7} parent=0 // pred_fallthru
    _
  // Predicated region
  $region14: #{dueling_dqn_forward.7} parent=0 // pred_check
    _
  $region15: #{dueling_dqn_forward.7} parent=0 // pred_check_branch
    %17 = sbr.rel (0) target = $region17
  $region16: #{dueling_dqn_forward.7} parent=0 // pred_region
    _
  $region17: #{dueling_dqn_forward.7} parent=0 // pred_fallthru
    _
  // Predicated region
  $region18: #{dueling_dqn_forward.7} parent=0 // pred_check
    _
  $region19: #{dueling_dqn_forward.7} parent=0 // pred_check_branch
    %19 = sbr.rel (0) target = $region21
  $region20: #{dueling_dqn_forward.7} parent=0 // pred_region
    _
  $region21: #{dueling_dqn_forward.7} parent=0 // pred_fallthru
    _
  %p21 = scmp.eq.s32.totalorder 0, 0
  // Predicated region
  $region22: #{dueling_dqn_forward.7} parent=0 // pred_check
    %p22 = pneg %p21
  $region23: #{dueling_dqn_forward.7} parent=0 // pred_check_branch
    %24 = sbr.rel (%p22) target = $region25
  $region24: #{dueling_dqn_forward.7} parent=0 // pred_region
    %25 = vst [vmem:[#allocation2] sm:$0xff] 0.0
    %26 = vst [vmem:[#allocation2 + $0x8] sm:$0xff] 0.0
    %27 = vst [vmem:[#allocation2 + $0x10] sm:$0xff] 0.0
    %28 = vst [vmem:[#allocation2 + $0x18] sm:$0xff] 0.0
  $region25: #{dueling_dqn_forward.7} parent=0 // pred_fallthru
    _
  %v29 = vld [vmem:[#allocation2] sm:$0xff]
  %v30 = vld [vmem:[#allocation2 + $0x8] sm:$0xff]
  %v31 = vld [vmem:[#allocation2 + $0x10] sm:$0xff]
  %v32 = vld [vmem:[#allocation2 + $0x18] sm:$0xff]
  %v33 = vld [vmem:[%s0] sm:$0xff]
  %v34 = vld [vmem:[%s0 + $0x8] sm:$0xff]
  %v35 = vld [vmem:[%s1] sm:$0xff]
  %v36 = vld [vmem:[%s1 + $0x8] sm:$0xff]
  %v37 = vld [vmem:[%s1 + $0x10] sm:$0xff]
  %v38 = vld [vmem:[%s1 + $0x18] sm:$0xff]
  %v39 = vld [vmem:[%s1 + $0x20] sm:$0xff]
  %v40 = vld [vmem:[%s1 + $0x28] sm:$0xff]
  %v41 = vld [vmem:[%s1 + $0x30] sm:$0xff]
  %v42 = vld [vmem:[%s1 + $0x38] sm:$0xff]
  %v43 = vld [vmem:[%s1 + $0x40] sm:$0xff]
  %v44 = vld [vmem:[%s1 + $0x48] sm:$0xff]
  %v45 = vld [vmem:[%s1 + $0x50] sm:$0xff]
  %v46 = vld [vmem:[%s1 + $0x58] sm:$0xff]
  %v47 = vld [vmem:[%s1 + $0x60] sm:$0xff]
  %v48 = vld [vmem:[%s1 + $0x68] sm:$0xff]
  %v49 = vld [vmem:[%s1 + $0x70] sm:$0xff]
  %v50 = vld [vmem:[%s1 + $0x78] sm:$0xff]
  %v51 = vld [vmem:[%s1 + $0x80] sm:$0xff]
  %v52 = vld [vmem:[%s1 + $0x88] sm:$0xff]
  %v53 = vld [vmem:[%s1 + $0x90] sm:$0xff]
  %v54 = vld [vmem:[%s1 + $0x98] sm:$0xff]
  %v55 = vld [vmem:[%s1 + $0xa0] sm:$0xff]
  %v56 = vld [vmem:[%s1 + $0xa8] sm:$0xff]
  %v57 = vld [vmem:[%s1 + $0xb0] sm:$0xff]
  %v58 = vld [vmem:[%s1 + $0xb8] sm:$0xff]
  %v59 = vld [vmem:[%s1 + $0xc0] sm:$0xff]
  %v60 = vld [vmem:[%s1 + $0xc8] sm:$0xff]
  %v61 = vld [vmem:[%s1 + $0xd0] sm:$0xff]
  %v62 = vld [vmem:[%s1 + $0xd8] sm:$0xff]
  %v63 = vld [vmem:[%s1 + $0xe0] sm:$0xff]
  %v64 = vld [vmem:[%s1 + $0xe8] sm:$0xff]
  %v65 = vld [vmem:[%s1 + $0xf0] sm:$0xff]
  %v66 = vld [vmem:[%s1 + $0xf8] sm:$0xff]
  %v67 = vld [vmem:[%s1 + $0x100] sm:$0xff]
  %v68 = vld [vmem:[%s1 + $0x108] sm:$0xff]
  %v69 = vld [vmem:[%s1 + $0x110] sm:$0xff]
  %v70 = vld [vmem:[%s1 + $0x118] sm:$0xff]
  %v71 = vld [vmem:[%s1 + $0x120] sm:$0xff]
  %v72 = vld [vmem:[%s1 + $0x128] sm:$0xff]
  %v73 = vld [vmem:[%s1 + $0x130] sm:$0xff]
  %v74 = vld [vmem:[%s1 + $0x138] sm:$0xff]
  %v75 = vld [vmem:[%s1 + $0x140] sm:$0xff]
  %v76 = vld [vmem:[%s1 + $0x148] sm:$0xff]
  %v77 = vld [vmem:[%s1 + $0x150] sm:$0xff]
  %v78 = vld [vmem:[%s1 + $0x158] sm:$0xff]
  %v79 = vld [vmem:[%s1 + $0x160] sm:$0xff]
  %v80 = vld [vmem:[%s1 + $0x168] sm:$0xff]
  %v81 = vld [vmem:[%s1 + $0x170] sm:$0xff]
  %v82 = vld [vmem:[%s1 + $0x178] sm:$0xff]
  %v83 = vld [vmem:[%s1 + $0x180] sm:$0xff]
  %v84 = vld [vmem:[%s1 + $0x188] sm:$0xff]
  %v85 = vld [vmem:[%s1 + $0x190] sm:$0xff]
  %v86 = vld [vmem:[%s1 + $0x198] sm:$0xff]
  %v87 = vld [vmem:[%s1 + $0x1a0] sm:$0xff]
  %v88 = vld [vmem:[%s1 + $0x1a8] sm:$0xff]
  %v89 = vld [vmem:[%s1 + $0x1b0] sm:$0xff]
  %v90 = vld [vmem:[%s1 + $0x1b8] sm:$0xff]
  %v91 = vld [vmem:[%s1 + $0x1c0] sm:$0xff]
  %v92 = vld [vmem:[%s1 + $0x1c8] sm:$0xff]
  %v93 = vld [vmem:[%s1 + $0x1d0] sm:$0xff]
  %v94 = vld [vmem:[%s1 + $0x1d8] sm:$0xff]
  %v95 = vld [vmem:[%s1 + $0x1e0] sm:$0xff]
  %v96 = vld [vmem:[%s1 + $0x1e8] sm:$0xff]
  %v97 = vld [vmem:[%s1 + $0x1f0] sm:$0xff]
  %v98 = vld [vmem:[%s1 + $0x1f8] sm:$0xff]
  %v99 = vld [vmem:[%s1 + $0x200] sm:$0xff]
  %v100 = vld [vmem:[%s1 + $0x208] sm:$0xff]
  %v101 = vld [vmem:[%s1 + $0x210] sm:$0xff]
  %v102 = vld [vmem:[%s1 + $0x218] sm:$0xff]
  %v103 = vld [vmem:[%s1 + $0x220] sm:$0xff]
  %v104 = vld [vmem:[%s1 + $0x228] sm:$0xff]
  %v105 = vld [vmem:[%s1 + $0x230] sm:$0xff]
  %v106 = vld [vmem:[%s1 + $0x238] sm:$0xff]
  %v107 = vld [vmem:[%s1 + $0x240] sm:$0xff]
  %v108 = vld [vmem:[%s1 + $0x248] sm:$0xff]
  %v109 = vld [vmem:[%s1 + $0x250] sm:$0xff]
  %v110 = vld [vmem:[%s1 + $0x258] sm:$0xff]
  %v111 = vld [vmem:[%s1 + $0x260] sm:$0xff]
  %v112 = vld [vmem:[%s1 + $0x268] sm:$0xff]
  %v113 = vld [vmem:[%s1 + $0x270] sm:$0xff]
  %v114 = vld [vmem:[%s1 + $0x278] sm:$0xff]
  %v115 = vld [vmem:[%s1 + $0x280] sm:$0xff]
  %v116 = vld [vmem:[%s1 + $0x288] sm:$0xff]
  %v117 = vld [vmem:[%s1 + $0x290] sm:$0xff]
  %v118 = vld [vmem:[%s1 + $0x298] sm:$0xff]
  %v119 = vld [vmem:[%s1 + $0x2a0] sm:$0xff]
  %v120 = vld [vmem:[%s1 + $0x2a8] sm:$0xff]
  %v121 = vld [vmem:[%s1 + $0x2b0] sm:$0xff]
  %v122 = vld [vmem:[%s1 + $0x2b8] sm:$0xff]
  %v123 = vld [vmem:[%s1 + $0x2c0] sm:$0xff]
  %v124 = vld [vmem:[%s1 + $0x2c8] sm:$0xff]
  %v125 = vld [vmem:[%s1 + $0x2d0] sm:$0xff]
  %v126 = vld [vmem:[%s1 + $0x2d8] sm:$0xff]
  %v127 = vld [vmem:[%s1 + $0x2e0] sm:$0xff]
  %v128 = vld [vmem:[%s1 + $0x2e8] sm:$0xff]
  %v129 = vld [vmem:[%s1 + $0x2f0] sm:$0xff]
  %v130 = vld [vmem:[%s1 + $0x2f8] sm:$0xff]
  %v131 = vld [vmem:[%s1 + $0x300] sm:$0xff]
  %v132 = vld [vmem:[%s1 + $0x308] sm:$0xff]
  %v133 = vld [vmem:[%s1 + $0x310] sm:$0xff]
  %v134 = vld [vmem:[%s1 + $0x318] sm:$0xff]
  %v135 = vld [vmem:[%s1 + $0x320] sm:$0xff]
  %v136 = vld [vmem:[%s1 + $0x328] sm:$0xff]
  %v137 = vld [vmem:[%s1 + $0x330] sm:$0xff]
  %v138 = vld [vmem:[%s1 + $0x338] sm:$0xff]
  %v139 = vld [vmem:[%s1 + $0x340] sm:$0xff]
  %v140 = vld [vmem:[%s1 + $0x348] sm:$0xff]
  %v141 = vld [vmem:[%s1 + $0x350] sm:$0xff]
  %v142 = vld [vmem:[%s1 + $0x358] sm:$0xff]
  %v143 = vld [vmem:[%s1 + $0x360] sm:$0xff]
  %v144 = vld [vmem:[%s1 + $0x368] sm:$0xff]
  %v145 = vld [vmem:[%s1 + $0x370] sm:$0xff]
  %v146 = vld [vmem:[%s1 + $0x378] sm:$0xff]
  %v147 = vld [vmem:[%s1 + $0x380] sm:$0xff]
  %v148 = vld [vmem:[%s1 + $0x388] sm:$0xff]
  %v149 = vld [vmem:[%s1 + $0x390] sm:$0xff]
  %v150 = vld [vmem:[%s1 + $0x398] sm:$0xff]
  %v151 = vld [vmem:[%s1 + $0x3a0] sm:$0xff]
  %v152 = vld [vmem:[%s1 + $0x3a8] sm:$0xff]
  %v153 = vld [vmem:[%s1 + $0x3b0] sm:$0xff]
  %v154 = vld [vmem:[%s1 + $0x3b8] sm:$0xff]
  %v155 = vld [vmem:[%s1 + $0x3c0] sm:$0xff]
  %v156 = vld [vmem:[%s1 + $0x3c8] sm:$0xff]
  %v157 = vld [vmem:[%s1 + $0x3d0] sm:$0xff]
  %v158 = vld [vmem:[%s1 + $0x3d8] sm:$0xff]
  %v159 = vld [vmem:[%s1 + $0x3e0] sm:$0xff]
  %v160 = vld [vmem:[%s1 + $0x3e8] sm:$0xff]
  %v161 = vld [vmem:[%s1 + $0x3f0] sm:$0xff]
  %v162 = vld [vmem:[%s1 + $0x3f8] sm:$0xff]
  %v165 = vunpack.c.l.b16 %v33
  %v166 = vunpack.c.h.b16 %v33
  %v167 = vunpack.c.l.b16 %v34
  %v168 = vunpack.c.h.b16 %v34
  %v169 = vpack.c.b16 %v165, %v165
  %v170 = vpack.c.b16 %v166, %v166
  %v171 = vpack.c.b16 %v167, %v167
  %v172 = vpack.c.b16 %v168, %v168
  %v305 = vunpack.c.l.b16 %v35
  %v306 = vunpack.c.h.b16 %v35
  %v307 = vunpack.c.l.b16 %v36
  %v308 = vunpack.c.h.b16 %v36
  %v309 = vunpack.c.l.b16 %v37
  %v310 = vunpack.c.h.b16 %v37
  %v311 = vunpack.c.l.b16 %v38
  %v312 = vunpack.c.h.b16 %v38
  %v313 = vunpack.c.l.b16 %v39
  %v314 = vunpack.c.h.b16 %v39
  %v315 = vunpack.c.l.b16 %v40
  %v316 = vunpack.c.h.b16 %v40
  %v317 = vunpack.c.l.b16 %v41
  %v318 = vunpack.c.h.b16 %v41
  %v319 = vunpack.c.l.b16 %v42
  %v320 = vunpack.c.h.b16 %v42
  %v321 = vunpack.c.l.b16 %v43
  %v322 = vunpack.c.h.b16 %v43
  %v323 = vunpack.c.l.b16 %v44
  %v324 = vunpack.c.h.b16 %v44
  %v325 = vunpack.c.l.b16 %v45
  %v326 = vunpack.c.h.b16 %v45
  %v327 = vunpack.c.l.b16 %v46
  %v328 = vunpack.c.h.b16 %v46
  %v329 = vunpack.c.l.b16 %v47
  %v330 = vunpack.c.h.b16 %v47
  %v331 = vunpack.c.l.b16 %v48
  %v332 = vunpack.c.h.b16 %v48
  %v333 = vunpack.c.l.b16 %v49
  %v334 = vunpack.c.h.b16 %v49
  %v335 = vunpack.c.l.b16 %v50
  %v336 = vunpack.c.h.b16 %v50
  %v337 = vunpack.c.l.b16 %v51
  %v338 = vunpack.c.h.b16 %v51
  %v339 = vunpack.c.l.b16 %v52
  %v340 = vunpack.c.h.b16 %v52
  %v341 = vunpack.c.l.b16 %v53
  %v342 = vunpack.c.h.b16 %v53
  %v343 = vunpack.c.l.b16 %v54
  %v344 = vunpack.c.h.b16 %v54
  %v345 = vunpack.c.l.b16 %v55
  %v346 = vunpack.c.h.b16 %v55
  %v347 = vunpack.c.l.b16 %v56
  %v348 = vunpack.c.h.b16 %v56
  %v349 = vunpack.c.l.b16 %v57
  %v350 = vunpack.c.h.b16 %v57
  %v351 = vunpack.c.l.b16 %v58
  %v352 = vunpack.c.h.b16 %v58
  %v353 = vunpack.c.l.b16 %v59
  %v354 = vunpack.c.h.b16 %v59
  %v355 = vunpack.c.l.b16 %v60
  %v356 = vunpack.c.h.b16 %v60
  %v357 = vunpack.c.l.b16 %v61
  %v358 = vunpack.c.h.b16 %v61
  %v359 = vunpack.c.l.b16 %v62
  %v360 = vunpack.c.h.b16 %v62
  %v361 = vunpack.c.l.b16 %v63
  %v362 = vunpack.c.h.b16 %v63
  %v363 = vunpack.c.l.b16 %v64
  %v364 = vunpack.c.h.b16 %v64
  %v365 = vunpack.c.l.b16 %v65
  %v366 = vunpack.c.h.b16 %v65
  %v367 = vunpack.c.l.b16 %v66
  %v368 = vunpack.c.h.b16 %v66
  %v369 = vunpack.c.l.b16 %v67
  %v370 = vunpack.c.h.b16 %v67
  %v371 = vunpack.c.l.b16 %v68
  %v372 = vunpack.c.h.b16 %v68
  %v373 = vunpack.c.l.b16 %v69
  %v374 = vunpack.c.h.b16 %v69
  %v375 = vunpack.c.l.b16 %v70
  %v376 = vunpack.c.h.b16 %v70
  %v377 = vunpack.c.l.b16 %v71
  %v378 = vunpack.c.h.b16 %v71
  %v379 = vunpack.c.l.b16 %v72
  %v380 = vunpack.c.h.b16 %v72
  %v381 = vunpack.c.l.b16 %v73
  %v382 = vunpack.c.h.b16 %v73
  %v383 = vunpack.c.l.b16 %v74
  %v384 = vunpack.c.h.b16 %v74
  %v385 = vunpack.c.l.b16 %v75
  %v386 = vunpack.c.h.b16 %v75
  %v387 = vunpack.c.l.b16 %v76
  %v388 = vunpack.c.h.b16 %v76
  %v389 = vunpack.c.l.b16 %v77
  %v390 = vunpack.c.h.b16 %v77
  %v391 = vunpack.c.l.b16 %v78
  %v392 = vunpack.c.h.b16 %v78
  %v393 = vunpack.c.l.b16 %v79
  %v394 = vunpack.c.h.b16 %v79
  %v395 = vunpack.c.l.b16 %v80
  %v396 = vunpack.c.h.b16 %v80
  %v397 = vunpack.c.l.b16 %v81
  %v398 = vunpack.c.h.b16 %v81
  %v399 = vunpack.c.l.b16 %v82
  %v400 = vunpack.c.h.b16 %v82
  %v401 = vunpack.c.l.b16 %v83
  %v402 = vunpack.c.h.b16 %v83
  %v403 = vunpack.c.l.b16 %v84
  %v404 = vunpack.c.h.b16 %v84
  %v405 = vunpack.c.l.b16 %v85
  %v406 = vunpack.c.h.b16 %v85
  %v407 = vunpack.c.l.b16 %v86
  %v408 = vunpack.c.h.b16 %v86
  %v409 = vunpack.c.l.b16 %v87
  %v410 = vunpack.c.h.b16 %v87
  %v411 = vunpack.c.l.b16 %v88
  %v412 = vunpack.c.h.b16 %v88
  %v413 = vunpack.c.l.b16 %v89
  %v414 = vunpack.c.h.b16 %v89
  %v415 = vunpack.c.l.b16 %v90
  %v416 = vunpack.c.h.b16 %v90
  %v417 = vunpack.c.l.b16 %v91
  %v418 = vunpack.c.h.b16 %v91
  %v419 = vunpack.c.l.b16 %v92
  %v420 = vunpack.c.h.b16 %v92
  %v421 = vunpack.c.l.b16 %v93
  %v422 = vunpack.c.h.b16 %v93
  %v423 = vunpack.c.l.b16 %v94
  %v424 = vunpack.c.h.b16 %v94
  %v425 = vunpack.c.l.b16 %v95
  %v426 = vunpack.c.h.b16 %v95
  %v427 = vunpack.c.l.b16 %v96
  %v428 = vunpack.c.h.b16 %v96
  %v429 = vunpack.c.l.b16 %v97
  %v430 = vunpack.c.h.b16 %v97
  %v431 = vunpack.c.l.b16 %v98
  %v432 = vunpack.c.h.b16 %v98
  %v433 = vunpack.c.l.b16 %v99
  %v434 = vunpack.c.h.b16 %v99
  %v435 = vunpack.c.l.b16 %v100
  %v436 = vunpack.c.h.b16 %v100
  %v437 = vunpack.c.l.b16 %v101
  %v438 = vunpack.c.h.b16 %v101
  %v439 = vunpack.c.l.b16 %v102
  %v440 = vunpack.c.h.b16 %v102
  %v441 = vunpack.c.l.b16 %v103
  %v442 = vunpack.c.h.b16 %v103
  %v443 = vunpack.c.l.b16 %v104
  %v444 = vunpack.c.h.b16 %v104
  %v445 = vunpack.c.l.b16 %v105
  %v446 = vunpack.c.h.b16 %v105
  %v447 = vunpack.c.l.b16 %v106
  %v448 = vunpack.c.h.b16 %v106
  %v449 = vunpack.c.l.b16 %v107
  %v450 = vunpack.c.h.b16 %v107
  %v451 = vunpack.c.l.b16 %v108
  %v452 = vunpack.c.h.b16 %v108
  %v453 = vunpack.c.l.b16 %v109
  %v454 = vunpack.c.h.b16 %v109
  %v455 = vunpack.c.l.b16 %v110
  %v456 = vunpack.c.h.b16 %v110
  %v457 = vunpack.c.l.b16 %v111
  %v458 = vunpack.c.h.b16 %v111
  %v459 = vunpack.c.l.b16 %v112
  %v460 = vunpack.c.h.b16 %v112
  %v461 = vunpack.c.l.b16 %v113
  %v462 = vunpack.c.h.b16 %v113
  %v463 = vunpack.c.l.b16 %v114
  %v464 = vunpack.c.h.b16 %v114
  %v465 = vunpack.c.l.b16 %v115
  %v466 = vunpack.c.h.b16 %v115
  %v467 = vunpack.c.l.b16 %v116
  %v468 = vunpack.c.h.b16 %v116
  %v469 = vunpack.c.l.b16 %v117
  %v470 = vunpack.c.h.b16 %v117
  %v471 = vunpack.c.l.b16 %v118
  %v472 = vunpack.c.h.b16 %v118
  %v473 = vunpack.c.l.b16 %v119
  %v474 = vunpack.c.h.b16 %v119
  %v475 = vunpack.c.l.b16 %v120
  %v476 = vunpack.c.h.b16 %v120
  %v477 = vunpack.c.l.b16 %v121
  %v478 = vunpack.c.h.b16 %v121
  %v479 = vunpack.c.l.b16 %v122
  %v480 = vunpack.c.h.b16 %v122
  %v481 = vunpack.c.l.b16 %v123
  %v482 = vunpack.c.h.b16 %v123
  %v483 = vunpack.c.l.b16 %v124
  %v484 = vunpack.c.h.b16 %v124
  %v485 = vunpack.c.l.b16 %v125
  %v486 = vunpack.c.h.b16 %v125
  %v487 = vunpack.c.l.b16 %v126
  %v488 = vunpack.c.h.b16 %v126
  %v489 = vunpack.c.l.b16 %v127
  %v490 = vunpack.c.h.b16 %v127
  %v491 = vunpack.c.l.b16 %v128
  %v492 = vunpack.c.h.b16 %v128
  %v493 = vunpack.c.l.b16 %v129
  %v494 = vunpack.c.h.b16 %v129
  %v495 = vunpack.c.l.b16 %v130
  %v496 = vunpack.c.h.b16 %v130
  %v497 = vunpack.c.l.b16 %v131
  %v498 = vunpack.c.h.b16 %v131
  %v499 = vunpack.c.l.b16 %v132
  %v500 = vunpack.c.h.b16 %v132
  %v501 = vunpack.c.l.b16 %v133
  %v502 = vunpack.c.h.b16 %v133
  %v503 = vunpack.c.l.b16 %v134
  %v504 = vunpack.c.h.b16 %v134
  %v505 = vunpack.c.l.b16 %v135
  %v506 = vunpack.c.h.b16 %v135
  %v507 = vunpack.c.l.b16 %v136
  %v508 = vunpack.c.h.b16 %v136
  %v509 = vunpack.c.l.b16 %v137
  %v510 = vunpack.c.h.b16 %v137
  %v511 = vunpack.c.l.b16 %v138
  %v512 = vunpack.c.h.b16 %v138
  %v513 = vunpack.c.l.b16 %v139
  %v514 = vunpack.c.h.b16 %v139
  %v515 = vunpack.c.l.b16 %v140
  %v516 = vunpack.c.h.b16 %v140
  %v517 = vunpack.c.l.b16 %v141
  %v518 = vunpack.c.h.b16 %v141
  %v519 = vunpack.c.l.b16 %v142
  %v520 = vunpack.c.h.b16 %v142
  %v521 = vunpack.c.l.b16 %v143
  %v522 = vunpack.c.h.b16 %v143
  %v523 = vunpack.c.l.b16 %v144
  %v524 = vunpack.c.h.b16 %v144
  %v525 = vunpack.c.l.b16 %v145
  %v526 = vunpack.c.h.b16 %v145
  %v527 = vunpack.c.l.b16 %v146
  %v528 = vunpack.c.h.b16 %v146
  %v529 = vunpack.c.l.b16 %v147
  %v530 = vunpack.c.h.b16 %v147
  %v531 = vunpack.c.l.b16 %v148
  %v532 = vunpack.c.h.b16 %v148
  %v533 = vunpack.c.l.b16 %v149
  %v534 = vunpack.c.h.b16 %v149
  %v535 = vunpack.c.l.b16 %v150
  %v536 = vunpack.c.h.b16 %v150
  %v537 = vunpack.c.l.b16 %v151
  %v538 = vunpack.c.h.b16 %v151
  %v539 = vunpack.c.l.b16 %v152
  %v540 = vunpack.c.h.b16 %v152
  %v541 = vunpack.c.l.b16 %v153
  %v542 = vunpack.c.h.b16 %v153
  %v543 = vunpack.c.l.b16 %v154
  %v544 = vunpack.c.h.b16 %v154
  %v545 = vunpack.c.l.b16 %v155
  %v546 = vunpack.c.h.b16 %v155
  %v547 = vunpack.c.l.b16 %v156
  %v548 = vunpack.c.h.b16 %v156
  %v549 = vunpack.c.l.b16 %v157
  %v550 = vunpack.c.h.b16 %v157
  %v551 = vunpack.c.l.b16 %v158
  %v552 = vunpack.c.h.b16 %v158
  %v553 = vunpack.c.l.b16 %v159
  %v554 = vunpack.c.h.b16 %v159
  %v555 = vunpack.c.l.b16 %v160
  %v556 = vunpack.c.h.b16 %v160
  %v557 = vunpack.c.l.b16 %v161
  %v558 = vunpack.c.h.b16 %v161
  %v559 = vunpack.c.l.b16 %v162
  %v560 = vunpack.c.h.b16 %v162
  %v561 = vpack.c.b16 %v309, %v305
  %v562 = vpack.c.b16 %v310, %v306
  %v563 = vpack.c.b16 %v311, %v307
  %v564 = vpack.c.b16 %v312, %v308
  %v565 = vpack.c.b16 %v317, %v313
  %v566 = vpack.c.b16 %v318, %v314
  %v567 = vpack.c.b16 %v319, %v315
  %v568 = vpack.c.b16 %v320, %v316
  %v569 = vpack.c.b16 %v325, %v321
  %v570 = vpack.c.b16 %v326, %v322
  %v571 = vpack.c.b16 %v327, %v323
  %v572 = vpack.c.b16 %v328, %v324
  %v573 = vpack.c.b16 %v333, %v329
  %v574 = vpack.c.b16 %v334, %v330
  %v575 = vpack.c.b16 %v335, %v331
  %v576 = vpack.c.b16 %v336, %v332
  %v577 = vpack.c.b16 %v341, %v337
  %v578 = vpack.c.b16 %v342, %v338
  %v579 = vpack.c.b16 %v343, %v339
  %v580 = vpack.c.b16 %v344, %v340
  %v581 = vpack.c.b16 %v349, %v345
  %v582 = vpack.c.b16 %v350, %v346
  %v583 = vpack.c.b16 %v351, %v347
  %v584 = vpack.c.b16 %v352, %v348
  %v585 = vpack.c.b16 %v357, %v353
  %v586 = vpack.c.b16 %v358, %v354
  %v587 = vpack.c.b16 %v359, %v355
  %v588 = vpack.c.b16 %v360, %v356
  %v589 = vpack.c.b16 %v365, %v361
  %v590 = vpack.c.b16 %v366, %v362
  %v591 = vpack.c.b16 %v367, %v363
  %v592 = vpack.c.b16 %v368, %v364
  %v593 = vpack.c.b16 %v373, %v369
  %v594 = vpack.c.b16 %v374, %v370
  %v595 = vpack.c.b16 %v375, %v371
  %v596 = vpack.c.b16 %v376, %v372
  %v597 = vpack.c.b16 %v381, %v377
  %v598 = vpack.c.b16 %v382, %v378
  %v599 = vpack.c.b16 %v383, %v379
  %v600 = vpack.c.b16 %v384, %v380
  %v601 = vpack.c.b16 %v389, %v385
  %v602 = vpack.c.b16 %v390, %v386
  %v603 = vpack.c.b16 %v391, %v387
  %v604 = vpack.c.b16 %v392, %v388
  %v605 = vpack.c.b16 %v397, %v393
  %v606 = vpack.c.b16 %v398, %v394
  %v607 = vpack.c.b16 %v399, %v395
  %v608 = vpack.c.b16 %v400, %v396
  %v609 = vpack.c.b16 %v405, %v401
  %v610 = vpack.c.b16 %v406, %v402
  %v611 = vpack.c.b16 %v407, %v403
  %v612 = vpack.c.b16 %v408, %v404
  %v613 = vpack.c.b16 %v413, %v409
  %v614 = vpack.c.b16 %v414, %v410
  %v615 = vpack.c.b16 %v415, %v411
  %v616 = vpack.c.b16 %v416, %v412
  %v617 = vpack.c.b16 %v421, %v417
  %v618 = vpack.c.b16 %v422, %v418
  %v619 = vpack.c.b16 %v423, %v419
  %v620 = vpack.c.b16 %v424, %v420
  %v621 = vpack.c.b16 %v429, %v425
  %v622 = vpack.c.b16 %v430, %v426
  %v623 = vpack.c.b16 %v431, %v427
  %v624 = vpack.c.b16 %v432, %v428
  %v625 = vpack.c.b16 %v437, %v433
  %v626 = vpack.c.b16 %v438, %v434
  %v627 = vpack.c.b16 %v439, %v435
  %v628 = vpack.c.b16 %v440, %v436
  %v629 = vpack.c.b16 %v445, %v441
  %v630 = vpack.c.b16 %v446, %v442
  %v631 = vpack.c.b16 %v447, %v443
  %v632 = vpack.c.b16 %v448, %v444
  %v633 = vpack.c.b16 %v453, %v449
  %v634 = vpack.c.b16 %v454, %v450
  %v635 = vpack.c.b16 %v455, %v451
  %v636 = vpack.c.b16 %v456, %v452
  %v637 = vpack.c.b16 %v461, %v457
  %v638 = vpack.c.b16 %v462, %v458
  %v639 = vpack.c.b16 %v463, %v459
  %v640 = vpack.c.b16 %v464, %v460
  %v641 = vpack.c.b16 %v469, %v465
  %v642 = vpack.c.b16 %v470, %v466
  %v643 = vpack.c.b16 %v471, %v467
  %v644 = vpack.c.b16 %v472, %v468
  %v645 = vpack.c.b16 %v477, %v473
  %v646 = vpack.c.b16 %v478, %v474
  %v647 = vpack.c.b16 %v479, %v475
  %v648 = vpack.c.b16 %v480, %v476
  %v649 = vpack.c.b16 %v485, %v481
  %v650 = vpack.c.b16 %v486, %v482
  %v651 = vpack.c.b16 %v487, %v483
  %v652 = vpack.c.b16 %v488, %v484
  %v653 = vpack.c.b16 %v493, %v489
  %v654 = vpack.c.b16 %v494, %v490
  %v655 = vpack.c.b16 %v495, %v491
  %v656 = vpack.c.b16 %v496, %v492
  %v657 = vpack.c.b16 %v501, %v497
  %v658 = vpack.c.b16 %v502, %v498
  %v659 = vpack.c.b16 %v503, %v499
  %v660 = vpack.c.b16 %v504, %v500
  %v661 = vpack.c.b16 %v509, %v505
  %v662 = vpack.c.b16 %v510, %v506
  %v663 = vpack.c.b16 %v511, %v507
  %v664 = vpack.c.b16 %v512, %v508
  %v665 = vpack.c.b16 %v517, %v513
  %v666 = vpack.c.b16 %v518, %v514
  %v667 = vpack.c.b16 %v519, %v515
  %v668 = vpack.c.b16 %v520, %v516
  %v669 = vpack.c.b16 %v525, %v521
  %v670 = vpack.c.b16 %v526, %v522
  %v671 = vpack.c.b16 %v527, %v523
  %v672 = vpack.c.b16 %v528, %v524
  %v673 = vpack.c.b16 %v533, %v529
  %v674 = vpack.c.b16 %v534, %v530
  %v675 = vpack.c.b16 %v535, %v531
  %v676 = vpack.c.b16 %v536, %v532
  %v677 = vpack.c.b16 %v541, %v537
  %v678 = vpack.c.b16 %v542, %v538
  %v679 = vpack.c.b16 %v543, %v539
  %v680 = vpack.c.b16 %v544, %v540
  %v681 = vpack.c.b16 %v549, %v545
  %v682 = vpack.c.b16 %v550, %v546
  %v683 = vpack.c.b16 %v551, %v547
  %v684 = vpack.c.b16 %v552, %v548
  %v685 = vpack.c.b16 %v557, %v553
  %v686 = vpack.c.b16 %v558, %v554
  %v687 = vpack.c.b16 %v559, %v555
  %v688 = vpack.c.b16 %v560, %v556
  %817 = vmatprep.subr.bf16.mxu0 %v562
  %818 = vmatpush1.bf16.msra.mxu0 %v561
  %819 = vmatprep.subr.bf16.mxu0 %v566
  %820 = vmatpush1.bf16.msra.mxu0 %v565
  %821 = vmatprep.subr.bf16.mxu0 %v570
  %822 = vmatpush1.bf16.msra.mxu0 %v569
  %823 = vmatprep.subr.bf16.mxu0 %v574
  %824 = vmatpush1.bf16.msra.mxu0 %v573
  %825 = vmatprep.subr.bf16.mxu0 %v578
  %826 = vmatpush1.bf16.msra.mxu0 %v577
  %827 = vmatprep.subr.bf16.mxu0 %v582
  %828 = vmatpush1.bf16.msra.mxu0 %v581
  %829 = vmatprep.subr.bf16.mxu0 %v586
  %830 = vmatpush1.bf16.msra.mxu0 %v585
  %831 = vmatprep.subr.bf16.mxu0 %v590
  %832 = vmatpush1.bf16.msra.mxu0 %v589
  %833 = vmatprep.subr.bf16.mxu0 %v594
  %834 = vmatpush1.bf16.msra.mxu0 %v593
  %835 = vmatprep.subr.bf16.mxu0 %v598
  %836 = vmatpush1.bf16.msra.mxu0 %v597
  %837 = vmatprep.subr.bf16.mxu0 %v602
  %838 = vmatpush1.bf16.msra.mxu0 %v601
  %839 = vmatprep.subr.bf16.mxu0 %v606
  %840 = vmatpush1.bf16.msra.mxu0 %v605
  %841 = vmatprep.subr.bf16.mxu0 %v610
  %842 = vmatpush1.bf16.msra.mxu0 %v609
  %843 = vmatprep.subr.bf16.mxu0 %v614
  %844 = vmatpush1.bf16.msra.mxu0 %v613
  %845 = vmatprep.subr.bf16.mxu0 %v618
  %846 = vmatpush1.bf16.msra.mxu0 %v617
  %847 = vmatprep.subr.bf16.mxu0 %v622
  %848 = vmatpush1.bf16.msra.mxu0 %v621
  %849 = vmatprep.mubr.bf16.mxu0 %v170
  %850 = vmatmul.mubr.bf16.gmra.mrb[0].mxu0 %v169
  %v851 = vpop.f32.mrb[0].mxu0
  %v852 = vadd.f32 0.0, %v851
  %v853 = vpop.f32.mrb[0].mxu0
  %v854 = vadd.f32 0.0, %v853
  %v855 = vpop.f32.mrb[0].mxu0
  %v856 = vpop.f32.mrb[0].mxu0
  %857 = vdwg.mxu0
  %858 = vmatprep.subr.bf16.mxu0 %v626
  %859 = vmatpush1.bf16.msra.mxu0 %v625
  %860 = vmatprep.subr.bf16.mxu0 %v630
  %861 = vmatpush1.bf16.msra.mxu0 %v629
  %862 = vmatprep.subr.bf16.mxu0 %v634
  %863 = vmatpush1.bf16.msra.mxu0 %v633
  %864 = vmatprep.subr.bf16.mxu0 %v638
  %865 = vmatpush1.bf16.msra.mxu0 %v637
  %866 = vmatprep.subr.bf16.mxu0 %v642
  %867 = vmatpush1.bf16.msra.mxu0 %v641
  %868 = vmatprep.subr.bf16.mxu0 %v646
  %869 = vmatpush1.bf16.msra.mxu0 %v645
  %870 = vmatprep.subr.bf16.mxu0 %v650
  %871 = vmatpush1.bf16.msra.mxu0 %v649
  %872 = vmatprep.subr.bf16.mxu0 %v654
  %873 = vmatpush1.bf16.msra.mxu0 %v653
  %874 = vmatprep.subr.bf16.mxu0 %v658
  %875 = vmatpush1.bf16.msra.mxu0 %v657
  %876 = vmatprep.subr.bf16.mxu0 %v662
  %877 = vmatpush1.bf16.msra.mxu0 %v661
  %878 = vmatprep.subr.bf16.mxu0 %v666
  %879 = vmatpush1.bf16.msra.mxu0 %v665
  %880 = vmatprep.subr.bf16.mxu0 %v670
  %881 = vmatpush1.bf16.msra.mxu0 %v669
  %882 = vmatprep.subr.bf16.mxu0 %v674
  %883 = vmatpush1.bf16.msra.mxu0 %v673
  %884 = vmatprep.subr.bf16.mxu0 %v678
  %885 = vmatpush1.bf16.msra.mxu0 %v677
  %886 = vmatprep.subr.bf16.mxu0 %v682
  %887 = vmatpush1.bf16.msra.mxu0 %v681
  %888 = vmatprep.subr.bf16.mxu0 %v686
  %889 = vmatpush1.bf16.msra.mxu0 %v685
  %890 = vmatprep.mubr.bf16.mxu0 %v172
  %891 = vmatmul.mubr.bf16.gmra.mrb[0].mxu0 %v171
  %v892 = vpop.f32.mrb[0].mxu0
  %v893 = vadd.f32 %v852, %v892
  %v894 = vpop.f32.mrb[0].mxu0
  %v895 = vadd.f32 %v854, %v894
  %v896 = vpop.f32.mrb[0].mxu0
  %v897 = vpop.f32.mrb[0].mxu0
  %898 = vdwg.mxu0
  %899 = vmatprep.subr.bf16.mxu0 %v564
  %900 = vmatpush1.bf16.msra.mxu0 %v563
  %901 = vmatprep.subr.bf16.mxu0 %v568
  %902 = vmatpush1.bf16.msra.mxu0 %v567
  %903 = vmatprep.subr.bf16.mxu0 %v572
  %904 = vmatpush1.bf16.msra.mxu0 %v571
  %905 = vmatprep.subr.bf16.mxu0 %v576
  %906 = vmatpush1.bf16.msra.mxu0 %v575
  %907 = vmatprep.subr.bf16.mxu0 %v580
  %908 = vmatpush1.bf16.msra.mxu0 %v579
  %909 = vmatprep.subr.bf16.mxu0 %v584
  %910 = vmatpush1.bf16.msra.mxu0 %v583
  %911 = vmatprep.subr.bf16.mxu0 %v588
  %912 = vmatpush1.bf16.msra.mxu0 %v587
  %913 = vmatprep.subr.bf16.mxu0 %v592
  %914 = vmatpush1.bf16.msra.mxu0 %v591
  %915 = vmatprep.subr.bf16.mxu0 %v596
  %916 = vmatpush1.bf16.msra.mxu0 %v595
  %917 = vmatprep.subr.bf16.mxu0 %v600
  %918 = vmatpush1.bf16.msra.mxu0 %v599
  %919 = vmatprep.subr.bf16.mxu0 %v604
  %920 = vmatpush1.bf16.msra.mxu0 %v603
  %921 = vmatprep.subr.bf16.mxu0 %v608
  %922 = vmatpush1.bf16.msra.mxu0 %v607
  %923 = vmatprep.subr.bf16.mxu0 %v612
  %924 = vmatpush1.bf16.msra.mxu0 %v611
  %925 = vmatprep.subr.bf16.mxu0 %v616
  %926 = vmatpush1.bf16.msra.mxu0 %v615
  %927 = vmatprep.subr.bf16.mxu0 %v620
  %928 = vmatpush1.bf16.msra.mxu0 %v619
  %929 = vmatprep.subr.bf16.mxu0 %v624
  %930 = vmatpush1.bf16.msra.mxu0 %v623
  %931 = vmatprep.mubr.bf16.mxu0 %v170
  %932 = vmatmul.mubr.bf16.gmra.mrb[0].mxu0 %v169
  %v933 = vpop.f32.mrb[0].mxu0
  %v934 = vadd.f32 0.0, %v933
  %v935 = vpop.f32.mrb[0].mxu0
  %v936 = vadd.f32 0.0, %v935
  %v937 = vpop.f32.mrb[0].mxu0
  %v938 = vpop.f32.mrb[0].mxu0
  %939 = vdwg.mxu0
  %940 = vmatprep.subr.bf16.mxu0 %v628
  %941 = vmatpush1.bf16.msra.mxu0 %v627
  %942 = vmatprep.subr.bf16.mxu0 %v632
  %943 = vmatpush1.bf16.msra.mxu0 %v631
  %944 = vmatprep.subr.bf16.mxu0 %v636
  %945 = vmatpush1.bf16.msra.mxu0 %v635
  %946 = vmatprep.subr.bf16.mxu0 %v640
  %947 = vmatpush1.bf16.msra.mxu0 %v639
  %948 = vmatprep.subr.bf16.mxu0 %v644
  %949 = vmatpush1.bf16.msra.mxu0 %v643
  %950 = vmatprep.subr.bf16.mxu0 %v648
  %951 = vmatpush1.bf16.msra.mxu0 %v647
  %952 = vmatprep.subr.bf16.mxu0 %v652
  %953 = vmatpush1.bf16.msra.mxu0 %v651
  %954 = vmatprep.subr.bf16.mxu0 %v656
  %955 = vmatpush1.bf16.msra.mxu0 %v655
  %956 = vmatprep.subr.bf16.mxu0 %v660
  %957 = vmatpush1.bf16.msra.mxu0 %v659
  %958 = vmatprep.subr.bf16.mxu0 %v664
  %959 = vmatpush1.bf16.msra.mxu0 %v663
  %960 = vmatprep.subr.bf16.mxu0 %v668
  %961 = vmatpush1.bf16.msra.mxu0 %v667
  %962 = vmatprep.subr.bf16.mxu0 %v672
  %963 = vmatpush1.bf16.msra.mxu0 %v671
  %964 = vmatprep.subr.bf16.mxu0 %v676
  %965 = vmatpush1.bf16.msra.mxu0 %v675
  %966 = vmatprep.subr.bf16.mxu0 %v680
  %967 = vmatpush1.bf16.msra.mxu0 %v679
  %968 = vmatprep.subr.bf16.mxu0 %v684
  %969 = vmatpush1.bf16.msra.mxu0 %v683
  %970 = vmatprep.subr.bf16.mxu0 %v688
  %971 = vmatpush1.bf16.msra.mxu0 %v687
  %972 = vmatprep.mubr.bf16.mxu0 %v172
  %973 = vmatmul.mubr.bf16.gmra.mrb[0].mxu0 %v171
  %v974 = vpop.f32.mrb[0].mxu0
  %v975 = vadd.f32 %v934, %v974
  %v976 = vpop.f32.mrb[0].mxu0
  %v977 = vadd.f32 %v936, %v976
  %v978 = vpop.f32.mrb[0].mxu0
  %v979 = vpop.f32.mrb[0].mxu0
  %980 = vdwg.mxu0
  %v981 = vadd.f32 %v29, %v893
  %v982 = vadd.f32 %v30, %v895
  %v983 = vadd.f32 %v31, %v975
  %v984 = vadd.f32 %v32, %v977
  %985 = vst [vmem:[#allocation2] sm:$0xff] %v981
  %986 = vst [vmem:[#allocation2 + $0x8] sm:$0xff] %v982
  %987 = vst [vmem:[#allocation2 + $0x10] sm:$0xff] %v983
  %988 = vst [vmem:[#allocation2 + $0x18] sm:$0xff] %v984
  // Predicated region
  $region26: #{dueling_dqn_forward.7} parent=0 // pred_check
    %p989 = pneg %p21
  $region27: #{dueling_dqn_forward.7} parent=0 // pred_check_branch
    %991 = sbr.rel (%p989) target = $region29
  $region28: #{dueling_dqn_forward.7} parent=0 // pred_region
    %v992 = vld [vmem:[#allocation2] sm:$0xff]
    %v993 = vld [vmem:[#allocation2 + $0x8] sm:$0xff]
    %v994 = vld [vmem:[#allocation2 + $0x10] sm:$0xff]
    %v995 = vld [vmem:[#allocation2 + $0x18] sm:$0xff]
    %v996 = vld [vmem:[%s2] sm:$0xf]
    %v998 = vlaneseq
    %v999 = vshrl.u32 %v998, 7
    %v1000 = vsub.s32 0, %v999
    %v1001 = vrot.slane %v996, %v1000
    %v1002 = vlaneseq
    %v1003 = vshrl.u32 %v1002, 7
    %v1004 = vsub.s32 1, %v1003
    %v1005 = vrot.slane %v996, %v1004
    %v1006 = vlaneseq
    %v1007 = vshrl.u32 %v1006, 7
    %v1008 = vsub.s32 2, %v1007
    %v1009 = vrot.slane %v996, %v1008
    %v1010 = vlaneseq
    %v1011 = vshrl.u32 %v1010, 7
    %v1012 = vsub.s32 3, %v1011
    %v1013 = vrot.slane %v996, %v1012
    %v1018 = vadd.f32 %v992, %v1001
    %v1019 = vadd.f32 %v993, %v1005
    %v1020 = vadd.f32 %v994, %v1009
    %v1021 = vadd.f32 %v995, %v1013
    %v1022 = vmax.f32 %v1018, 0.0
    %v1023 = vmax.f32 %v1019, 0.0
    %v1024 = vmax.f32 %v1020, 0.0
    %v1025 = vmax.f32 %v1021, 0.0
    %v1026 = vpack.c.bf16 %v1022, %v1022
    %v1027 = vpack.c.bf16 %v1023, %v1023
    %v1028 = vpack.c.bf16 %v1024, %v1024
    %v1029 = vpack.c.bf16 %v1025, %v1025
    %v1030 = vld [vmem:[%s3] sm:$0xf]
    %v1031 = vld [vmem:[%s3 + $0x4] sm:$0xf]
    %v1032 = vld [vmem:[%s3 + $0x8] sm:$0xf]
    %v1033 = vld [vmem:[%s3 + $0xc] sm:$0xf]
    %v1034 = vld [vmem:[%s3 + $0x10] sm:$0xf]
    %v1035 = vld [vmem:[%s3 + $0x14] sm:$0xf]
    %v1036 = vld [vmem:[%s3 + $0x18] sm:$0xf]
    %v1037 = vld [vmem:[%s3 + $0x1c] sm:$0xf]
    %v1038 = vld [vmem:[%s3 + $0x20] sm:$0xf]
    %v1039 = vld [vmem:[%s3 + $0x24] sm:$0xf]
    %v1040 = vld [vmem:[%s3 + $0x28] sm:$0xf]
    %v1041 = vld [vmem:[%s3 + $0x2c] sm:$0xf]
    %v1042 = vld [vmem:[%s3 + $0x30] sm:$0xf]
    %v1043 = vld [vmem:[%s3 + $0x34] sm:$0xf]
    %v1044 = vld [vmem:[%s3 + $0x38] sm:$0xf]
    %v1045 = vld [vmem:[%s3 + $0x3c] sm:$0xf]
    %v1046 = vld [vmem:[%s3 + $0x40] sm:$0xf]
    %v1047 = vld [vmem:[%s3 + $0x44] sm:$0xf]
    %v1048 = vld [vmem:[%s3 + $0x48] sm:$0xf]
    %v1049 = vld [vmem:[%s3 + $0x4c] sm:$0xf]
    %v1050 = vld [vmem:[%s3 + $0x50] sm:$0xf]
    %v1051 = vld [vmem:[%s3 + $0x54] sm:$0xf]
    %v1052 = vld [vmem:[%s3 + $0x58] sm:$0xf]
    %v1053 = vld [vmem:[%s3 + $0x5c] sm:$0xf]
    %v1054 = vld [vmem:[%s3 + $0x60] sm:$0xf]
    %v1055 = vld [vmem:[%s3 + $0x64] sm:$0xf]
    %v1056 = vld [vmem:[%s3 + $0x68] sm:$0xf]
    %v1057 = vld [vmem:[%s3 + $0x6c] sm:$0xf]
    %v1058 = vld [vmem:[%s3 + $0x70] sm:$0xf]
    %v1059 = vld [vmem:[%s3 + $0x74] sm:$0xf]
    %v1060 = vld [vmem:[%s3 + $0x78] sm:$0xf]
    %v1061 = vld [vmem:[%s3 + $0x7c] sm:$0xf]
    %v1062 = vld [vmem:[%s3 + $0x80] sm:$0xf]
    %v1063 = vld [vmem:[%s3 + $0x84] sm:$0xf]
    %v1064 = vld [vmem:[%s3 + $0x88] sm:$0xf]
    %v1065 = vld [vmem:[%s3 + $0x8c] sm:$0xf]
    %v1066 = vld [vmem:[%s3 + $0x90] sm:$0xf]
    %v1067 = vld [vmem:[%s3 + $0x94] sm:$0xf]
    %v1068 = vld [vmem:[%s3 + $0x98] sm:$0xf]
    %v1069 = vld [vmem:[%s3 + $0x9c] sm:$0xf]
    %v1070 = vld [vmem:[%s3 + $0xa0] sm:$0xf]
    %v1071 = vld [vmem:[%s3 + $0xa4] sm:$0xf]
    %v1072 = vld [vmem:[%s3 + $0xa8] sm:$0xf]
    %v1073 = vld [vmem:[%s3 + $0xac] sm:$0xf]
    %v1074 = vld [vmem:[%s3 + $0xb0] sm:$0xf]
    %v1075 = vld [vmem:[%s3 + $0xb4] sm:$0xf]
    %v1076 = vld [vmem:[%s3 + $0xb8] sm:$0xf]
    %v1077 = vld [vmem:[%s3 + $0xbc] sm:$0xf]
    %v1078 = vld [vmem:[%s3 + $0xc0] sm:$0xf]
    %v1079 = vld [vmem:[%s3 + $0xc4] sm:$0xf]
    %v1080 = vld [vmem:[%s3 + $0xc8] sm:$0xf]
    %v1081 = vld [vmem:[%s3 + $0xcc] sm:$0xf]
    %v1082 = vld [vmem:[%s3 + $0xd0] sm:$0xf]
    %v1083 = vld [vmem:[%s3 + $0xd4] sm:$0xf]
    %v1084 = vld [vmem:[%s3 + $0xd8] sm:$0xf]
    %v1085 = vld [vmem:[%s3 + $0xdc] sm:$0xf]
    %v1086 = vld [vmem:[%s3 + $0xe0] sm:$0xf]
    %v1087 = vld [vmem:[%s3 + $0xe4] sm:$0xf]
    %v1088 = vld [vmem:[%s3 + $0xe8] sm:$0xf]
    %v1089 = vld [vmem:[%s3 + $0xec] sm:$0xf]
    %v1090 = vld [vmem:[%s3 + $0xf0] sm:$0xf]
    %v1091 = vld [vmem:[%s3 + $0xf4] sm:$0xf]
    %v1092 = vld [vmem:[%s3 + $0xf8] sm:$0xf]
    %v1093 = vld [vmem:[%s3 + $0xfc] sm:$0xf]
    %v1094 = vld [vmem:[%s4] sm:$0x1]
    %v1096 = vlaneseq
    %v1097 = vshrl.u32 %v1096, 7
    %v1098 = vsub.s32 0, %v1097
    %v1099 = vrot.slane %v1094, %v1098
    %v1165 = vunpack.c.l.b16 %v1030
    %v1166 = vunpack.c.l.b16 %v1031
    %v1167 = vunpack.c.l.b16 %v1032
    %v1168 = vunpack.c.l.b16 %v1033
    %v1169 = vunpack.c.l.b16 %v1034
    %v1170 = vunpack.c.l.b16 %v1035
    %v1171 = vunpack.c.l.b16 %v1036
    %v1172 = vunpack.c.l.b16 %v1037
    %v1173 = vunpack.c.l.b16 %v1038
    %v1174 = vunpack.c.l.b16 %v1039
    %v1175 = vunpack.c.l.b16 %v1040
    %v1176 = vunpack.c.l.b16 %v1041
    %v1177 = vunpack.c.l.b16 %v1042
    %v1178 = vunpack.c.l.b16 %v1043
    %v1179 = vunpack.c.l.b16 %v1044
    %v1180 = vunpack.c.l.b16 %v1045
    %v1181 = vunpack.c.l.b16 %v1046
    %v1182 = vunpack.c.l.b16 %v1047
    %v1183 = vunpack.c.l.b16 %v1048
    %v1184 = vunpack.c.l.b16 %v1049
    %v1185 = vunpack.c.l.b16 %v1050
    %v1186 = vunpack.c.l.b16 %v1051
    %v1187 = vunpack.c.l.b16 %v1052
    %v1188 = vunpack.c.l.b16 %v1053
    %v1189 = vunpack.c.l.b16 %v1054
    %v1190 = vunpack.c.l.b16 %v1055
    %v1191 = vunpack.c.l.b16 %v1056
    %v1192 = vunpack.c.l.b16 %v1057
    %v1193 = vunpack.c.l.b16 %v1058
    %v1194 = vunpack.c.l.b16 %v1059
    %v1195 = vunpack.c.l.b16 %v1060
    %v1196 = vunpack.c.l.b16 %v1061
    %v1197 = vunpack.c.l.b16 %v1062
    %v1198 = vunpack.c.l.b16 %v1063
    %v1199 = vunpack.c.l.b16 %v1064
    %v1200 = vunpack.c.l.b16 %v1065
    %v1201 = vunpack.c.l.b16 %v1066
    %v1202 = vunpack.c.l.b16 %v1067
    %v1203 = vunpack.c.l.b16 %v1068
    %v1204 = vunpack.c.l.b16 %v1069
    %v1205 = vunpack.c.l.b16 %v1070
    %v1206 = vunpack.c.l.b16 %v1071
    %v1207 = vunpack.c.l.b16 %v1072
    %v1208 = vunpack.c.l.b16 %v1073
    %v1209 = vunpack.c.l.b16 %v1074
    %v1210 = vunpack.c.l.b16 %v1075
    %v1211 = vunpack.c.l.b16 %v1076
    %v1212 = vunpack.c.l.b16 %v1077
    %v1213 = vunpack.c.l.b16 %v1078
    %v1214 = vunpack.c.l.b16 %v1079
    %v1215 = vunpack.c.l.b16 %v1080
    %v1216 = vunpack.c.l.b16 %v1081
    %v1217 = vunpack.c.l.b16 %v1082
    %v1218 = vunpack.c.l.b16 %v1083
    %v1219 = vunpack.c.l.b16 %v1084
    %v1220 = vunpack.c.l.b16 %v1085
    %v1221 = vunpack.c.l.b16 %v1086
    %v1222 = vunpack.c.l.b16 %v1087
    %v1223 = vunpack.c.l.b16 %v1088
    %v1224 = vunpack.c.l.b16 %v1089
    %v1225 = vunpack.c.l.b16 %v1090
    %v1226 = vunpack.c.l.b16 %v1091
    %v1227 = vunpack.c.l.b16 %v1092
    %v1228 = vunpack.c.l.b16 %v1093
    %v1229 = vpack.c.b16 %v1166, %v1165
    %v1230 = vpack.c.b16 %v1168, %v1167
    %v1231 = vpack.c.b16 %v1170, %v1169
    %v1232 = vpack.c.b16 %v1172, %v1171
    %v1233 = vpack.c.b16 %v1174, %v1173
    %v1234 = vpack.c.b16 %v1176, %v1175
    %v1235 = vpack.c.b16 %v1178, %v1177
    %v1236 = vpack.c.b16 %v1180, %v1179
    %v1237 = vpack.c.b16 %v1182, %v1181
    %v1238 = vpack.c.b16 %v1184, %v1183
    %v1239 = vpack.c.b16 %v1186, %v1185
    %v1240 = vpack.c.b16 %v1188, %v1187
    %v1241 = vpack.c.b16 %v1190, %v1189
    %v1242 = vpack.c.b16 %v1192, %v1191
    %v1243 = vpack.c.b16 %v1194, %v1193
    %v1244 = vpack.c.b16 %v1196, %v1195
    %v1245 = vpack.c.b16 %v1198, %v1197
    %v1246 = vpack.c.b16 %v1200, %v1199
    %v1247 = vpack.c.b16 %v1202, %v1201
    %v1248 = vpack.c.b16 %v1204, %v1203
    %v1249 = vpack.c.b16 %v1206, %v1205
    %v1250 = vpack.c.b16 %v1208, %v1207
    %v1251 = vpack.c.b16 %v1210, %v1209
    %v1252 = vpack.c.b16 %v1212, %v1211
    %v1253 = vpack.c.b16 %v1214, %v1213
    %v1254 = vpack.c.b16 %v1216, %v1215
    %v1255 = vpack.c.b16 %v1218, %v1217
    %v1256 = vpack.c.b16 %v1220, %v1219
    %v1257 = vpack.c.b16 %v1222, %v1221
    %v1258 = vpack.c.b16 %v1224, %v1223
    %v1259 = vpack.c.b16 %v1226, %v1225
    %v1260 = vpack.c.b16 %v1228, %v1227
    %1293 = vmatprep.subr.bf16.mxu0 0
    %1294 = vmatpush1.bf16.msra.mxu0 %v1229
    %1295 = vmatprep.subr.bf16.mxu0 0
    %1296 = vmatpush1.bf16.msra.mxu0 %v1230
    %1297 = vmatprep.subr.bf16.mxu0 0
    %1298 = vmatpush1.bf16.msra.mxu0 %v1231
    %1299 = vmatprep.subr.bf16.mxu0 0
    %1300 = vmatpush1.bf16.msra.mxu0 %v1232
    %1301 = vmatprep.subr.bf16.mxu0 0
    %1302 = vmatpush1.bf16.msra.mxu0 %v1233
    %1303 = vmatprep.subr.bf16.mxu0 0
    %1304 = vmatpush1.bf16.msra.mxu0 %v1234
    %1305 = vmatprep.subr.bf16.mxu0 0
    %1306 = vmatpush1.bf16.msra.mxu0 %v1235
    %1307 = vmatprep.subr.bf16.mxu0 0
    %1308 = vmatpush1.bf16.msra.mxu0 %v1236
    %1309 = vmatprep.subr.bf16.mxu0 0
    %1310 = vmatpush1.bf16.msra.mxu0 %v1237
    %1311 = vmatprep.subr.bf16.mxu0 0
    %1312 = vmatpush1.bf16.msra.mxu0 %v1238
    %1313 = vmatprep.subr.bf16.mxu0 0
    %1314 = vmatpush1.bf16.msra.mxu0 %v1239
    %1315 = vmatprep.subr.bf16.mxu0 0
    %1316 = vmatpush1.bf16.msra.mxu0 %v1240
    %1317 = vmatprep.subr.bf16.mxu0 0
    %1318 = vmatpush1.bf16.msra.mxu0 %v1241
    %1319 = vmatprep.subr.bf16.mxu0 0
    %1320 = vmatpush1.bf16.msra.mxu0 %v1242
    %1321 = vmatprep.subr.bf16.mxu0 0
    %1322 = vmatpush1.bf16.msra.mxu0 %v1243
    %1323 = vmatprep.subr.bf16.mxu0 0
    %1324 = vmatpush1.bf16.msra.mxu0 %v1244
    %1325 = vmatprep.mubr.bf16.mxu0 %v1027
    %1326 = vmatmul.mubr.bf16.gmra.mrb[0].mxu0 %v1026
    %v1327 = vpop.f32.mrb[0].mxu0
    %v1328 = vadd.f32 %v1099, %v1327
    %v1329 = vpop.f32.mrb[0].mxu0
    %v1330 = vpop.f32.mrb[0].mxu0
    %v1331 = vpop.f32.mrb[0].mxu0
    %1332 = vdwg.mxu0
    %1333 = vmatprep.subr.bf16.mxu0 0
    %1334 = vmatpush1.bf16.msra.mxu0 %v1245
    %1335 = vmatprep.subr.bf16.mxu0 0
    %1336 = vmatpush1.bf16.msra.mxu0 %v1246
    %1337 = vmatprep.subr.bf16.mxu0 0
    %1338 = vmatpush1.bf16.msra.mxu0 %v1247
    %1339 = vmatprep.subr.bf16.mxu0 0
    %1340 = vmatpush1.bf16.msra.mxu0 %v1248
    %1341 = vmatprep.subr.bf16.mxu0 0
    %1342 = vmatpush1.bf16.msra.mxu0 %v1249
    %1343 = vmatprep.subr.bf16.mxu0 0
    %1344 = vmatpush1.bf16.msra.mxu0 %v1250
    %1345 = vmatprep.subr.bf16.mxu0 0
    %1346 = vmatpush1.bf16.msra.mxu0 %v1251
    %1347 = vmatprep.subr.bf16.mxu0 0
    %1348 = vmatpush1.bf16.msra.mxu0 %v1252
    %1349 = vmatprep.subr.bf16.mxu0 0
    %1350 = vmatpush1.bf16.msra.mxu0 %v1253
    %1351 = vmatprep.subr.bf16.mxu0 0
    %1352 = vmatpush1.bf16.msra.mxu0 %v1254
    %1353 = vmatprep.subr.bf16.mxu0 0
    %1354 = vmatpush1.bf16.msra.mxu0 %v1255
    %1355 = vmatprep.subr.bf16.mxu0 0
    %1356 = vmatpush1.bf16.msra.mxu0 %v1256
    %1357 = vmatprep.subr.bf16.mxu0 0
    %1358 = vmatpush1.bf16.msra.mxu0 %v1257
    %1359 = vmatprep.subr.bf16.mxu0 0
    %1360 = vmatpush1.bf16.msra.mxu0 %v1258
    %1361 = vmatprep.subr.bf16.mxu0 0
    %1362 = vmatpush1.bf16.msra.mxu0 %v1259
    %1363 = vmatprep.subr.bf16.mxu0 0
    %1364 = vmatpush1.bf16.msra.mxu0 %v1260
    %1365 = vmatprep.mubr.bf16.mxu0 %v1029
    %1366 = vmatmul.mubr.bf16.gmra.mrb[0].mxu0 %v1028
    %v1367 = vpop.f32.mrb[0].mxu0
    %v1368 = vadd.f32 %v1328, %v1367
    %v1369 = vpop.f32.mrb[0].mxu0
    %v1370 = vpop.f32.mrb[0].mxu0
    %v1371 = vpop.f32.mrb[0].mxu0
    %1372 = vdwg.mxu0
    %1373 = vst [vmem:[%s5] sm:$0xff] %v1368
  $region29: #{dueling_dqn_forward.7} parent=0 // pred_fallthru
    _
  // Predicated region
  $region30: #{dueling_dqn_forward.7} parent=0 // pred_check
    _
  $region31: #{dueling_dqn_forward.7} parent=0 // pred_check_branch
    %1375 = sbr.rel (0) target = $region33
  $region32: #{dueling_dqn_forward.7} parent=0 // pred_region
    _
  $region33: #{dueling_dqn_forward.7} parent=0 // pred_fallthru
    _
  // Predicated region
  $region34: #{dueling_dqn_forward.7} parent=0 // pred_check
    _
  $region35: #{dueling_dqn_forward.7} parent=0 // pred_check_branch
    %1377 = sbr.rel (0) target = $region37
  $region36: #{dueling_dqn_forward.7} parent=0 // pred_region
    _
  $region37: #{dueling_dqn_forward.7} parent=0 // pred_fallthru
    _

</llo_original>
